<compile_context>
chip_gen: v5e
topology: v5e:2x2
jax: 0.10.0
libtpu: 0.0.40
codegen_flags: <defaults>
</compile_context>

<pallas_src>
import jax
import jax.numpy as jnp
from jax.experimental import pallas as pl
from jax.experimental.pallas import tpu as pltpu


# ----------------------------- Pallas kernel ------------------------------- #

def _bottleneck_kernel(xc_ref, xt_ref, xb_ref,
                       w1_ref, b1_ref, w2_ref, b2_ref, w3_ref, b3_ref,
                       o_ref, a1p_ref, patches_ref):
    # xc_ref: (1, TH, W, Cin) centre rows of the image (input dtype)
    # xt_ref/xb_ref: (1, 1, W, Cin) halo rows just above / below the tile
    # w1_ref: (Cin, P) bf16    w2_ref: (9*P, P) bf16    w3_ref: (P, Cout) bf16
    # b*_ref: (1, C) f32 folded BN shifts
    # a1p_ref:     VMEM scratch (TH+2, W+2, P) bf16 -- zero-padded conv1 output
    # patches_ref: VMEM scratch (TH*W, 9*P)    bf16 -- im2col operand for conv2
    _, TH, W, Cin = xc_ref.shape
    P = w1_ref.shape[1]
    Cout = w3_ref.shape[1]

    i = pl.program_id(1)
    n_h = pl.num_programs(1)

    # --- conv1 (1x1) + BN1 shift + ReLU: ONE matmul over centre + halos -----
    xt = xt_ref[...].reshape(W, Cin).astype(jnp.bfloat16)
    xc = xc_ref[...].reshape(TH * W, Cin).astype(jnp.bfloat16)
    xb = xb_ref[...].reshape(W, Cin).astype(jnp.bfloat16)
    x_all = jnp.concatenate([xt, xc, xb], axis=0)          # ((TH+2)*W, Cin) bf16
    a1 = jnp.dot(x_all, w1_ref[...], preferred_element_type=jnp.float32)
    a1 = jnp.maximum(a1 + b1_ref[...], 0.0).astype(jnp.bfloat16)

    # --- padded conv1 tile in bf16 VMEM scratch ------------------------------
    a1p_ref[:, 0:1, :] = jnp.zeros((TH + 2, 1, P), jnp.bfloat16)       # left pad
    a1p_ref[:, W + 1:W + 2, :] = jnp.zeros((TH + 2, 1, P), jnp.bfloat16)  # right
    a1p_ref[:, 1:W + 1, :] = a1.reshape(TH + 2, W, P)

    # conv2's zero padding acts in conv1-output space: halo rows outside the
    # image are forced to zero (also covers the clamped duplicate row).
    @pl.when(i == 0)
    def _():
        a1p_ref[0:1, :, :] = jnp.zeros((1, W + 2, P), jnp.bfloat16)

    @pl.when(i == n_h - 1)
    def _():
        a1p_ref[TH + 1:TH + 2, :, :] = jnp.zeros((1, W + 2, P), jnp.bfloat16)

    # --- conv2 (3x3, stride 1, pad 1): im2col patches built by explicit -----
    # --- per-tap stores (no concatenate), then a single K = 9*P matmul ------
    for dy in range(3):                                    # statically unrolled
        for dx in range(3):
            t = dy * 3 + dx
            patches_ref[:, t * P:(t + 1) * P] = (
                a1p_ref[dy:dy + TH, dx:dx + W, :].reshape(TH * W, P))
    a2 = jnp.dot(patches_ref[...], w2_ref[...],
                 preferred_element_type=jnp.float32)
    a2 = jnp.maximum(a2 + b2_ref[...], 0.0)

    # --- conv3 (1x1) + BN3 shift, residual add, final ReLU ------------------
    a3 = jnp.dot(a2.astype(jnp.bfloat16), w3_ref[...],
                 preferred_element_type=jnp.float32) + b3_ref[...]
    # re-read the (VMEM-resident) input block for the identity instead of
    # holding it live across the three matmuls.
    identity = xc_ref[...].reshape(TH * W, Cout).astype(jnp.float32)
    out = jnp.maximum(a3 + identity, 0.0)
    o_ref[...] = out.reshape(1, TH, W, Cout).astype(o_ref.dtype)


# ------------------------------- wrappers ----------------------------------- #

def _pick_tile_h(H, W, target_rows=512):
    """Largest divisor of H whose row block (th*W) stays near the 256-512-row
    MXU sweet spot (caps at 2*target_rows rows per step)."""
    best = 1
    for d in range(1, H + 1):
        if H % d == 0 and d * W <= 2 * target_rows:
            best = d
    return best


def bottleneck_block_nhwc(x_nhwc, kp, *, tile_h=None, vmem_limit_bytes=None):
    """x_nhwc: (B, H, W, Cin). Returns (B, H, W, Cout), same dtype (NHWC).

    For HBM-bound stages, pass bf16 activations end-to-end (the kernel keeps
    all epilogue math in f32 regardless of the I/O dtype).
    """
    w1, b1 = kp["w1"], kp["b1"]
    w2, b2 = kp["w2"], kp["b2"]
    w3, b3 = kp["w3"], kp["b3"]

    B, H, W, Cin = x_nhwc.shape
    P = w1.shape[1]
    Cout = w3.shape[1]
    assert Cout == Cin, "stride=1 / downsample=None requires in_planes == 4*planes"

    if tile_h is None:
        th = _pick_tile_h(H, W)
    else:
        th = min(tile_h, H)
        while H % th:
            th -= 1
    n_h = H // th

    def full(shape):
        n = len(shape)
        return pl.BlockSpec(shape, lambda b, i, _n=n: (0,) * _n)

    out = pl.pallas_call(
        _bottleneck_kernel,
        out_shape=jax.ShapeDtypeStruct((B, H, W, Cout), x_nhwc.dtype),
        grid=(B, n_h),
        in_specs=[
            # centre rows of the tile
            pl.BlockSpec((1, th, W, Cin), lambda b, i: (b, i, 0, 0)),
            # 1-row halos above / below, clamped at the image border.
            # NOTE: these index maps return *row* indices; this only coincides
            # with block indices because the block size along that dim is 1 —
            # do not change that block dim without rewriting the maps.
            pl.BlockSpec((1, 1, W, Cin),
                         lambda b, i: (b, jnp.maximum(i * th - 1, 0), 0, 0)),
            pl.BlockSpec((1, 1, W, Cin),
                         lambda b, i: (b, jnp.minimum(i * th + th, H - 1), 0, 0)),
            full(w1.shape), full(b1.shape),
            full(w2.shape), full(b2.shape),
            full(w3.shape), full(b3.shape),
        ],
        out_specs=pl.BlockSpec((1, th, W, Cout), lambda b, i: (b, i, 0, 0)),
        scratch_shapes=[
            pltpu.VMEM((th + 2, W + 2, P), jnp.bfloat16),   # padded conv1 out
            pltpu.VMEM((th * W, 9 * P), jnp.bfloat16),      # im2col patches
        ],
        compiler_params=pltpu.CompilerParams(
            dimension_semantics=("parallel", "parallel"),
            vmem_limit_bytes=vmem_limit_bytes),
    )(x_nhwc, x_nhwc, x_nhwc, w1, b1, w2, b2, w3, b3)
    return out


def bottleneck_block(x_nchw, kp, *, tile_h=None, vmem_limit_bytes=None):
    """PyTorch-layout wrapper: (B, Cin, H, W) -> (B, Cout, H, W).

    NOTE: keep the model NHWC end-to-end in real use; each transpose here is a
    full HBM round trip and exists only to match the PyTorch layout.
    """
    x = jnp.transpose(x_nchw, (0, 2, 3, 1))        # NCHW -> NHWC
    out = bottleneck_block_nhwc(x, kp, tile_h=tile_h,
                                vmem_limit_bytes=vmem_limit_bytes)
    return jnp.transpose(out, (0, 3, 1, 2))        # NHWC -> NCHW


# --------------------------- deterministic init ----------------------------- #

def init_params(key, in_planes, planes, zero_residuals=True, init_scale=1.0):
    expansion = 4
    out_planes = expansion * planes
    assert out_planes == in_planes
    keys = jax.random.split(key, 15)
    gain = 2.0 ** 0.5            # kaiming gain for relu
    eps = 1e-5

    # kaiming_normal_ mode='fan_out': std = init_scale * gain / sqrt(Cout*kh*kw)
    w1_t = jax.random.normal(keys[0], (planes, in_planes, 1, 1), jnp.float32) * (
        init_scale * gain / (planes * 1 * 1) ** 0.5)
    w2_t = jax.random.normal(keys[1], (planes, planes, 3, 3), jnp.float32) * (
        init_scale * gain / (planes * 3 * 3) ** 0.5)
    w3_t = jax.random.normal(keys[2], (out_planes, planes, 1, 1), jnp.float32) * (
        init_scale * gain / (out_planes * 1 * 1) ** 0.5)

    # eval-mode BatchNorm with non-trivial gamma/beta/running stats so the
    # folded-BN path is exercised beyond the identity-stats case.
    def bn_params(k0, k1, k2, k3, c, gamma_zero=False):
        g = (jnp.zeros((c,), jnp.float32) if gamma_zero
             else 1.0 + 0.2 * jax.random.normal(k0, (c,), jnp.float32))
        b = 0.1 * jax.random.normal(k1, (c,), jnp.float32)
        rm = 0.1 * jax.random.normal(k2, (c,), jnp.float32)
        rv = 0.5 + jax.random.uniform(k3, (c,), jnp.float32)   # in [0.5, 1.5)
        return g, b, rm, rv

    bn1 = bn_params(*keys[3:7], planes)
    bn2 = bn_params(*keys[7:11], planes)
    bn3 = bn_params(*keys[11:15], out_planes, gamma_zero=zero_residuals)

    def fold(g, b, rm, rv):
        scale = g / jnp.sqrt(rv + eps)
        shift = b - rm * scale
        return scale, shift

    s1, sh1 = fold(*bn1)
    s2, sh2 = fold(*bn2)
    s3, sh3 = fold(*bn3)

    # fold BN scale into the conv weights; pre-cast MXU operands to bf16.
    w1k = (w1_t[:, :, 0, 0] * s1[:, None]).T.astype(jnp.bfloat16)       # (Cin, P)
    w2f = w2_t * s2[:, None, None, None]                                 # (P, P, 3, 3)
    w2k = jnp.transpose(w2f, (2, 3, 1, 0)).reshape(9 * planes, planes)   # (9P, P)
    w2k = w2k.astype(jnp.bfloat16)
    w3k = (w3_t[:, :, 0, 0] * s3[:, None]).T.astype(jnp.bfloat16)       # (P, Cout)

    kernel_params = dict(
        w1=w1k, b1=sh1.reshape(1, -1),
        w2=w2k, b2=sh2.reshape(1, -1),
        w3=w3k, b3=sh3.reshape(1, -1),
    )
    torch_params = dict(w1=w1_t, w2=w2_t, w3=w3_t,
                        bn1=bn1, bn2=bn2, bn3=bn3, eps=eps)
    return dict(kernel=kernel_params, torch=torch_params)


# ------------------------------ reference ----------------------------------- #

def reference_forward(x, tp):
    """Plain-JAX replica of the PyTorch forward (eval-mode BN), all f32."""
    dn = ("NCHW", "OIHW", "NCHW")
    eps = tp["eps"]

    def bn(y, p):
        g, b, rm, rv = p
        inv = (g / jnp.sqrt(rv + eps))[None, :, None, None]
        return inv * (y - rm[None, :, None, None]) + b[None, :, None, None]

    out = jax.lax.conv_general_dilated(x, tp["w1"], (1, 1), "VALID",
                                       dimension_numbers=dn)
    out = jax.nn.relu(bn(out, tp["bn1"]))
    out = jax.lax.conv_general_dilated(out, tp["w2"], (1, 1),
                                       ((1, 1), (1, 1)), dimension_numbers=dn)
    out = jax.nn.relu(bn(out, tp["bn2"]))
    out = jax.lax.conv_general_dilated(out, tp["w3"], (1, 1), "VALID",
                                       dimension_numbers=dn)
    out = bn(out, tp["bn3"])
    return jax.nn.relu(out + x)


# --------------------------------- main ------------------------------------- #

if __name__ == "__main__":
    key = jax.random.PRNGKey(0)
    kx, kp = jax.random.split(key)

    # small but lane-friendly shapes: Cout = 128 -> lane-dense output stores
    B, in_planes, planes, H, W = 2, 128, 32, 16, 16   # in_planes = 4*planes
    x = jax.random.normal(kx, (B, in_planes, H, W), jnp.float32)   # NCHW input

    # check both the module default (zero_residuals=True, gamma3=0) and the
    # non-trivial residual branch (zero_residuals=False)
    for zero_residuals in (True, False):
        params = init_params(kp, in_planes, planes, zero_residuals=zero_residuals)
        out = jax.block_until_ready(bottleneck_block(x, params["kernel"]))
        ref = reference_forward(x, params["torch"])
        err = float(jnp.max(jnp.abs(out - ref)))
        scale = float(jnp.max(jnp.abs(ref)))
        # bf16 MXU inputs with f32 accumulation -> tolerance relative to the
        # output range (f32 reference).
        if err > 3e-2 * scale + 1e-3:
            raise AssertionError(
                f"mismatch vs reference (zero_residuals={zero_residuals}): "
                f"max abs err {err}, ref max {scale}")

    print("KERNEL_OK")
</pallas_src>

<mosaic_0001>
module attributes {stable_mosaic.version = 11 : i64} {
  func.func @_bottleneck_kernel(%arg0: i32, %arg1: i32, %arg2: memref<1x16x16x128xf32, #tpu.memory_space<vmem>>, %arg3: memref<1x1x16x128xf32, #tpu.memory_space<vmem>>, %arg4: memref<1x1x16x128xf32, #tpu.memory_space<vmem>>, %arg5: memref<128x32xbf16, #tpu.memory_space<vmem>>, %arg6: memref<1x32xf32, #tpu.memory_space<vmem>>, %arg7: memref<288x32xbf16, #tpu.memory_space<vmem>>, %arg8: memref<1x32xf32, #tpu.memory_space<vmem>>, %arg9: memref<32x128xbf16, #tpu.memory_space<vmem>>, %arg10: memref<1x128xf32, #tpu.memory_space<vmem>>, %arg11: memref<1x16x16x128xf32, #tpu.memory_space<vmem>>, %arg12: memref<18x18x32xbf16, #tpu.memory_space<vmem>>, %arg13: memref<256x288xbf16, #tpu.memory_space<vmem>>) attributes {dimension_semantics = [#tpu.dimension_semantics<parallel>, #tpu.dimension_semantics<parallel>], iteration_bounds = array<i64: 2, 1>, scalar_prefetch = 0 : i64, scratch_operands = 2 : i64, tpu.core_type = #tpu.core_type<tc>, window_params = [{transform_indices = @transform_0, window_bounds = array<i64: 1, 16, 16, 128>}, {transform_indices = @transform_1, window_bounds = array<i64: 1, 1, 16, 128>}, {transform_indices = @transform_2, window_bounds = array<i64: 1, 1, 16, 128>}, {pipeline_mode = #tpu.pipeline_mode<synchronous>, transform_indices = @transform_3, window_bounds = array<i64: 128, 32>}, {pipeline_mode = #tpu.pipeline_mode<synchronous>, transform_indices = @transform_4, window_bounds = array<i64: 1, 32>}, {pipeline_mode = #tpu.pipeline_mode<synchronous>, transform_indices = @transform_5, window_bounds = array<i64: 288, 32>}, {pipeline_mode = #tpu.pipeline_mode<synchronous>, transform_indices = @transform_6, window_bounds = array<i64: 1, 32>}, {pipeline_mode = #tpu.pipeline_mode<synchronous>, transform_indices = @transform_7, window_bounds = array<i64: 32, 128>}, {pipeline_mode = #tpu.pipeline_mode<synchronous>, transform_indices = @transform_8, window_bounds = array<i64: 1, 128>}, {transform_indices = @transform_9, window_bounds = array<i64: 1, 16, 16, 128>}]} {
    %c0 = arith.constant 0 : index
    %c0_0 = arith.constant 0 : index
    %c0_1 = arith.constant 0 : index
    %c0_2 = arith.constant 0 : index
    %0 = vector.load %arg3[%c0, %c0_0, %c0_1, %c0_2] : memref<1x1x16x128xf32, #tpu.memory_space<vmem>>, vector<1x1x16x128xf32>
    %1 = vector.shape_cast %0 : vector<1x1x16x128xf32> to vector<16x128xf32>
    %2 = arith.truncf %1 : vector<16x128xf32> to vector<16x128xbf16>
    %c0_3 = arith.constant 0 : index
    %c0_4 = arith.constant 0 : index
    %c0_5 = arith.constant 0 : index
    %c0_6 = arith.constant 0 : index
    %3 = vector.load %arg2[%c0_3, %c0_4, %c0_5, %c0_6] : memref<1x16x16x128xf32, #tpu.memory_space<vmem>>, vector<1x16x16x128xf32>
    %4 = vector.shape_cast %3 : vector<1x16x16x128xf32> to vector<256x128xf32>
    %5 = arith.truncf %4 : vector<256x128xf32> to vector<256x128xbf16>
    %c0_7 = arith.constant 0 : index
    %c0_8 = arith.constant 0 : index
    %c0_9 = arith.constant 0 : index
    %c0_10 = arith.constant 0 : index
    %6 = vector.load %arg4[%c0_7, %c0_8, %c0_9, %c0_10] : memref<1x1x16x128xf32, #tpu.memory_space<vmem>>, vector<1x1x16x128xf32>
    %7 = vector.shape_cast %6 : vector<1x1x16x128xf32> to vector<16x128xf32>
    %8 = arith.truncf %7 : vector<16x128xf32> to vector<16x128xbf16>
    %9 = tpu.concatenate %2, %5, %8 in 0 : vector<16x128xbf16>, vector<256x128xbf16>, vector<16x128xbf16> -> vector<288x128xbf16>
    %c0_11 = arith.constant 0 : index
    %c0_12 = arith.constant 0 : index
    %10 = vector.load %arg5[%c0_11, %c0_12] : memref<128x32xbf16, #tpu.memory_space<vmem>>, vector<128x32xbf16>
    %cst = arith.constant dense<0.000000e+00> : vector<288x32xf32>
    %11 = tpu.matmul %9, %10, %cst {dimension_numbers = #tpu.dot_dimension_numbers<[1], [0], [0], [1], [0, 0, 1, 1], [], []>} : vector<288x128xbf16>, vector<128x32xbf16>, vector<288x32xf32> -> vector<288x32xf32>
    %c0_13 = arith.constant 0 : index
    %c0_14 = arith.constant 0 : index
    %12 = vector.load %arg6[%c0_13, %c0_14] : memref<1x32xf32, #tpu.memory_space<vmem>>, vector<1x32xf32>
    %13 = vector.broadcast %12 : vector<1x32xf32> to vector<288x32xf32>
    %14 = arith.addf %11, %13 : vector<288x32xf32>
    %cst_15 = arith.constant 0.000000e+00 : f32
    %15 = vector.broadcast %cst_15 : f32 to vector<288x32xf32>
    %16 = arith.maximumf %14, %15 : vector<288x32xf32>
    %17 = arith.truncf %16 : vector<288x32xf32> to vector<288x32xbf16>
    %cst_16 = arith.constant 0.000000e+00 : bf16
    %18 = vector.broadcast %cst_16 : bf16 to vector<18x1x32xbf16>
    %c0_17 = arith.constant 0 : index
    %c0_18 = arith.constant 0 : index
    %c0_19 = arith.constant 0 : index
    %19 = vector.load %arg12[%c0_17, %c0_18, %c0_19] : memref<18x18x32xbf16, #tpu.memory_space<vmem>>, vector<18x1x32xbf16>
    tpu.vector_store %arg12[%c0_17, %c0_18, %c0_19], %18 {strides = array<i32>} : memref<18x18x32xbf16, #tpu.memory_space<vmem>>, vector<18x1x32xbf16>,
    %cst_20 = arith.constant 0.000000e+00 : bf16
    %20 = vector.broadcast %cst_20 : bf16 to vector<18x1x32xbf16>
    %c0_21 = arith.constant 0 : index
    %c17 = arith.constant 17 : index
    %c0_22 = arith.constant 0 : index
    %21 = vector.load %arg12[%c0_21, %c17, %c0_22] : memref<18x18x32xbf16, #tpu.memory_space<vmem>>, vector<18x1x32xbf16>
    tpu.vector_store %arg12[%c0_21, %c17, %c0_22], %20 {strides = array<i32>} : memref<18x18x32xbf16, #tpu.memory_space<vmem>>, vector<18x1x32xbf16>,
    %22 = vector.shape_cast %17 : vector<288x32xbf16> to vector<18x16x32xbf16>
    %c0_23 = arith.constant 0 : index
    %c1 = arith.constant 1 : index
    %c0_24 = arith.constant 0 : index
    %23 = vector.load %arg12[%c0_23, %c1, %c0_24] : memref<18x18x32xbf16, #tpu.memory_space<vmem>>, vector<18x16x32xbf16>
    tpu.vector_store %arg12[%c0_23, %c1, %c0_24], %22 {strides = array<i32>} : memref<18x18x32xbf16, #tpu.memory_space<vmem>>, vector<18x16x32xbf16>,
    %c0_i32 = arith.constant 0 : i32
    %24 = arith.cmpi eq, %arg1, %c0_i32 : i32
    %25 = arith.extui %24 : i1 to i32
    %c0_i32_25 = arith.constant 0 : i32
    %26 = arith.cmpi ne, %25, %c0_i32_25 : i32
    scf.if %26 {
      %cst_86 = arith.constant 0.000000e+00 : bf16
      %78 = vector.broadcast %cst_86 : bf16 to vector<1x18x32xbf16>
      %c0_87 = arith.constant 0 : index
      %c0_88 = arith.constant 0 : index
      %c0_89 = arith.constant 0 : index
      %79 = vector.load %arg12[%c0_87, %c0_88, %c0_89] : memref<18x18x32xbf16, #tpu.memory_space<vmem>>, vector<1x18x32xbf16>
      tpu.vector_store %arg12[%c0_87, %c0_88, %c0_89], %78 {strides = array<i32>} : memref<18x18x32xbf16, #tpu.memory_space<vmem>>, vector<1x18x32xbf16>,
    } else {
    }
    %c0_i32_26 = arith.constant 0 : i32
    %27 = arith.cmpi eq, %arg1, %c0_i32_26 : i32
    %28 = arith.extui %27 : i1 to i32
    %c0_i32_27 = arith.constant 0 : i32
    %29 = arith.cmpi ne, %28, %c0_i32_27 : i32
    scf.if %29 {
      %cst_86 = arith.constant 0.000000e+00 : bf16
      %78 = vector.broadcast %cst_86 : bf16 to vector<1x18x32xbf16>
      %c17_87 = arith.constant 17 : index
      %c0_88 = arith.constant 0 : index
      %c0_89 = arith.constant 0 : index
      %79 = vector.load %arg12[%c17_87, %c0_88, %c0_89] : memref<18x18x32xbf16, #tpu.memory_space<vmem>>, vector<1x18x32xbf16>
      tpu.vector_store %arg12[%c17_87, %c0_88, %c0_89], %78 {strides = array<i32>} : memref<18x18x32xbf16, #tpu.memory_space<vmem>>, vector<1x18x32xbf16>,
    } else {
    }
    %c0_28 = arith.constant 0 : index
    %c0_29 = arith.constant 0 : index
    %c0_30 = arith.constant 0 : index
    %30 = vector.load %arg12[%c0_28, %c0_29, %c0_30] : memref<18x18x32xbf16, #tpu.memory_space<vmem>>, vector<16x16x32xbf16>
    %31 = vector.shape_cast %30 : vector<16x16x32xbf16> to vector<256x32xbf16>
    %c0_31 = arith.constant 0 : index
    %c0_32 = arith.constant 0 : index
    %32 = vector.load %arg13[%c0_31, %c0_32] : memref<256x288xbf16, #tpu.memory_space<vmem>>, vector<256x32xbf16>
    tpu.vector_store %arg13[%c0_31, %c0_32], %31 {strides = array<i32>} : memref<256x288xbf16, #tpu.memory_space<vmem>>, vector<256x32xbf16>,
    %c0_33 = arith.constant 0 : index
    %c1_34 = arith.constant 1 : index
    %c0_35 = arith.constant 0 : index
    %33 = vector.load %arg12[%c0_33, %c1_34, %c0_35] : memref<18x18x32xbf16, #tpu.memory_space<vmem>>, vector<16x16x32xbf16>
    %34 = vector.shape_cast %33 : vector<16x16x32xbf16> to vector<256x32xbf16>
    %c0_36 = arith.constant 0 : index
    %c32 = arith.constant 32 : index
    %35 = vector.load %arg13[%c0_36, %c32] : memref<256x288xbf16, #tpu.memory_space<vmem>>, vector<256x32xbf16>
    tpu.vector_store %arg13[%c0_36, %c32], %34 {strides = array<i32>} : memref<256x288xbf16, #tpu.memory_space<vmem>>, vector<256x32xbf16>,
    %c0_37 = arith.constant 0 : index
    %c2 = arith.constant 2 : index
    %c0_38 = arith.constant 0 : index
    %36 = vector.load %arg12[%c0_37, %c2, %c0_38] : memref<18x18x32xbf16, #tpu.memory_space<vmem>>, vector<16x16x32xbf16>
    %37 = vector.shape_cast %36 : vector<16x16x32xbf16> to vector<256x32xbf16>
    %c0_39 = arith.constant 0 : index
    %c64 = arith.constant 64 : index
    %38 = vector.load %arg13[%c0_39, %c64] : memref<256x288xbf16, #tpu.memory_space<vmem>>, vector<256x32xbf16>
    tpu.vector_store %arg13[%c0_39, %c64], %37 {strides = array<i32>} : memref<256x288xbf16, #tpu.memory_space<vmem>>, vector<256x32xbf16>,
    %c1_40 = arith.constant 1 : index
    %c0_41 = arith.constant 0 : index
    %c0_42 = arith.constant 0 : index
    %39 = vector.load %arg12[%c1_40, %c0_41, %c0_42] : memref<18x18x32xbf16, #tpu.memory_space<vmem>>, vector<16x16x32xbf16>
    %40 = vector.shape_cast %39 : vector<16x16x32xbf16> to vector<256x32xbf16>
    %c0_43 = arith.constant 0 : index
    %c96 = arith.constant 96 : index
    %41 = vector.load %arg13[%c0_43, %c96] : memref<256x288xbf16, #tpu.memory_space<vmem>>, vector<256x32xbf16>
    tpu.vector_store %arg13[%c0_43, %c96], %40 {strides = array<i32>} : memref<256x288xbf16, #tpu.memory_space<vmem>>, vector<256x32xbf16>,
    %c1_44 = arith.constant 1 : index
    %c1_45 = arith.constant 1 : index
    %c0_46 = arith.constant 0 : index
    %42 = vector.load %arg12[%c1_44, %c1_45, %c0_46] : memref<18x18x32xbf16, #tpu.memory_space<vmem>>, vector<16x16x32xbf16>
    %43 = vector.shape_cast %42 : vector<16x16x32xbf16> to vector<256x32xbf16>
    %c0_47 = arith.constant 0 : index
    %c128 = arith.constant 128 : index
    %44 = vector.load %arg13[%c0_47, %c128] : memref<256x288xbf16, #tpu.memory_space<vmem>>, vector<256x32xbf16>
    tpu.vector_store %arg13[%c0_47, %c128], %43 {strides = array<i32>} : memref<256x288xbf16, #tpu.memory_space<vmem>>, vector<256x32xbf16>,
    %c1_48 = arith.constant 1 : index
    %c2_49 = arith.constant 2 : index
    %c0_50 = arith.constant 0 : index
    %45 = vector.load %arg12[%c1_48, %c2_49, %c0_50] : memref<18x18x32xbf16, #tpu.memory_space<vmem>>, vector<16x16x32xbf16>
    %46 = vector.shape_cast %45 : vector<16x16x32xbf16> to vector<256x32xbf16>
    %c0_51 = arith.constant 0 : index
    %c160 = arith.constant 160 : index
    %47 = vector.load %arg13[%c0_51, %c160] : memref<256x288xbf16, #tpu.memory_space<vmem>>, vector<256x32xbf16>
    tpu.vector_store %arg13[%c0_51, %c160], %46 {strides = array<i32>} : memref<256x288xbf16, #tpu.memory_space<vmem>>, vector<256x32xbf16>,
    %c2_52 = arith.constant 2 : index
    %c0_53 = arith.constant 0 : index
    %c0_54 = arith.constant 0 : index
    %48 = vector.load %arg12[%c2_52, %c0_53, %c0_54] : memref<18x18x32xbf16, #tpu.memory_space<vmem>>, vector<16x16x32xbf16>
    %49 = vector.shape_cast %48 : vector<16x16x32xbf16> to vector<256x32xbf16>
    %c0_55 = arith.constant 0 : index
    %c192 = arith.constant 192 : index
    %50 = vector.load %arg13[%c0_55, %c192] : memref<256x288xbf16, #tpu.memory_space<vmem>>, vector<256x32xbf16>
    tpu.vector_store %arg13[%c0_55, %c192], %49 {strides = array<i32>} : memref<256x288xbf16, #tpu.memory_space<vmem>>, vector<256x32xbf16>,
    %c2_56 = arith.constant 2 : index
    %c1_57 = arith.constant 1 : index
    %c0_58 = arith.constant 0 : index
    %51 = vector.load %arg12[%c2_56, %c1_57, %c0_58] : memref<18x18x32xbf16, #tpu.memory_space<vmem>>, vector<16x16x32xbf16>
    %52 = vector.shape_cast %51 : vector<16x16x32xbf16> to vector<256x32xbf16>
    %c0_59 = arith.constant 0 : index
    %c224 = arith.constant 224 : index
    %53 = vector.load %arg13[%c0_59, %c224] : memref<256x288xbf16, #tpu.memory_space<vmem>>, vector<256x32xbf16>
    tpu.vector_store %arg13[%c0_59, %c224], %52 {strides = array<i32>} : memref<256x288xbf16, #tpu.memory_space<vmem>>, vector<256x32xbf16>,
    %c2_60 = arith.constant 2 : index
    %c2_61 = arith.constant 2 : index
    %c0_62 = arith.constant 0 : index
    %54 = vector.load %arg12[%c2_60, %c2_61, %c0_62] : memref<18x18x32xbf16, #tpu.memory_space<vmem>>, vector<16x16x32xbf16>
    %55 = vector.shape_cast %54 : vector<16x16x32xbf16> to vector<256x32xbf16>
    %c0_63 = arith.constant 0 : index
    %c256 = arith.constant 256 : index
    %56 = vector.load %arg13[%c0_63, %c256] : memref<256x288xbf16, #tpu.memory_space<vmem>>, vector<256x32xbf16>
    tpu.vector_store %arg13[%c0_63, %c256], %55 {strides = array<i32>} : memref<256x288xbf16, #tpu.memory_space<vmem>>, vector<256x32xbf16>,
    %c0_64 = arith.constant 0 : index
    %c0_65 = arith.constant 0 : index
    %57 = vector.load %arg13[%c0_64, %c0_65] : memref<256x288xbf16, #tpu.memory_space<vmem>>, vector<256x288xbf16>
    %c0_66 = arith.constant 0 : index
    %c0_67 = arith.constant 0 : index
    %58 = vector.load %arg7[%c0_66, %c0_67] : memref<288x32xbf16, #tpu.memory_space<vmem>>, vector<288x32xbf16>
    %cst_68 = arith.constant dense<0.000000e+00> : vector<256x32xf32>
    %59 = tpu.matmul %57, %58, %cst_68 {dimension_numbers = #tpu.dot_dimension_numbers<[1], [0], [0], [1], [0, 0, 1, 1], [], []>} : vector<256x288xbf16>, vector<288x32xbf16>, vector<256x32xf32> -> vector<256x32xf32>
    %c0_69 = arith.constant 0 : index
    %c0_70 = arith.constant 0 : index
    %60 = vector.load %arg8[%c0_69, %c0_70] : memref<1x32xf32, #tpu.memory_space<vmem>>, vector<1x32xf32>
    %61 = vector.broadcast %60 : vector<1x32xf32> to vector<256x32xf32>
    %62 = arith.addf %59, %61 : vector<256x32xf32>
    %cst_71 = arith.constant 0.000000e+00 : f32
    %63 = vector.broadcast %cst_71 : f32 to vector<256x32xf32>
    %64 = arith.maximumf %62, %63 : vector<256x32xf32>
    %65 = arith.truncf %64 : vector<256x32xf32> to vector<256x32xbf16>
    %c0_72 = arith.constant 0 : index
    %c0_73 = arith.constant 0 : index
    %66 = vector.load %arg9[%c0_72, %c0_73] : memref<32x128xbf16, #tpu.memory_space<vmem>>, vector<32x128xbf16>
    %cst_74 = arith.constant dense<0.000000e+00> : vector<256x128xf32>
    %67 = tpu.matmul %65, %66, %cst_74 {dimension_numbers = #tpu.dot_dimension_numbers<[1], [0], [0], [1], [0, 0, 1, 1], [], []>} : vector<256x32xbf16>, vector<32x128xbf16>, vector<256x128xf32> -> vector<256x128xf32>
    %c0_75 = arith.constant 0 : index
    %c0_76 = arith.constant 0 : index
    %68 = vector.load %arg10[%c0_75, %c0_76] : memref<1x128xf32, #tpu.memory_space<vmem>>, vector<1x128xf32>
    %69 = vector.broadcast %68 : vector<1x128xf32> to vector<256x128xf32>
    %70 = arith.addf %67, %69 : vector<256x128xf32>
    %c0_77 = arith.constant 0 : index
    %c0_78 = arith.constant 0 : index
    %c0_79 = arith.constant 0 : index
    %c0_80 = arith.constant 0 : index
    %71 = vector.load %arg2[%c0_77, %c0_78, %c0_79, %c0_80] : memref<1x16x16x128xf32, #tpu.memory_space<vmem>>, vector<1x16x16x128xf32>
    %72 = vector.shape_cast %71 : vector<1x16x16x128xf32> to vector<256x128xf32>
    %73 = arith.addf %70, %72 : vector<256x128xf32>
    %cst_81 = arith.constant 0.000000e+00 : f32
    %74 = vector.broadcast %cst_81 : f32 to vector<256x128xf32>
    %75 = arith.maximumf %73, %74 : vector<256x128xf32>
    %76 = vector.shape_cast %75 : vector<256x128xf32> to vector<1x16x16x128xf32>
    %c0_82 = arith.constant 0 : index
    %c0_83 = arith.constant 0 : index
    %c0_84 = arith.constant 0 : index
    %c0_85 = arith.constant 0 : index
    %77 = vector.load %arg11[%c0_82, %c0_83, %c0_84, %c0_85] : memref<1x16x16x128xf32, #tpu.memory_space<vmem>>, vector<1x16x16x128xf32>
    tpu.vector_store %arg11[%c0_82, %c0_83, %c0_84, %c0_85], %76 {strides = array<i32>} : memref<1x16x16x128xf32, #tpu.memory_space<vmem>>, vector<1x16x16x128xf32>,
    return
  }
  func.func @transform_0(%arg0: i32, %arg1: i32) -> (i32, i32, i32, i32) {
    %c0_i32 = arith.constant 0 : i32
    %c0_i32_0 = arith.constant 0 : i32
    %c0_i32_1 = arith.constant 0 : i32
    return %arg0, %arg1, %c0_i32, %c0_i32_0 : i32, i32, i32, i32
  }
  func.func @transform_1(%arg0: i32, %arg1: i32) -> (i32, i32, i32, i32) {
    %c16_i32 = arith.constant 16 : i32
    %0 = arith.muli %arg1, %c16_i32 : i32
    %c1_i32 = arith.constant 1 : i32
    %1 = arith.subi %0, %c1_i32 : i32
    %c0_i32 = arith.constant 0 : i32
    %2 = arith.maxsi %1, %c0_i32 : i32
    %c0_i32_0 = arith.constant 0 : i32
    %c0_i32_1 = arith.constant 0 : i32
    %c0_i32_2 = arith.constant 0 : i32
    return %arg0, %2, %c0_i32_0, %c0_i32_1 : i32, i32, i32, i32
  }
  func.func @transform_2(%arg0: i32, %arg1: i32) -> (i32, i32, i32, i32) {
    %c16_i32 = arith.constant 16 : i32
    %0 = arith.muli %arg1, %c16_i32 : i32
    %c16_i32_0 = arith.constant 16 : i32
    %1 = arith.addi %0, %c16_i32_0 : i32
    %c15_i32 = arith.constant 15 : i32
    %2 = arith.minsi %1, %c15_i32 : i32
    %c0_i32 = arith.constant 0 : i32
    %c0_i32_1 = arith.constant 0 : i32
    %c0_i32_2 = arith.constant 0 : i32
    return %arg0, %2, %c0_i32, %c0_i32_1 : i32, i32, i32, i32
  }
  func.func @transform_3(%arg0: i32, %arg1: i32) -> (i32, i32) {
    %c0_i32 = arith.constant 0 : i32
    %c0_i32_0 = arith.constant 0 : i32
    %c0_i32_1 = arith.constant 0 : i32
    return %c0_i32, %c0_i32_0 : i32, i32
  }
  func.func @transform_4(%arg0: i32, %arg1: i32) -> (i32, i32) {
    %c0_i32 = arith.constant 0 : i32
    %c0_i32_0 = arith.constant 0 : i32
    %c0_i32_1 = arith.constant 0 : i32
    return %c0_i32, %c0_i32_0 : i32, i32
  }
  func.func @transform_5(%arg0: i32, %arg1: i32) -> (i32, i32) {
    %c0_i32 = arith.constant 0 : i32
    %c0_i32_0 = arith.constant 0 : i32
    %c0_i32_1 = arith.constant 0 : i32
    return %c0_i32, %c0_i32_0 : i32, i32
  }
  func.func @transform_6(%arg0: i32, %arg1: i32) -> (i32, i32) {
    %c0_i32 = arith.constant 0 : i32
    %c0_i32_0 = arith.constant 0 : i32
    %c0_i32_1 = arith.constant 0 : i32
    return %c0_i32, %c0_i32_0 : i32, i32
  }
  func.func @transform_7(%arg0: i32, %arg1: i32) -> (i32, i32) {
    %c0_i32 = arith.constant 0 : i32
    %c0_i32_0 = arith.constant 0 : i32
    %c0_i32_1 = arith.constant 0 : i32
    return %c0_i32, %c0_i32_0 : i32, i32
  }
  func.func @transform_8(%arg0: i32, %arg1: i32) -> (i32, i32) {
    %c0_i32 = arith.constant 0 : i32
    %c0_i32_0 = arith.constant 0 : i32
    %c0_i32_1 = arith.constant 0 : i32
    return %c0_i32, %c0_i32_0 : i32, i32
  }
  func.func @transform_9(%arg0: i32, %arg1: i32) -> (i32, i32, i32, i32) {
    %c0_i32 = arith.constant 0 : i32
    %c0_i32_0 = arith.constant 0 : i32
    %c0_i32_1 = arith.constant 0 : i32
    return %arg0, %arg1, %c0_i32, %c0_i32_0 : i32, i32, i32, i32
  }
}

</mosaic_0001>

<llo_original>
// kernel: tpu_custom_call.1
$region0: #{tpu_custom_call.1}
  #allocation0 [shape = 'u32[]', space=smem, size = 0x4, offset = 0x4, fixed_abs, tag = 'smem constant byte address 0x4 - core index']
  #allocation1 [shape = 'u32[72,128]{1,0:T(1,128)}', space=vmem, size = 0x9000, scoped, tag = 'internal scratch']
  #allocation2 [shape = 'bf16[18,18,32]{2,1,0:T(8,128)(2,1)}', space=vmem, size = 0x1b000, scoped, tag = 'scratch operand']
  #allocation3 [shape = 'bf16[256,288]{1,0:T(8,128)(2,1)}', space=vmem, size = 0x30000, scoped, tag = 'scratch operand']
  %s0 = inlined_call_operand.hbm [shape: f32[2,16,16,128], index: 0, kind: input, shape index: {}]
  %s1 = inlined_call_operand.hbm [shape: f32[2,16,16,128], index: 1, kind: input, shape index: {}]
  %s2 = inlined_call_operand.hbm [shape: f32[2,16,16,128], index: 2, kind: input, shape index: {}]
  %s3 = inlined_call_operand.vmem [shape: bf16[128,32], index: 3, kind: input, shape index: {}]
  %s4 = inlined_call_operand.vmem [shape: f32[1,32], index: 4, kind: input, shape index: {}]
  %s5 = inlined_call_operand.vmem [shape: bf16[288,32], index: 5, kind: input, shape index: {}]
  %s6 = inlined_call_operand.vmem [shape: f32[1,32], index: 6, kind: input, shape index: {}]
  %s7 = inlined_call_operand.vmem [shape: bf16[32,128], index: 7, kind: input, shape index: {}]
  %s8 = inlined_call_operand.vmem [shape: f32[1,128], index: 8, kind: input, shape index: {}]
  %s9 = inlined_call_operand.hbm [shape: f32[2,16,16,128], index: 9, kind: output, shape index: {}]
  %s10 = sld [smem:[#allocation0]]
  $region85: #{tpu_custom_call.1} parent=0
    _
  %s12 = ssub.s32 1, %s10
  %s13 = scalar_select 0, %s12, %s10
  $region1: #{tpu_custom_call.1} parent=0
    #allocation4 [shape = 'u8[262144]{0}', space=vmem, size = 0x40000, scoped, tag = 'input window, operand 0']
    #allocation5 [shape = 's32[2]{0}', space=sflag, size = 0x8, scoped, tag = 'scoped memory for tpu_custom_call.1']
    #allocation6 [shape = 's32[2]{0}', space=sflag, size = 0x8, scoped, tag = 'scoped memory for tpu_custom_call.1']
    #allocation7 [shape = 'u8[16384]{0}', space=vmem, size = 0x4000, scoped, tag = 'input window, operand 1']
    #allocation8 [shape = 's32[2]{0}', space=sflag, size = 0x8, scoped, tag = 'scoped memory for tpu_custom_call.1']
    #allocation9 [shape = 'u8[16384]{0}', space=vmem, size = 0x4000, scoped, tag = 'input window, operand 2']
    #allocation10 [shape = 'u8[262144]{0}', space=vmem, size = 0x40000, scoped, tag = 'output window, operand 0']
    %14 = vsyncpa [#allocation5], 0
    %s15 = scalar_lea.sflag [#allocation5], 1
    %16 = vsyncpa %s15, 0
    %17 = vsyncpa [#allocation8], 0
    %s18 = scalar_lea.sflag [#allocation8], 1
    %19 = vsyncpa %s18, 0
    %20 = vsyncpa [#allocation6], 0
    %s21 = scalar_lea.sflag [#allocation6], 1
    %22 = vsyncpa %s21, 0
    loop: start=0, step=1, limit=4
    $region2: #{tpu_custom_call.1} parent=1 // loop_pre_header
      _
    $region3: #{tpu_custom_call.1} parent=1 // loop_header
      %s24 = sphi 0, %s28
      %p25 = scmp.ge.s32.totalorder %s24, 4
      %s31 = sphi 0, %s43
      %s32 = sphi 0, %s39
      %s33 = sphi 0, %s31
      %s34 = sphi 0, %s32
      %s35 = sphi 0, %s33
      %s36 = sphi 0, %s34
      %s48 = sphi 0, %s50
      %s51 = sphi 0, %s48
      %s52 = sphi 0, %s51
      %s68 = sphi 0, %s52
      %s84 = sphi 0, %s86
      %s87 = sphi 0, %s84
      %s88 = sphi 0, %s87
      %s104 = sphi 0, %s88
      %s120 = sphi 0, %s122
      %s123 = sphi 0, %s120
      %s124 = sphi 0, %s123
      %s140 = sphi 0, %s124
      %s144 = sphi 0, %s144
      %s146 = sphi 0, %s144
      %s147 = sphi 0, %s146
      %s161 = sphi 0, %s147
      %s165 = sphi 0, %s165
      %s167 = sphi 0, %s165
      %s168 = sphi 0, %s167
      %s182 = sphi 0, %s168
      %s186 = sphi 0, %s186
      %s188 = sphi 0, %s186
      %s189 = sphi 0, %s188
      %s203 = sphi 0, %s189
      %s207 = sphi 0, %s207
      %s209 = sphi 0, %s207
      %s210 = sphi 0, %s209
      %s224 = sphi 0, %s210
      %s228 = sphi 0, %s228
      %s230 = sphi 0, %s228
      %s231 = sphi 0, %s230
      %s245 = sphi 0, %s231
      %s249 = sphi 0, %s249
      %s251 = sphi 0, %s249
      %s252 = sphi 0, %s251
      %s266 = sphi 0, %s252
      %s274 = sphi 0, %s276
      %s277 = sphi 0, %s274
      %s278 = sphi 0, %s277
      %s294 = sphi 0, %s278
    $region4: #{tpu_custom_call.1} parent=1 // loop_header_branch
      %27 = sbr.rel (%p25) target = $region8
    $region5: #{tpu_custom_call.1} parent=1 // loop_body
      %s29 = ssub.s32 %s24, 1
      %s30 = ssub.s32 %s24, 2
      %s37 = sadd.s32 1, %s32
      %p38 = scmp.ge.s32.totalorder %s37, 1
      %s39 = scalar_select %p38, 0, %s37
      %s40 = sadd.s32 1, %s31
      %s41 = scalar_select %p38, %s40, %s31
      %p42 = scmp.ge.s32.totalorder %s41, 2
      %s43 = scalar_select %p42, 0, %s41
      %s44 = ssub.s32 %s31, %s43
      %s45 = ssub.s32 %s32, %s39
      %s46 = sor.u32 %s44, %s45
      %p47 = scmp.eq.s32.totalorder %s46, 0
      %s49 = sadd.s32 %s48, 1
      %s50 = scalar_select %p47, %s48, %s49
      %p53 = pneg %p47
      %p54 = scmp.eq.s32.totalorder %s24, 1
      %p55 = por %p53, %p54
      %p56 = scmp.ne.s32.totalorder %s48, %s51
      %p57 = scmp.eq.s32.totalorder %s24, 0
      %p58 = por %p56, %p57
      %p59 = scmp.ne.s32.totalorder %s48, %s51
      %p60 = scmp.eq.s32.totalorder %s29, 1
      %p61 = por %p59, %p60
      %p62 = scmp.ne.s32.totalorder %s51, %s52
      %p63 = scmp.eq.s32.totalorder %s29, 0
      %p64 = por %p62, %p63
      %p65 = scmp.ne.s32.totalorder %s51, %s52
      %p66 = scmp.eq.s32.totalorder %s30, 1
      %p67 = por %p65, %p66
      %p69 = scmp.ne.s32.totalorder %s52, %s68
      %p70 = scmp.eq.s32.totalorder %s30, 0
      %p71 = por %p69, %p70
      %s72 = smul.u32 %s32, 16
      %s73 = ssub.s32 %s72, 1
      %p74 = scmp.gt.s32.totalorder %s73, 0
      %s75 = scalar_select %p74, %s73, 0
      %s76 = smul.u32 %s39, 16
      %s77 = ssub.s32 %s76, 1
      %p78 = scmp.gt.s32.totalorder %s77, 0
      %s79 = scalar_select %p78, %s77, 0
      %s80 = ssub.s32 %s31, %s43
      %s81 = ssub.s32 %s75, %s79
      %s82 = sor.u32 %s80, %s81
      %p83 = scmp.eq.s32.totalorder %s82, 0
      %s85 = sadd.s32 %s84, 1
      %s86 = scalar_select %p83, %s84, %s85
      %p89 = pneg %p83
      %p90 = scmp.eq.s32.totalorder %s24, 1
      %p91 = por %p89, %p90
      %p92 = scmp.ne.s32.totalorder %s84, %s87
      %p93 = scmp.eq.s32.totalorder %s24, 0
      %p94 = por %p92, %p93
      %p95 = scmp.ne.s32.totalorder %s84, %s87
      %p96 = scmp.eq.s32.totalorder %s29, 1
      %p97 = por %p95, %p96
      %p98 = scmp.ne.s32.totalorder %s87, %s88
      %p99 = scmp.eq.s32.totalorder %s29, 0
      %p100 = por %p98, %p99
      %p101 = scmp.ne.s32.totalorder %s87, %s88
      %p102 = scmp.eq.s32.totalorder %s30, 1
      %p103 = por %p101, %p102
      %p105 = scmp.ne.s32.totalorder %s88, %s104
      %p106 = scmp.eq.s32.totalorder %s30, 0
      %p107 = por %p105, %p106
      %s108 = smul.u32 %s32, 16
      %s109 = sadd.s32 %s108, 16
      %p110 = scmp.lt.s32.totalorder %s109, 15
      %s111 = scalar_select %p110, %s109, 15
      %s112 = smul.u32 %s39, 16
      %s113 = sadd.s32 %s112, 16
      %p114 = scmp.lt.s32.totalorder %s113, 15
      %s115 = scalar_select %p114, %s113, 15
      %s116 = ssub.s32 %s31, %s43
      %s117 = ssub.s32 %s111, %s115
      %s118 = sor.u32 %s116, %s117
      %p119 = scmp.eq.s32.totalorder %s118, 0
      %s121 = sadd.s32 %s120, 1
      %s122 = scalar_select %p119, %s120, %s121
      %p125 = pneg %p119
      %p126 = scmp.eq.s32.totalorder %s24, 1
      %p127 = por %p125, %p126
      %p128 = scmp.ne.s32.totalorder %s120, %s123
      %p129 = scmp.eq.s32.totalorder %s24, 0
      %p130 = por %p128, %p129
      %p131 = scmp.ne.s32.totalorder %s120, %s123
      %p132 = scmp.eq.s32.totalorder %s29, 1
      %p133 = por %p131, %p132
      %p134 = scmp.ne.s32.totalorder %s123, %s124
      %p135 = scmp.eq.s32.totalorder %s29, 0
      %p136 = por %p134, %p135
      %p137 = scmp.ne.s32.totalorder %s123, %s124
      %p138 = scmp.eq.s32.totalorder %s30, 1
      %p139 = por %p137, %p138
      %p141 = scmp.ne.s32.totalorder %s124, %s140
      %p142 = scmp.eq.s32.totalorder %s30, 0
      %p143 = por %p141, %p142
      %s145 = sadd.s32 %s144, 1
      %p148 = scmp.eq.s32.totalorder %s24, 1
      %p149 = scmp.ne.s32.totalorder %s144, %s146
      %p150 = scmp.eq.s32.totalorder %s24, 0
      %p151 = por %p149, %p150
      %p152 = scmp.ne.s32.totalorder %s144, %s146
      %p153 = scmp.eq.s32.totalorder %s29, 1
      %p154 = por %p152, %p153
      %p155 = scmp.ne.s32.totalorder %s146, %s147
      %p156 = scmp.eq.s32.totalorder %s29, 0
      %p157 = por %p155, %p156
      %p158 = scmp.ne.s32.totalorder %s146, %s147
      %p159 = scmp.eq.s32.totalorder %s30, 1
      %p160 = por %p158, %p159
      %p162 = scmp.ne.s32.totalorder %s147, %s161
      %p163 = scmp.eq.s32.totalorder %s30, 0
      %p164 = por %p162, %p163
      %s166 = sadd.s32 %s165, 1
      %p169 = scmp.eq.s32.totalorder %s24, 1
      %p170 = scmp.ne.s32.totalorder %s165, %s167
      %p171 = scmp.eq.s32.totalorder %s24, 0
      %p172 = por %p170, %p171
      %p173 = scmp.ne.s32.totalorder %s165, %s167
      %p174 = scmp.eq.s32.totalorder %s29, 1
      %p175 = por %p173, %p174
      %p176 = scmp.ne.s32.totalorder %s167, %s168
      %p177 = scmp.eq.s32.totalorder %s29, 0
      %p178 = por %p176, %p177
      %p179 = scmp.ne.s32.totalorder %s167, %s168
      %p180 = scmp.eq.s32.totalorder %s30, 1
      %p181 = por %p179, %p180
      %p183 = scmp.ne.s32.totalorder %s168, %s182
      %p184 = scmp.eq.s32.totalorder %s30, 0
      %p185 = por %p183, %p184
      %s187 = sadd.s32 %s186, 1
      %p190 = scmp.eq.s32.totalorder %s24, 1
      %p191 = scmp.ne.s32.totalorder %s186, %s188
      %p192 = scmp.eq.s32.totalorder %s24, 0
      %p193 = por %p191, %p192
      %p194 = scmp.ne.s32.totalorder %s186, %s188
      %p195 = scmp.eq.s32.totalorder %s29, 1
      %p196 = por %p194, %p195
      %p197 = scmp.ne.s32.totalorder %s188, %s189
      %p198 = scmp.eq.s32.totalorder %s29, 0
      %p199 = por %p197, %p198
      %p200 = scmp.ne.s32.totalorder %s188, %s189
      %p201 = scmp.eq.s32.totalorder %s30, 1
      %p202 = por %p200, %p201
      %p204 = scmp.ne.s32.totalorder %s189, %s203
      %p205 = scmp.eq.s32.totalorder %s30, 0
      %p206 = por %p204, %p205
      %s208 = sadd.s32 %s207, 1
      %p211 = scmp.eq.s32.totalorder %s24, 1
      %p212 = scmp.ne.s32.totalorder %s207, %s209
      %p213 = scmp.eq.s32.totalorder %s24, 0
      %p214 = por %p212, %p213
      %p215 = scmp.ne.s32.totalorder %s207, %s209
      %p216 = scmp.eq.s32.totalorder %s29, 1
      %p217 = por %p215, %p216
      %p218 = scmp.ne.s32.totalorder %s209, %s210
      %p219 = scmp.eq.s32.totalorder %s29, 0
      %p220 = por %p218, %p219
      %p221 = scmp.ne.s32.totalorder %s209, %s210
      %p222 = scmp.eq.s32.totalorder %s30, 1
      %p223 = por %p221, %p222
      %p225 = scmp.ne.s32.totalorder %s210, %s224
      %p226 = scmp.eq.s32.totalorder %s30, 0
      %p227 = por %p225, %p226
      %s229 = sadd.s32 %s228, 1
      %p232 = scmp.eq.s32.totalorder %s24, 1
      %p233 = scmp.ne.s32.totalorder %s228, %s230
      %p234 = scmp.eq.s32.totalorder %s24, 0
      %p235 = por %p233, %p234
      %p236 = scmp.ne.s32.totalorder %s228, %s230
      %p237 = scmp.eq.s32.totalorder %s29, 1
      %p238 = por %p236, %p237
      %p239 = scmp.ne.s32.totalorder %s230, %s231
      %p240 = scmp.eq.s32.totalorder %s29, 0
      %p241 = por %p239, %p240
      %p242 = scmp.ne.s32.totalorder %s230, %s231
      %p243 = scmp.eq.s32.totalorder %s30, 1
      %p244 = por %p242, %p243
      %p246 = scmp.ne.s32.totalorder %s231, %s245
      %p247 = scmp.eq.s32.totalorder %s30, 0
      %p248 = por %p246, %p247
      %s250 = sadd.s32 %s249, 1
      %p253 = scmp.eq.s32.totalorder %s24, 1
      %p254 = scmp.ne.s32.totalorder %s249, %s251
      %p255 = scmp.eq.s32.totalorder %s24, 0
      %p256 = por %p254, %p255
      %p257 = scmp.ne.s32.totalorder %s249, %s251
      %p258 = scmp.eq.s32.totalorder %s29, 1
      %p259 = por %p257, %p258
      %p260 = scmp.ne.s32.totalorder %s251, %s252
      %p261 = scmp.eq.s32.totalorder %s29, 0
      %p262 = por %p260, %p261
      %p263 = scmp.ne.s32.totalorder %s251, %s252
      %p264 = scmp.eq.s32.totalorder %s30, 1
      %p265 = por %p263, %p264
      %p267 = scmp.ne.s32.totalorder %s252, %s266
      %p268 = scmp.eq.s32.totalorder %s30, 0
      %p269 = por %p267, %p268
      %s270 = ssub.s32 %s31, %s43
      %s271 = ssub.s32 %s32, %s39
      %s272 = sor.u32 %s270, %s271
      %p273 = scmp.eq.s32.totalorder %s272, 0
      %s275 = sadd.s32 %s274, 1
      %s276 = scalar_select %p273, %s274, %s275
      %p279 = pneg %p273
      %p280 = scmp.eq.s32.totalorder %s24, 1
      %p281 = por %p279, %p280
      %p282 = scmp.ne.s32.totalorder %s274, %s277
      %p283 = scmp.eq.s32.totalorder %s24, 0
      %p284 = por %p282, %p283
      %p285 = scmp.ne.s32.totalorder %s274, %s277
      %p286 = scmp.eq.s32.totalorder %s29, 1
      %p287 = por %p285, %p286
      %p288 = scmp.ne.s32.totalorder %s277, %s278
      %p289 = scmp.eq.s32.totalorder %s29, 0
      %p290 = por %p288, %p289
      %p291 = scmp.ne.s32.totalorder %s277, %s278
      %p292 = scmp.eq.s32.totalorder %s30, 1
      %p293 = por %p291, %p292
      %p295 = scmp.ne.s32.totalorder %s278, %s294
      %p296 = scmp.eq.s32.totalorder %s30, 0
      %p297 = por %p295, %p296
      %p298 = scmp.le.s32.totalorder 1, %s24
      %p299 = scmp.lt.s32.totalorder %s24, 3
      %p300 = pnand %p298, %p299
      %p301 = pneg %p300
      // Predicated region
      $region9: #{tpu_custom_call.1} parent=5 // pred_check
        _
      $region10: #{tpu_custom_call.1} parent=5 // pred_check_branch
        %303 = sbr.rel (%p300) target = $region12
      $region11: #{tpu_custom_call.1} parent=5 // pred_region
        %s304 = ssub.s32 %s24, 1
        // Predicated region
        $region13: #{tpu_custom_call.1} parent=11 // pred_check
          %p305 = pneg %p157
        $region14: #{tpu_custom_call.1} parent=11 // pred_check_branch
          %307 = sbr.rel (%p305) target = $region16
        $region15: #{tpu_custom_call.1} parent=11 // pred_region
          _
        $region16: #{tpu_custom_call.1} parent=11 // pred_fallthru
          _
        // Predicated region
        $region17: #{tpu_custom_call.1} parent=11 // pred_check
          %p308 = pneg %p178
        $region18: #{tpu_custom_call.1} parent=11 // pred_check_branch
          %310 = sbr.rel (%p308) target = $region20
        $region19: #{tpu_custom_call.1} parent=11 // pred_region
          _
        $region20: #{tpu_custom_call.1} parent=11 // pred_fallthru
          _
        // Predicated region
        $region21: #{tpu_custom_call.1} parent=11 // pred_check
          %p311 = pneg %p199
        $region22: #{tpu_custom_call.1} parent=11 // pred_check_branch
          %313 = sbr.rel (%p311) target = $region24
        $region23: #{tpu_custom_call.1} parent=11 // pred_region
          _
        $region24: #{tpu_custom_call.1} parent=11 // pred_fallthru
          _
        // Predicated region
        $region25: #{tpu_custom_call.1} parent=11 // pred_check
          %p314 = pneg %p220
        $region26: #{tpu_custom_call.1} parent=11 // pred_check_branch
          %316 = sbr.rel (%p314) target = $region28
        $region27: #{tpu_custom_call.1} parent=11 // pred_region
          _
        $region28: #{tpu_custom_call.1} parent=11 // pred_fallthru
          _
        // Predicated region
        $region29: #{tpu_custom_call.1} parent=11 // pred_check
          %p317 = pneg %p241
        $region30: #{tpu_custom_call.1} parent=11 // pred_check_branch
          %319 = sbr.rel (%p317) target = $region32
        $region31: #{tpu_custom_call.1} parent=11 // pred_region
          _
        $region32: #{tpu_custom_call.1} parent=11 // pred_fallthru
          _
        // Predicated region
        $region33: #{tpu_custom_call.1} parent=11 // pred_check
          %p320 = pneg %p262
        $region34: #{tpu_custom_call.1} parent=11 // pred_check_branch
          %322 = sbr.rel (%p320) target = $region36
        $region35: #{tpu_custom_call.1} parent=11 // pred_region
          _
        $region36: #{tpu_custom_call.1} parent=11 // pred_fallthru
          _
      $region12: #{tpu_custom_call.1} parent=5 // pred_fallthru
        _
      %p323 = scmp.lt.s32.totalorder %s24, 2
      // Predicated region
      $region37: #{tpu_custom_call.1} parent=5 // pred_check
        %p324 = pneg %p323
      $region38: #{tpu_custom_call.1} parent=5 // pred_check_branch
        %326 = sbr.rel (%p324) target = $region40
      $region39: #{tpu_custom_call.1} parent=5 // pred_region
        // Predicated region
        $region41: #{tpu_custom_call.1} parent=39 // pred_check
          %p327 = pneg %p58
        $region42: #{tpu_custom_call.1} parent=39 // pred_check_branch
          %329 = sbr.rel (%p327) target = $region44
        $region43: #{tpu_custom_call.1} parent=39 // pred_region
          %s330 = sand.u32 %s48, 1
          %s331 = scalar_lea.sflag [#allocation5], %s330
          %s332 = sand.u32 %s48, 1
          %s333 = smul.addr %s332, 256
          %s334 = scalar_lea.vmem [#allocation4], %s333
          %s335 = smul.u32 16, %s32
          %337 = vsyncadd %s331, 0
          %s338 = smul.addr %s335, 2
          %s339 = smul.addr %s31, 32
          %s340 = sadd.s32 %s338, %s339
          %s341 = smul.addr %s340, 8
          %s342 = scalar_lea.hbm %s0, %s341
          %s343 = sshll.u32 %s342, 4
          %s344 = int_to_ptr.hbm [resolvable:$true] %s343
          %s345 = sshll.u32 %s334, 4
          %s346 = int_to_ptr.vmem [resolvable:$true] %s345
          %351 = dma.hbm_to_vmem [thread:$0]  %s344, 4096, %s346, %s331, 128, 128, 8
        $region44: #{tpu_custom_call.1} parent=39 // pred_fallthru
          _
        // Predicated region
        $region45: #{tpu_custom_call.1} parent=39 // pred_check
          %p352 = pneg %p94
        $region46: #{tpu_custom_call.1} parent=39 // pred_check_branch
          %354 = sbr.rel (%p352) target = $region48
        $region47: #{tpu_custom_call.1} parent=39 // pred_region
          %s355 = sand.u32 %s24, 1
          %s356 = scalar_lea.sflag [#allocation8], %s355
          %s357 = sand.u32 %s84, 1
          %s358 = smul.addr %s357, 16
          %s359 = scalar_lea.vmem [#allocation7], %s358
          %s360 = smul.u32 %s32, 16
          %s361 = ssub.s32 %s360, 1
          %p362 = scmp.gt.s32.totalorder %s361, 0
          %s363 = scalar_select %p362, %s361, 0
          %365 = vsyncadd %s356, 0
          %s366 = smul.addr %s363, 2
          %s367 = smul.addr %s31, 32
          %s368 = sadd.s32 %s366, %s367
          %s369 = smul.addr %s368, 8
          %s370 = scalar_lea.hbm %s1, %s369
          %s371 = sshll.u32 %s370, 4
          %s372 = int_to_ptr.hbm [resolvable:$true] %s371
          %s373 = sshll.u32 %s359, 4
          %s374 = int_to_ptr.vmem [resolvable:$true] %s373
          %379 = dma.hbm_to_vmem [thread:$0]  %s372, 256, %s374, %s356, 128, 128, 8
        $region48: #{tpu_custom_call.1} parent=39 // pred_fallthru
          _
        // Predicated region
        $region49: #{tpu_custom_call.1} parent=39 // pred_check
          %p380 = pneg %p130
        $region50: #{tpu_custom_call.1} parent=39 // pred_check_branch
          %382 = sbr.rel (%p380) target = $region52
        $region51: #{tpu_custom_call.1} parent=39 // pred_region
          %s383 = sand.u32 %s24, 1
          %s384 = scalar_lea.sflag [#allocation8], %s383
          %s385 = sand.u32 %s120, 1
          %s386 = smul.addr %s385, 16
          %s387 = scalar_lea.vmem [#allocation9], %s386
          %s388 = smul.u32 %s32, 16
          %s389 = sadd.s32 %s388, 16
          %p390 = scmp.lt.s32.totalorder %s389, 15
          %s391 = scalar_select %p390, %s389, 15
          %393 = vsyncadd %s384, 0
          %s394 = smul.addr %s391, 2
          %s395 = smul.addr %s31, 32
          %s396 = sadd.s32 %s394, %s395
          %s397 = smul.addr %s396, 8
          %s398 = scalar_lea.hbm %s2, %s397
          %s399 = sshll.u32 %s398, 4
          %s400 = int_to_ptr.hbm [resolvable:$true] %s399
          %s401 = sshll.u32 %s387, 4
          %s402 = int_to_ptr.vmem [resolvable:$true] %s401
          %407 = dma.hbm_to_vmem [thread:$0]  %s400, 256, %s402, %s384, 128, 128, 8
        $region52: #{tpu_custom_call.1} parent=39 // pred_fallthru
          _
      $region40: #{tpu_custom_call.1} parent=5 // pred_fallthru
        _
      %p408 = scmp.le.s32.totalorder 1, %s24
      %p409 = scmp.lt.s32.totalorder %s24, 3
      %p410 = pnand %p408, %p409
      %p411 = pneg %p410
      // Predicated region
      $region53: #{tpu_custom_call.1} parent=5 // pred_check
        _
      $region54: #{tpu_custom_call.1} parent=5 // pred_check_branch
        %413 = sbr.rel (%p410) target = $region56
      $region55: #{tpu_custom_call.1} parent=5 // pred_region
        %s414 = ssub.s32 %s24, 1
        %s415 = sand.u32 %s51, 1
        %s416 = scalar_lea.sflag [#allocation5], %s415
        %s417 = sand.u32 %s51, 1
        %s418 = smul.addr %s417, 256
        %s419 = scalar_lea.vmem [#allocation4], %s418
        // Predicated region
        $region57: #{tpu_custom_call.1} parent=55 // pred_check
          %p420 = pneg %p64
        $region58: #{tpu_custom_call.1} parent=55 // pred_check_branch
          %422 = sbr.rel (%p420) target = $region60
        $region59: #{tpu_custom_call.1} parent=55 // pred_region
          %424 = dma.done %s416, 4096
        $region60: #{tpu_custom_call.1} parent=55 // pred_fallthru
          _
        %s425 = sand.u32 %s29, 1
        %s426 = scalar_lea.sflag [#allocation8], %s425
        %s427 = sand.u32 %s87, 1
        %s428 = smul.addr %s427, 16
        %s429 = scalar_lea.vmem [#allocation7], %s428
        // Predicated region
        $region61: #{tpu_custom_call.1} parent=55 // pred_check
          %p430 = pneg %p100
        $region62: #{tpu_custom_call.1} parent=55 // pred_check_branch
          %432 = sbr.rel (%p430) target = $region64
        $region63: #{tpu_custom_call.1} parent=55 // pred_region
          %434 = dma.done %s426, 256
        $region64: #{tpu_custom_call.1} parent=55 // pred_fallthru
          _
        %s435 = sand.u32 %s29, 1
        %s436 = scalar_lea.sflag [#allocation8], %s435
        %s437 = sand.u32 %s123, 1
        %s438 = smul.addr %s437, 16
        %s439 = scalar_lea.vmem [#allocation9], %s438
        // Predicated region
        $region65: #{tpu_custom_call.1} parent=55 // pred_check
          %p440 = pneg %p136
        $region66: #{tpu_custom_call.1} parent=55 // pred_check_branch
          %442 = sbr.rel (%p440) target = $region68
        $region67: #{tpu_custom_call.1} parent=55 // pred_region
          %444 = dma.done %s436, 256
        $region68: #{tpu_custom_call.1} parent=55 // pred_fallthru
          _
        %s445 = sand.u32 %s51, 1
        %s446 = scalar_lea.sflag [#allocation5], %s445
        %s447 = sand.u32 %s51, 1
        %s448 = smul.addr %s447, 256
        %s449 = scalar_lea.vmem [#allocation4], %s448
        %p450 = pneg %p64
        %p451 = pneg %p61
        %s452 = sand.u32 %s29, 1
        %s453 = scalar_lea.sflag [#allocation8], %s452
        %s454 = sand.u32 %s87, 1
        %s455 = smul.addr %s454, 16
        %s456 = scalar_lea.vmem [#allocation7], %s455
        %p457 = pneg %p100
        %p458 = pneg %p97
        %s459 = sand.u32 %s29, 1
        %s460 = scalar_lea.sflag [#allocation8], %s459
        %s461 = sand.u32 %s123, 1
        %s462 = smul.addr %s461, 16
        %s463 = scalar_lea.vmem [#allocation9], %s462
        %p464 = pneg %p136
        %p465 = pneg %p133
        %p466 = pneg %p157
        %p467 = pneg %p154
        %p468 = pneg %p178
        %p469 = pneg %p175
        %p470 = pneg %p199
        %p471 = pneg %p196
        %p472 = pneg %p220
        %p473 = pneg %p217
        %p474 = pneg %p241
        %p475 = pneg %p238
        %p476 = pneg %p262
        %p477 = pneg %p259
        %p478 = pneg %p290
        %p479 = pneg %p287
        %s480 = sand.u32 %s277, 1
        %s481 = scalar_lea.sflag [#allocation6], %s480
        %s482 = sand.u32 %s277, 1
        %s483 = smul.addr %s482, 256
        %s484 = scalar_lea.vmem [#allocation10], %s483
        %s485 = smul.u32 16, %s34
        %s486 = smul.u32 %s34, 16
        %s487 = ssub.s32 %s486, 1
        %p488 = scmp.gt.s32.totalorder %s487, 0
        %s489 = scalar_select %p488, %s487, 0
        %s490 = smul.u32 %s34, 16
        %s491 = sadd.s32 %s490, 16
        %p492 = scmp.lt.s32.totalorder %s491, 15
        %s493 = scalar_select %p492, %s491, 15
        %s494 = smul.u32 16, %s34
        %v496 = vld [vmem:[%s429] sm:$0xff]
        %v497 = vld [vmem:[%s429 + $0x8] sm:$0xff]
        %v498 = vpack.c.bf16 %v496, %v496
        %v499 = vpack.c.bf16 %v497, %v497
        %v500 = vld [vmem:[%s419] sm:$0xff]
        %v501 = vld [vmem:[%s419 + $0x8] sm:$0xff]
        %v502 = vld [vmem:[%s419 + $0x10] sm:$0xff]
        %v503 = vld [vmem:[%s419 + $0x18] sm:$0xff]
        %v504 = vld [vmem:[%s419 + $0x20] sm:$0xff]
        %v505 = vld [vmem:[%s419 + $0x28] sm:$0xff]
        %v506 = vld [vmem:[%s419 + $0x30] sm:$0xff]
        %v507 = vld [vmem:[%s419 + $0x38] sm:$0xff]
        %v508 = vld [vmem:[%s419 + $0x40] sm:$0xff]
        %v509 = vld [vmem:[%s419 + $0x48] sm:$0xff]
        %v510 = vld [vmem:[%s419 + $0x50] sm:$0xff]
        %v511 = vld [vmem:[%s419 + $0x58] sm:$0xff]
        %v512 = vld [vmem:[%s419 + $0x60] sm:$0xff]
        %v513 = vld [vmem:[%s419 + $0x68] sm:$0xff]
        %v514 = vld [vmem:[%s419 + $0x70] sm:$0xff]
        %v515 = vld [vmem:[%s419 + $0x78] sm:$0xff]
        %v516 = vld [vmem:[%s419 + $0x80] sm:$0xff]
        %v517 = vld [vmem:[%s419 + $0x88] sm:$0xff]
        %v518 = vld [vmem:[%s419 + $0x90] sm:$0xff]
        %v519 = vld [vmem:[%s419 + $0x98] sm:$0xff]
        %v520 = vld [vmem:[%s419 + $0xa0] sm:$0xff]
        %v521 = vld [vmem:[%s419 + $0xa8] sm:$0xff]
        %v522 = vld [vmem:[%s419 + $0xb0] sm:$0xff]
        %v523 = vld [vmem:[%s419 + $0xb8] sm:$0xff]
        %v524 = vld [vmem:[%s419 + $0xc0] sm:$0xff]
        %v525 = vld [vmem:[%s419 + $0xc8] sm:$0xff]
        %v526 = vld [vmem:[%s419 + $0xd0] sm:$0xff]
        %v527 = vld [vmem:[%s419 + $0xd8] sm:$0xff]
        %v528 = vld [vmem:[%s419 + $0xe0] sm:$0xff]
        %v529 = vld [vmem:[%s419 + $0xe8] sm:$0xff]
        %v530 = vld [vmem:[%s419 + $0xf0] sm:$0xff]
        %v531 = vld [vmem:[%s419 + $0xf8] sm:$0xff]
        %v532 = vpack.c.bf16 %v500, %v500
        %v533 = vpack.c.bf16 %v501, %v501
        %v534 = vpack.c.bf16 %v502, %v502
        %v535 = vpack.c.bf16 %v503, %v503
        %v536 = vpack.c.bf16 %v504, %v504
        %v537 = vpack.c.bf16 %v505, %v505
        %v538 = vpack.c.bf16 %v506, %v506
        %v539 = vpack.c.bf16 %v507, %v507
        %v540 = vpack.c.bf16 %v508, %v508
        %v541 = vpack.c.bf16 %v509, %v509
        %v542 = vpack.c.bf16 %v510, %v510
        %v543 = vpack.c.bf16 %v511, %v511
        %v544 = vpack.c.bf16 %v512, %v512
        %v545 = vpack.c.bf16 %v513, %v513
        %v546 = vpack.c.bf16 %v514, %v514
        %v547 = vpack.c.bf16 %v515, %v515
        %v548 = vpack.c.bf16 %v516, %v516
        %v549 = vpack.c.bf16 %v517, %v517
        %v550 = vpack.c.bf16 %v518, %v518
        %v551 = vpack.c.bf16 %v519, %v519
        %v552 = vpack.c.bf16 %v520, %v520
        %v553 = vpack.c.bf16 %v521, %v521
        %v554 = vpack.c.bf16 %v522, %v522
        %v555 = vpack.c.bf16 %v523, %v523
        %v556 = vpack.c.bf16 %v524, %v524
        %v557 = vpack.c.bf16 %v525, %v525
        %v558 = vpack.c.bf16 %v526, %v526
        %v559 = vpack.c.bf16 %v527, %v527
        %v560 = vpack.c.bf16 %v528, %v528
        %v561 = vpack.c.bf16 %v529, %v529
        %v562 = vpack.c.bf16 %v530, %v530
        %v563 = vpack.c.bf16 %v531, %v531
        %v564 = vld [vmem:[%s439] sm:$0xff]
        %v565 = vld [vmem:[%s439 + $0x8] sm:$0xff]
        %v566 = vpack.c.bf16 %v564, %v564
        %v567 = vpack.c.bf16 %v565, %v565
        %v570 = vunpack.c.l.b16 %v498
        %v571 = vunpack.c.l.b16 %v499
        %v572 = vpack.c.b16 %v571, %v570
        %v606 = vunpack.c.l.b16 %v532
        %v607 = vunpack.c.l.b16 %v533
        %v608 = vunpack.c.l.b16 %v534
        %v609 = vunpack.c.l.b16 %v535
        %v610 = vunpack.c.l.b16 %v536
        %v611 = vunpack.c.l.b16 %v537
        %v612 = vunpack.c.l.b16 %v538
        %v613 = vunpack.c.l.b16 %v539
        %v614 = vunpack.c.l.b16 %v540
        %v615 = vunpack.c.l.b16 %v541
        %v616 = vunpack.c.l.b16 %v542
        %v617 = vunpack.c.l.b16 %v543
        %v618 = vunpack.c.l.b16 %v544
        %v619 = vunpack.c.l.b16 %v545
        %v620 = vunpack.c.l.b16 %v546
        %v621 = vunpack.c.l.b16 %v547
        %v622 = vunpack.c.l.b16 %v548
        %v623 = vunpack.c.l.b16 %v549
        %v624 = vunpack.c.l.b16 %v550
        %v625 = vunpack.c.l.b16 %v551
        %v626 = vunpack.c.l.b16 %v552
        %v627 = vunpack.c.l.b16 %v553
        %v628 = vunpack.c.l.b16 %v554
        %v629 = vunpack.c.l.b16 %v555
        %v630 = vunpack.c.l.b16 %v556
        %v631 = vunpack.c.l.b16 %v557
        %v632 = vunpack.c.l.b16 %v558
        %v633 = vunpack.c.l.b16 %v559
        %v634 = vunpack.c.l.b16 %v560
        %v635 = vunpack.c.l.b16 %v561
        %v636 = vunpack.c.l.b16 %v562
        %v637 = vunpack.c.l.b16 %v563
        %v638 = vpack.c.b16 %v607, %v606
        %v639 = vpack.c.b16 %v609, %v608
        %v640 = vpack.c.b16 %v611, %v610
        %v641 = vpack.c.b16 %v613, %v612
        %v642 = vpack.c.b16 %v615, %v614
        %v643 = vpack.c.b16 %v617, %v616
        %v644 = vpack.c.b16 %v619, %v618
        %v645 = vpack.c.b16 %v621, %v620
        %v646 = vpack.c.b16 %v623, %v622
        %v647 = vpack.c.b16 %v625, %v624
        %v648 = vpack.c.b16 %v627, %v626
        %v649 = vpack.c.b16 %v629, %v628
        %v650 = vpack.c.b16 %v631, %v630
        %v651 = vpack.c.b16 %v633, %v632
        %v652 = vpack.c.b16 %v635, %v634
        %v653 = vpack.c.b16 %v637, %v636
        %v672 = vunpack.c.l.b16 %v566
        %v673 = vunpack.c.l.b16 %v567
        %v674 = vpack.c.b16 %v673, %v672
        %v676 = vld [vmem:[%s3] sm:$0xf]
        %v677 = vld [vmem:[%s3 + $0x4] sm:$0xf]
        %v678 = vld [vmem:[%s3 + $0x8] sm:$0xf]
        %v679 = vld [vmem:[%s3 + $0xc] sm:$0xf]
        %v680 = vld [vmem:[%s3 + $0x10] sm:$0xf]
        %v681 = vld [vmem:[%s3 + $0x14] sm:$0xf]
        %v682 = vld [vmem:[%s3 + $0x18] sm:$0xf]
        %v683 = vld [vmem:[%s3 + $0x1c] sm:$0xf]
        %v684 = vld [vmem:[%s3 + $0x20] sm:$0xf]
        %v685 = vld [vmem:[%s3 + $0x24] sm:$0xf]
        %v686 = vld [vmem:[%s3 + $0x28] sm:$0xf]
        %v687 = vld [vmem:[%s3 + $0x2c] sm:$0xf]
        %v688 = vld [vmem:[%s3 + $0x30] sm:$0xf]
        %v689 = vld [vmem:[%s3 + $0x34] sm:$0xf]
        %v690 = vld [vmem:[%s3 + $0x38] sm:$0xf]
        %v691 = vld [vmem:[%s3 + $0x3c] sm:$0xf]
        %v692 = vld [vmem:[%s4] sm:$0x1]
        %v694 = vperm.slane %v692, 0
        %v712 = vunpack.c.l.b16 %v676
        %v713 = vunpack.c.l.b16 %v677
        %v714 = vunpack.c.l.b16 %v678
        %v715 = vunpack.c.l.b16 %v679
        %v716 = vunpack.c.l.b16 %v680
        %v717 = vunpack.c.l.b16 %v681
        %v718 = vunpack.c.l.b16 %v682
        %v719 = vunpack.c.l.b16 %v683
        %v720 = vunpack.c.l.b16 %v684
        %v721 = vunpack.c.l.b16 %v685
        %v722 = vunpack.c.l.b16 %v686
        %v723 = vunpack.c.l.b16 %v687
        %v724 = vunpack.c.l.b16 %v688
        %v725 = vunpack.c.l.b16 %v689
        %v726 = vunpack.c.l.b16 %v690
        %v727 = vunpack.c.l.b16 %v691
        %v728 = vpack.c.b16 %v713, %v712
        %v729 = vpack.c.b16 %v715, %v714
        %v730 = vpack.c.b16 %v717, %v716
        %v731 = vpack.c.b16 %v719, %v718
        %v732 = vpack.c.b16 %v721, %v720
        %v733 = vpack.c.b16 %v723, %v722
        %v734 = vpack.c.b16 %v725, %v724
        %v735 = vpack.c.b16 %v727, %v726
        %744 = vmatpush.bf16.msra.mxu0 %v735
        %745 = vmatpush.bf16.msra.mxu0 %v734
        %746 = vmatpush.bf16.msra.mxu0 %v733
        %747 = vmatpush.bf16.msra.mxu0 %v732
        %748 = vmatpush.bf16.msra.mxu0 %v731
        %749 = vmatpush.bf16.msra.mxu0 %v730
        %750 = vmatpush.bf16.msra.mxu0 %v729
        %751 = vmatpush.bf16.msra.mxu0 %v728
        %752 = vmatmul.bf16.gmra.mxu0 %v572
        %v753 = vpop.f32.mrf.mxu0
        %v754 = vadd.f32 %v694, %v753
        %v755 = vpop.f32.mrf.mxu0
        %v756 = vadd.f32 %v694, %v755
        %757 = vmatmul.bf16.gmra.mxu0 %v638
        %v758 = vpop.f32.mrf.mxu0
        %v759 = vadd.f32 %v694, %v758
        %v760 = vpop.f32.mrf.mxu0
        %v761 = vadd.f32 %v694, %v760
        %762 = vmatmul.bf16.gmra.mxu0 %v639
        %v763 = vpop.f32.mrf.mxu0
        %v764 = vadd.f32 %v694, %v763
        %v765 = vpop.f32.mrf.mxu0
        %v766 = vadd.f32 %v694, %v765
        %767 = vmatmul.bf16.gmra.mxu0 %v640
        %v768 = vpop.f32.mrf.mxu0
        %v769 = vadd.f32 %v694, %v768
        %v770 = vpop.f32.mrf.mxu0
        %v771 = vadd.f32 %v694, %v770
        %772 = vmatmul.bf16.gmra.mxu0 %v641
        %v773 = vpop.f32.mrf.mxu0
        %v774 = vadd.f32 %v694, %v773
        %v775 = vpop.f32.mrf.mxu0
        %v776 = vadd.f32 %v694, %v775
        %777 = vmatmul.bf16.gmra.mxu0 %v642
        %v778 = vpop.f32.mrf.mxu0
        %v779 = vadd.f32 %v694, %v778
        %v780 = vpop.f32.mrf.mxu0
        %v781 = vadd.f32 %v694, %v780
        %782 = vmatmul.bf16.gmra.mxu0 %v643
        %v783 = vpop.f32.mrf.mxu0
        %v784 = vadd.f32 %v694, %v783
        %v785 = vpop.f32.mrf.mxu0
        %v786 = vadd.f32 %v694, %v785
        %787 = vmatmul.bf16.gmra.mxu0 %v644
        %v788 = vpop.f32.mrf.mxu0
        %v789 = vadd.f32 %v694, %v788
        %v790 = vpop.f32.mrf.mxu0
        %v791 = vadd.f32 %v694, %v790
        %792 = vmatmul.bf16.gmra.mxu0 %v645
        %v793 = vpop.f32.mrf.mxu0
        %v794 = vadd.f32 %v694, %v793
        %v795 = vpop.f32.mrf.mxu0
        %v796 = vadd.f32 %v694, %v795
        %797 = vmatmul.bf16.gmra.mxu0 %v646
        %v798 = vpop.f32.mrf.mxu0
        %v799 = vadd.f32 %v694, %v798
        %v800 = vpop.f32.mrf.mxu0
        %v801 = vadd.f32 %v694, %v800
        %802 = vmatmul.bf16.gmra.mxu0 %v647
        %v803 = vpop.f32.mrf.mxu0
        %v804 = vadd.f32 %v694, %v803
        %v805 = vpop.f32.mrf.mxu0
        %v806 = vadd.f32 %v694, %v805
        %807 = vmatmul.bf16.gmra.mxu0 %v648
        %v808 = vpop.f32.mrf.mxu0
        %v809 = vadd.f32 %v694, %v808
        %v810 = vpop.f32.mrf.mxu0
        %v811 = vadd.f32 %v694, %v810
        %812 = vmatmul.bf16.gmra.mxu0 %v649
        %v813 = vpop.f32.mrf.mxu0
        %v814 = vadd.f32 %v694, %v813
        %v815 = vpop.f32.mrf.mxu0
        %v816 = vadd.f32 %v694, %v815
        %817 = vmatmul.bf16.gmra.mxu0 %v650
        %v818 = vpop.f32.mrf.mxu0
        %v819 = vadd.f32 %v694, %v818
        %v820 = vpop.f32.mrf.mxu0
        %v821 = vadd.f32 %v694, %v820
        %822 = vmatmul.bf16.gmra.mxu0 %v651
        %v823 = vpop.f32.mrf.mxu0
        %v824 = vadd.f32 %v694, %v823
        %v825 = vpop.f32.mrf.mxu0
        %v826 = vadd.f32 %v694, %v825
        %827 = vmatmul.bf16.gmra.mxu0 %v652
        %v828 = vpop.f32.mrf.mxu0
        %v829 = vadd.f32 %v694, %v828
        %v830 = vpop.f32.mrf.mxu0
        %v831 = vadd.f32 %v694, %v830
        %832 = vmatmul.bf16.gmra.mxu0 %v653
        %v833 = vpop.f32.mrf.mxu0
        %v834 = vadd.f32 %v694, %v833
        %v835 = vpop.f32.mrf.mxu0
        %v836 = vadd.f32 %v694, %v835
        %837 = vmatmul.bf16.gmra.mxu0 %v674
        %v838 = vpop.f32.mrf.mxu0
        %v839 = vadd.f32 %v694, %v838
        %v840 = vpop.f32.mrf.mxu0
        %v841 = vadd.f32 %v694, %v840
        %842 = vdwg.mxu0
        %v843 = vmax.f32 %v754, 0.0
        %v844 = vmax.f32 %v756, 0.0
        %v845 = vmax.f32 %v759, 0.0
        %v846 = vmax.f32 %v761, 0.0
        %v847 = vmax.f32 %v764, 0.0
        %v848 = vmax.f32 %v766, 0.0
        %v849 = vmax.f32 %v769, 0.0
        %v850 = vmax.f32 %v771, 0.0
        %v851 = vmax.f32 %v774, 0.0
        %v852 = vmax.f32 %v776, 0.0
        %v853 = vmax.f32 %v779, 0.0
        %v854 = vmax.f32 %v781, 0.0
        %v855 = vmax.f32 %v784, 0.0
        %v856 = vmax.f32 %v786, 0.0
        %v857 = vmax.f32 %v789, 0.0
        %v858 = vmax.f32 %v791, 0.0
        %v859 = vmax.f32 %v794, 0.0
        %v860 = vmax.f32 %v796, 0.0
        %v861 = vmax.f32 %v799, 0.0
        %v862 = vmax.f32 %v801, 0.0
        %v863 = vmax.f32 %v804, 0.0
        %v864 = vmax.f32 %v806, 0.0
        %v865 = vmax.f32 %v809, 0.0
        %v866 = vmax.f32 %v811, 0.0
        %v867 = vmax.f32 %v814, 0.0
        %v868 = vmax.f32 %v816, 0.0
        %v869 = vmax.f32 %v819, 0.0
        %v870 = vmax.f32 %v821, 0.0
        %v871 = vmax.f32 %v824, 0.0
        %v872 = vmax.f32 %v826, 0.0
        %v873 = vmax.f32 %v829, 0.0
        %v874 = vmax.f32 %v831, 0.0
        %v875 = vmax.f32 %v834, 0.0
        %v876 = vmax.f32 %v836, 0.0
        %v877 = vmax.f32 %v839, 0.0
        %v878 = vmax.f32 %v841, 0.0
        %v879 = vpack.c.bf16 %v843, %v843
        %v880 = vpack.c.bf16 %v844, %v844
        %v881 = vpack.c.bf16 %v845, %v845
        %v882 = vpack.c.bf16 %v846, %v846
        %v883 = vpack.c.bf16 %v847, %v847
        %v884 = vpack.c.bf16 %v848, %v848
        %v885 = vpack.c.bf16 %v849, %v849
        %v886 = vpack.c.bf16 %v850, %v850
        %v887 = vpack.c.bf16 %v851, %v851
        %v888 = vpack.c.bf16 %v852, %v852
        %v889 = vpack.c.bf16 %v853, %v853
        %v890 = vpack.c.bf16 %v854, %v854
        %v891 = vpack.c.bf16 %v855, %v855
        %v892 = vpack.c.bf16 %v856, %v856
        %v893 = vpack.c.bf16 %v857, %v857
        %v894 = vpack.c.bf16 %v858, %v858
        %v895 = vpack.c.bf16 %v859, %v859
        %v896 = vpack.c.bf16 %v860, %v860
        %v897 = vpack.c.bf16 %v861, %v861
        %v898 = vpack.c.bf16 %v862, %v862
        %v899 = vpack.c.bf16 %v863, %v863
        %v900 = vpack.c.bf16 %v864, %v864
        %v901 = vpack.c.bf16 %v865, %v865
        %v902 = vpack.c.bf16 %v866, %v866
        %v903 = vpack.c.bf16 %v867, %v867
        %v904 = vpack.c.bf16 %v868, %v868
        %v905 = vpack.c.bf16 %v869, %v869
        %v906 = vpack.c.bf16 %v870, %v870
        %v907 = vpack.c.bf16 %v871, %v871
        %v908 = vpack.c.bf16 %v872, %v872
        %v909 = vpack.c.bf16 %v873, %v873
        %v910 = vpack.c.bf16 %v874, %v874
        %v911 = vpack.c.bf16 %v875, %v875
        %v912 = vpack.c.bf16 %v876, %v876
        %v913 = vpack.c.bf16 %v877, %v877
        %v914 = vpack.c.bf16 %v878, %v878
        %vm915 = vcmask 253952
        %vm916 = vsmask.f32 256
        %vm917 = vmand %vm915, %vm916
        %v918 = vld [vmem:[#allocation2] sm:$0x1]
        %v919 = vsel %vm917, 0, %v918
        %920 = vst [vmem:[#allocation2] sm:$0x1] %v919
        %v921 = vld [vmem:[#allocation2 + $0xc] sm:$0x1]
        %v922 = vsel %vm917, 0, %v921
        %923 = vst [vmem:[#allocation2 + $0xc] sm:$0x1] %v922
        %v924 = vld [vmem:[#allocation2 + $0x18] sm:$0x1]
        %v925 = vsel %vm917, 0, %v924
        %926 = vst [vmem:[#allocation2 + $0x18] sm:$0x1] %v925
        %v927 = vld [vmem:[#allocation2 + $0x24] sm:$0x1]
        %v928 = vsel %vm917, 0, %v927
        %929 = vst [vmem:[#allocation2 + $0x24] sm:$0x1] %v928
        %v930 = vld [vmem:[#allocation2 + $0x30] sm:$0x1]
        %v931 = vsel %vm917, 0, %v930
        %932 = vst [vmem:[#allocation2 + $0x30] sm:$0x1] %v931
        %v933 = vld [vmem:[#allocation2 + $0x3c] sm:$0x1]
        %v934 = vsel %vm917, 0, %v933
        %935 = vst [vmem:[#allocation2 + $0x3c] sm:$0x1] %v934
        %v936 = vld [vmem:[#allocation2 + $0x48] sm:$0x1]
        %v937 = vsel %vm917, 0, %v936
        %938 = vst [vmem:[#allocation2 + $0x48] sm:$0x1] %v937
        %v939 = vld [vmem:[#allocation2 + $0x54] sm:$0x1]
        %v940 = vsel %vm917, 0, %v939
        %941 = vst [vmem:[#allocation2 + $0x54] sm:$0x1] %v940
        %v942 = vld [vmem:[#allocation2 + $0x60] sm:$0x1]
        %v943 = vsel %vm917, 0, %v942
        %944 = vst [vmem:[#allocation2 + $0x60] sm:$0x1] %v943
        %v945 = vld [vmem:[#allocation2 + $0x6c] sm:$0x1]
        %v946 = vsel %vm917, 0, %v945
        %947 = vst [vmem:[#allocation2 + $0x6c] sm:$0x1] %v946
        %v948 = vld [vmem:[#allocation2 + $0x78] sm:$0x1]
        %v949 = vsel %vm917, 0, %v948
        %950 = vst [vmem:[#allocation2 + $0x78] sm:$0x1] %v949
        %v951 = vld [vmem:[#allocation2 + $0x84] sm:$0x1]
        %v952 = vsel %vm917, 0, %v951
        %953 = vst [vmem:[#allocation2 + $0x84] sm:$0x1] %v952
        %v954 = vld [vmem:[#allocation2 + $0x90] sm:$0x1]
        %v955 = vsel %vm917, 0, %v954
        %956 = vst [vmem:[#allocation2 + $0x90] sm:$0x1] %v955
        %v957 = vld [vmem:[#allocation2 + $0x9c] sm:$0x1]
        %v958 = vsel %vm917, 0, %v957
        %959 = vst [vmem:[#allocation2 + $0x9c] sm:$0x1] %v958
        %v960 = vld [vmem:[#allocation2 + $0xa8] sm:$0x1]
        %v961 = vsel %vm917, 0, %v960
        %962 = vst [vmem:[#allocation2 + $0xa8] sm:$0x1] %v961
        %v963 = vld [vmem:[#allocation2 + $0xb4] sm:$0x1]
        %v964 = vsel %vm917, 0, %v963
        %965 = vst [vmem:[#allocation2 + $0xb4] sm:$0x1] %v964
        %v966 = vld [vmem:[#allocation2 + $0xc0] sm:$0x1]
        %v967 = vsel %vm917, 0, %v966
        %968 = vst [vmem:[#allocation2 + $0xc0] sm:$0x1] %v967
        %v969 = vld [vmem:[#allocation2 + $0xcc] sm:$0x1]
        %v970 = vsel %vm917, 0, %v969
        %971 = vst [vmem:[#allocation2 + $0xcc] sm:$0x1] %v970
        %vm972 = vsmask.f32 7938
        %vm973 = vmand %vm915, %vm972
        %v974 = vld [vmem:[#allocation2 + $0x8] sm:$0x1]
        %v975 = vsel %vm973, 0, %v974
        %976 = vst [vmem:[#allocation2 + $0x8] sm:$0x1] %v975
        %v977 = vld [vmem:[#allocation2 + $0x14] sm:$0x1]
        %v978 = vsel %vm973, 0, %v977
        %979 = vst [vmem:[#allocation2 + $0x14] sm:$0x1] %v978
        %v980 = vld [vmem:[#allocation2 + $0x20] sm:$0x1]
        %v981 = vsel %vm973, 0, %v980
        %982 = vst [vmem:[#allocation2 + $0x20] sm:$0x1] %v981
        %v983 = vld [vmem:[#allocation2 + $0x2c] sm:$0x1]
        %v984 = vsel %vm973, 0, %v983
        %985 = vst [vmem:[#allocation2 + $0x2c] sm:$0x1] %v984
        %v986 = vld [vmem:[#allocation2 + $0x38] sm:$0x1]
        %v987 = vsel %vm973, 0, %v986
        %988 = vst [vmem:[#allocation2 + $0x38] sm:$0x1] %v987
        %v989 = vld [vmem:[#allocation2 + $0x44] sm:$0x1]
        %v990 = vsel %vm973, 0, %v989
        %991 = vst [vmem:[#allocation2 + $0x44] sm:$0x1] %v990
        %v992 = vld [vmem:[#allocation2 + $0x50] sm:$0x1]
        %v993 = vsel %vm973, 0, %v992
        %994 = vst [vmem:[#allocation2 + $0x50] sm:$0x1] %v993
        %v995 = vld [vmem:[#allocation2 + $0x5c] sm:$0x1]
        %v996 = vsel %vm973, 0, %v995
        %997 = vst [vmem:[#allocation2 + $0x5c] sm:$0x1] %v996
        %v998 = vld [vmem:[#allocation2 + $0x68] sm:$0x1]
        %v999 = vsel %vm973, 0, %v998
        %1000 = vst [vmem:[#allocation2 + $0x68] sm:$0x1] %v999
        %v1001 = vld [vmem:[#allocation2 + $0x74] sm:$0x1]
        %v1002 = vsel %vm973, 0, %v1001
        %1003 = vst [vmem:[#allocation2 + $0x74] sm:$0x1] %v1002
        %v1004 = vld [vmem:[#allocation2 + $0x80] sm:$0x1]
        %v1005 = vsel %vm973, 0, %v1004
        %1006 = vst [vmem:[#allocation2 + $0x80] sm:$0x1] %v1005
        %v1007 = vld [vmem:[#allocation2 + $0x8c] sm:$0x1]
        %v1008 = vsel %vm973, 0, %v1007
        %1009 = vst [vmem:[#allocation2 + $0x8c] sm:$0x1] %v1008
        %v1010 = vld [vmem:[#allocation2 + $0x98] sm:$0x1]
        %v1011 = vsel %vm973, 0, %v1010
        %1012 = vst [vmem:[#allocation2 + $0x98] sm:$0x1] %v1011
        %v1013 = vld [vmem:[#allocation2 + $0xa4] sm:$0x1]
        %v1014 = vsel %vm973, 0, %v1013
        %1015 = vst [vmem:[#allocation2 + $0xa4] sm:$0x1] %v1014
        %v1016 = vld [vmem:[#allocation2 + $0xb0] sm:$0x1]
        %v1017 = vsel %vm973, 0, %v1016
        %1018 = vst [vmem:[#allocation2 + $0xb0] sm:$0x1] %v1017
        %v1019 = vld [vmem:[#allocation2 + $0xbc] sm:$0x1]
        %v1020 = vsel %vm973, 0, %v1019
        %1021 = vst [vmem:[#allocation2 + $0xbc] sm:$0x1] %v1020
        %v1022 = vld [vmem:[#allocation2 + $0xc8] sm:$0x1]
        %v1023 = vsel %vm973, 0, %v1022
        %1024 = vst [vmem:[#allocation2 + $0xc8] sm:$0x1] %v1023
        %v1025 = vld [vmem:[#allocation2 + $0xd4] sm:$0x1]
        %v1026 = vsel %vm973, 0, %v1025
        %1027 = vst [vmem:[#allocation2 + $0xd4] sm:$0x1] %v1026
        %vm1028 = vsmask.f32 4368
        %vm1029 = vmor %vm916, %vm1028
        %v1031 = vshrl.u32 %v879, 16
        %v1033 = vrot.slane %v1031, 7
        %v1034 = vshll.u32 %v879, 16
        %v1036 = vor.u32 %v1033, %v1034
        %v1037 = vrot.slane %v1033, 4
        %v1039 = vshrl.u32 %v880, 16
        %v1041 = vrot.slane %v1039, 7
        %v1042 = vshll.u32 %v880, 16
        %v1044 = vor.u32 %v1041, %v1042
        %v1045 = vsel %vm1029, %v1037, %v1044
        %v1046 = vrot.slane %v1041, 4
        %v1048 = vshrl.u32 %v881, 16
        %v1050 = vrot.slane %v1048, 7
        %v1051 = vshll.u32 %v881, 16
        %v1053 = vor.u32 %v1050, %v1051
        %v1054 = vrot.slane %v1050, 4
        %v1056 = vshrl.u32 %v882, 16
        %v1058 = vrot.slane %v1056, 7
        %v1059 = vshll.u32 %v882, 16
        %v1061 = vor.u32 %v1058, %v1059
        %v1062 = vsel %vm1029, %v1054, %v1061
        %v1063 = vrot.slane %v1058, 4
        %v1065 = vshrl.u32 %v883, 16
        %v1067 = vrot.slane %v1065, 7
        %v1068 = vshll.u32 %v883, 16
        %v1070 = vor.u32 %v1067, %v1068
        %v1071 = vrot.slane %v1067, 4
        %v1073 = vshrl.u32 %v884, 16
        %v1075 = vrot.slane %v1073, 7
        %v1076 = vshll.u32 %v884, 16
        %v1078 = vor.u32 %v1075, %v1076
        %v1079 = vsel %vm1029, %v1071, %v1078
        %v1080 = vrot.slane %v1075, 4
        %v1082 = vshrl.u32 %v885, 16
        %v1084 = vrot.slane %v1082, 7
        %v1085 = vshll.u32 %v885, 16
        %v1087 = vor.u32 %v1084, %v1085
        %v1088 = vrot.slane %v1084, 4
        %v1090 = vshrl.u32 %v886, 16
        %v1092 = vrot.slane %v1090, 7
        %v1093 = vshll.u32 %v886, 16
        %v1095 = vor.u32 %v1092, %v1093
        %v1096 = vsel %vm1029, %v1088, %v1095
        %v1097 = vrot.slane %v1092, 4
        %v1099 = vshrl.u32 %v887, 16
        %v1101 = vrot.slane %v1099, 7
        %v1102 = vshll.u32 %v887, 16
        %v1104 = vor.u32 %v1101, %v1102
        %v1105 = vrot.slane %v1101, 4
        %v1107 = vshrl.u32 %v888, 16
        %v1109 = vrot.slane %v1107, 7
        %v1110 = vshll.u32 %v888, 16
        %v1112 = vor.u32 %v1109, %v1110
        %v1113 = vsel %vm1029, %v1105, %v1112
        %v1114 = vrot.slane %v1109, 4
        %v1116 = vshrl.u32 %v889, 16
        %v1118 = vrot.slane %v1116, 7
        %v1119 = vshll.u32 %v889, 16
        %v1121 = vor.u32 %v1118, %v1119
        %v1122 = vrot.slane %v1118, 4
        %v1124 = vshrl.u32 %v890, 16
        %v1126 = vrot.slane %v1124, 7
        %v1127 = vshll.u32 %v890, 16
        %v1129 = vor.u32 %v1126, %v1127
        %v1130 = vsel %vm1029, %v1122, %v1129
        %v1131 = vrot.slane %v1126, 4
        %v1133 = vshrl.u32 %v891, 16
        %v1135 = vrot.slane %v1133, 7
        %v1136 = vshll.u32 %v891, 16
        %v1138 = vor.u32 %v1135, %v1136
        %v1139 = vrot.slane %v1135, 4
        %v1141 = vshrl.u32 %v892, 16
        %v1143 = vrot.slane %v1141, 7
        %v1144 = vshll.u32 %v892, 16
        %v1146 = vor.u32 %v1143, %v1144
        %v1147 = vsel %vm1029, %v1139, %v1146
        %v1148 = vrot.slane %v1143, 4
        %v1150 = vshrl.u32 %v893, 16
        %v1152 = vrot.slane %v1150, 7
        %v1153 = vshll.u32 %v893, 16
        %v1155 = vor.u32 %v1152, %v1153
        %v1156 = vrot.slane %v1152, 4
        %v1158 = vshrl.u32 %v894, 16
        %v1160 = vrot.slane %v1158, 7
        %v1161 = vshll.u32 %v894, 16
        %v1163 = vor.u32 %v1160, %v1161
        %v1164 = vsel %vm1029, %v1156, %v1163
        %v1165 = vrot.slane %v1160, 4
        %v1167 = vshrl.u32 %v895, 16
        %v1169 = vrot.slane %v1167, 7
        %v1170 = vshll.u32 %v895, 16
        %v1172 = vor.u32 %v1169, %v1170
        %v1173 = vrot.slane %v1169, 4
        %v1175 = vshrl.u32 %v896, 16
        %v1177 = vrot.slane %v1175, 7
        %v1178 = vshll.u32 %v896, 16
        %v1180 = vor.u32 %v1177, %v1178
        %v1181 = vsel %vm1029, %v1173, %v1180
        %v1182 = vrot.slane %v1177, 4
        %v1184 = vshrl.u32 %v897, 16
        %v1186 = vrot.slane %v1184, 7
        %v1187 = vshll.u32 %v897, 16
        %v1189 = vor.u32 %v1186, %v1187
        %v1190 = vrot.slane %v1186, 4
        %v1192 = vshrl.u32 %v898, 16
        %v1194 = vrot.slane %v1192, 7
        %v1195 = vshll.u32 %v898, 16
        %v1197 = vor.u32 %v1194, %v1195
        %v1198 = vsel %vm1029, %v1190, %v1197
        %v1199 = vrot.slane %v1194, 4
        %v1201 = vshrl.u32 %v899, 16
        %v1203 = vrot.slane %v1201, 7
        %v1204 = vshll.u32 %v899, 16
        %v1206 = vor.u32 %v1203, %v1204
        %v1207 = vrot.slane %v1203, 4
        %v1209 = vshrl.u32 %v900, 16
        %v1211 = vrot.slane %v1209, 7
        %v1212 = vshll.u32 %v900, 16
        %v1214 = vor.u32 %v1211, %v1212
        %v1215 = vsel %vm1029, %v1207, %v1214
        %v1216 = vrot.slane %v1211, 4
        %v1218 = vshrl.u32 %v901, 16
        %v1220 = vrot.slane %v1218, 7
        %v1221 = vshll.u32 %v901, 16
        %v1223 = vor.u32 %v1220, %v1221
        %v1224 = vrot.slane %v1220, 4
        %v1226 = vshrl.u32 %v902, 16
        %v1228 = vrot.slane %v1226, 7
        %v1229 = vshll.u32 %v902, 16
        %v1231 = vor.u32 %v1228, %v1229
        %v1232 = vsel %vm1029, %v1224, %v1231
        %v1233 = vrot.slane %v1228, 4
        %v1235 = vshrl.u32 %v903, 16
        %v1237 = vrot.slane %v1235, 7
        %v1238 = vshll.u32 %v903, 16
        %v1240 = vor.u32 %v1237, %v1238
        %v1241 = vrot.slane %v1237, 4
        %v1243 = vshrl.u32 %v904, 16
        %v1245 = vrot.slane %v1243, 7
        %v1246 = vshll.u32 %v904, 16
        %v1248 = vor.u32 %v1245, %v1246
        %v1249 = vsel %vm1029, %v1241, %v1248
        %v1250 = vrot.slane %v1245, 4
        %v1252 = vshrl.u32 %v905, 16
        %v1254 = vrot.slane %v1252, 7
        %v1255 = vshll.u32 %v905, 16
        %v1257 = vor.u32 %v1254, %v1255
        %v1258 = vrot.slane %v1254, 4
        %v1260 = vshrl.u32 %v906, 16
        %v1262 = vrot.slane %v1260, 7
        %v1263 = vshll.u32 %v906, 16
        %v1265 = vor.u32 %v1262, %v1263
        %v1266 = vsel %vm1029, %v1258, %v1265
        %v1267 = vrot.slane %v1262, 4
        %v1269 = vshrl.u32 %v907, 16
        %v1271 = vrot.slane %v1269, 7
        %v1272 = vshll.u32 %v907, 16
        %v1274 = vor.u32 %v1271, %v1272
        %v1275 = vrot.slane %v1271, 4
        %v1277 = vshrl.u32 %v908, 16
        %v1279 = vrot.slane %v1277, 7
        %v1280 = vshll.u32 %v908, 16
        %v1282 = vor.u32 %v1279, %v1280
        %v1283 = vsel %vm1029, %v1275, %v1282
        %v1284 = vrot.slane %v1279, 4
        %v1286 = vshrl.u32 %v909, 16
        %v1288 = vrot.slane %v1286, 7
        %v1289 = vshll.u32 %v909, 16
        %v1291 = vor.u32 %v1288, %v1289
        %v1292 = vrot.slane %v1288, 4
        %v1294 = vshrl.u32 %v910, 16
        %v1296 = vrot.slane %v1294, 7
        %v1297 = vshll.u32 %v910, 16
        %v1299 = vor.u32 %v1296, %v1297
        %v1300 = vsel %vm1029, %v1292, %v1299
        %v1301 = vrot.slane %v1296, 4
        %v1303 = vshrl.u32 %v911, 16
        %v1305 = vrot.slane %v1303, 7
        %v1306 = vshll.u32 %v911, 16
        %v1308 = vor.u32 %v1305, %v1306
        %v1309 = vrot.slane %v1305, 4
        %v1311 = vshrl.u32 %v912, 16
        %v1313 = vrot.slane %v1311, 7
        %v1314 = vshll.u32 %v912, 16
        %v1316 = vor.u32 %v1313, %v1314
        %v1317 = vsel %vm1029, %v1309, %v1316
        %v1318 = vrot.slane %v1313, 4
        %v1320 = vshrl.u32 %v913, 16
        %v1322 = vrot.slane %v1320, 7
        %v1323 = vshll.u32 %v913, 16
        %v1325 = vor.u32 %v1322, %v1323
        %v1326 = vrot.slane %v1322, 4
        %v1328 = vshrl.u32 %v914, 16
        %v1330 = vrot.slane %v1328, 7
        %v1331 = vshll.u32 %v914, 16
        %v1333 = vor.u32 %v1330, %v1331
        %v1334 = vsel %vm1029, %v1326, %v1333
        %v1335 = vrot.slane %v1330, 4
        %vm1390 = vcmask 257024
        %vm1391 = vmand %vm1390, %vm972
        %v1392 = vld [vmem:[#allocation2] sm:$0xf]
        %v1393 = vsel %vm1391, %v1036, %v1392
        %1394 = vst [vmem:[#allocation2] sm:$0xf] %v1393
        %vm1395 = vcmask 257024
        %1396 = vst.msk [vmem:[#allocation2 + $0x4] sm:$0xf] %vm1395, %v1045
        %v1397 = vld [vmem:[#allocation2 + $0x8] sm:$0x1]
        %v1398 = vsel %vm917, %v1046, %v1397
        %1399 = vst [vmem:[#allocation2 + $0x8] sm:$0x1] %v1398
        %v1400 = vld [vmem:[#allocation2 + $0xc] sm:$0xf]
        %v1401 = vsel %vm1391, %v1053, %v1400
        %1402 = vst [vmem:[#allocation2 + $0xc] sm:$0xf] %v1401
        %1403 = vst.msk [vmem:[#allocation2 + $0x10] sm:$0xf] %vm1395, %v1062
        %v1404 = vld [vmem:[#allocation2 + $0x14] sm:$0x1]
        %v1405 = vsel %vm917, %v1063, %v1404
        %1406 = vst [vmem:[#allocation2 + $0x14] sm:$0x1] %v1405
        %v1407 = vld [vmem:[#allocation2 + $0x18] sm:$0xf]
        %v1408 = vsel %vm1391, %v1070, %v1407
        %1409 = vst [vmem:[#allocation2 + $0x18] sm:$0xf] %v1408
        %1410 = vst.msk [vmem:[#allocation2 + $0x1c] sm:$0xf] %vm1395, %v1079
        %v1411 = vld [vmem:[#allocation2 + $0x20] sm:$0x1]
        %v1412 = vsel %vm917, %v1080, %v1411
        %1413 = vst [vmem:[#allocation2 + $0x20] sm:$0x1] %v1412
        %v1414 = vld [vmem:[#allocation2 + $0x24] sm:$0xf]
        %v1415 = vsel %vm1391, %v1087, %v1414
        %1416 = vst [vmem:[#allocation2 + $0x24] sm:$0xf] %v1415
        %1417 = vst.msk [vmem:[#allocation2 + $0x28] sm:$0xf] %vm1395, %v1096
        %v1418 = vld [vmem:[#allocation2 + $0x2c] sm:$0x1]
        %v1419 = vsel %vm917, %v1097, %v1418
        %1420 = vst [vmem:[#allocation2 + $0x2c] sm:$0x1] %v1419
        %v1421 = vld [vmem:[#allocation2 + $0x30] sm:$0xf]
        %v1422 = vsel %vm1391, %v1104, %v1421
        %1423 = vst [vmem:[#allocation2 + $0x30] sm:$0xf] %v1422
        %1424 = vst.msk [vmem:[#allocation2 + $0x34] sm:$0xf] %vm1395, %v1113
        %v1425 = vld [vmem:[#allocation2 + $0x38] sm:$0x1]
        %v1426 = vsel %vm917, %v1114, %v1425
        %1427 = vst [vmem:[#allocation2 + $0x38] sm:$0x1] %v1426
        %v1428 = vld [vmem:[#allocation2 + $0x3c] sm:$0xf]
        %v1429 = vsel %vm1391, %v1121, %v1428
        %1430 = vst [vmem:[#allocation2 + $0x3c] sm:$0xf] %v1429
        %1431 = vst.msk [vmem:[#allocation2 + $0x40] sm:$0xf] %vm1395, %v1130
        %v1432 = vld [vmem:[#allocation2 + $0x44] sm:$0x1]
        %v1433 = vsel %vm917, %v1131, %v1432
        %1434 = vst [vmem:[#allocation2 + $0x44] sm:$0x1] %v1433
        %v1435 = vld [vmem:[#allocation2 + $0x48] sm:$0xf]
        %v1436 = vsel %vm1391, %v1138, %v1435
        %1437 = vst [vmem:[#allocation2 + $0x48] sm:$0xf] %v1436
        %1438 = vst.msk [vmem:[#allocation2 + $0x4c] sm:$0xf] %vm1395, %v1147
        %v1439 = vld [vmem:[#allocation2 + $0x50] sm:$0x1]
        %v1440 = vsel %vm917, %v1148, %v1439
        %1441 = vst [vmem:[#allocation2 + $0x50] sm:$0x1] %v1440
        %v1442 = vld [vmem:[#allocation2 + $0x54] sm:$0xf]
        %v1443 = vsel %vm1391, %v1155, %v1442
        %1444 = vst [vmem:[#allocation2 + $0x54] sm:$0xf] %v1443
        %1445 = vst.msk [vmem:[#allocation2 + $0x58] sm:$0xf] %vm1395, %v1164
        %v1446 = vld [vmem:[#allocation2 + $0x5c] sm:$0x1]
        %v1447 = vsel %vm917, %v1165, %v1446
        %1448 = vst [vmem:[#allocation2 + $0x5c] sm:$0x1] %v1447
        %v1449 = vld [vmem:[#allocation2 + $0x60] sm:$0xf]
        %v1450 = vsel %vm1391, %v1172, %v1449
        %1451 = vst [vmem:[#allocation2 + $0x60] sm:$0xf] %v1450
        %1452 = vst.msk [vmem:[#allocation2 + $0x64] sm:$0xf] %vm1395, %v1181
        %v1453 = vld [vmem:[#allocation2 + $0x68] sm:$0x1]
        %v1454 = vsel %vm917, %v1182, %v1453
        %1455 = vst [vmem:[#allocation2 + $0x68] sm:$0x1] %v1454
        %v1456 = vld [vmem:[#allocation2 + $0x6c] sm:$0xf]
        %v1457 = vsel %vm1391, %v1189, %v1456
        %1458 = vst [vmem:[#allocation2 + $0x6c] sm:$0xf] %v1457
        %1459 = vst.msk [vmem:[#allocation2 + $0x70] sm:$0xf] %vm1395, %v1198
        %v1460 = vld [vmem:[#allocation2 + $0x74] sm:$0x1]
        %v1461 = vsel %vm917, %v1199, %v1460
        %1462 = vst [vmem:[#allocation2 + $0x74] sm:$0x1] %v1461
        %v1463 = vld [vmem:[#allocation2 + $0x78] sm:$0xf]
        %v1464 = vsel %vm1391, %v1206, %v1463
        %1465 = vst [vmem:[#allocation2 + $0x78] sm:$0xf] %v1464
        %1466 = vst.msk [vmem:[#allocation2 + $0x7c] sm:$0xf] %vm1395, %v1215
        %v1467 = vld [vmem:[#allocation2 + $0x80] sm:$0x1]
        %v1468 = vsel %vm917, %v1216, %v1467
        %1469 = vst [vmem:[#allocation2 + $0x80] sm:$0x1] %v1468
        %v1470 = vld [vmem:[#allocation2 + $0x84] sm:$0xf]
        %v1471 = vsel %vm1391, %v1223, %v1470
        %1472 = vst [vmem:[#allocation2 + $0x84] sm:$0xf] %v1471
        %1473 = vst.msk [vmem:[#allocation2 + $0x88] sm:$0xf] %vm1395, %v1232
        %v1474 = vld [vmem:[#allocation2 + $0x8c] sm:$0x1]
        %v1475 = vsel %vm917, %v1233, %v1474
        %1476 = vst [vmem:[#allocation2 + $0x8c] sm:$0x1] %v1475
        %v1477 = vld [vmem:[#allocation2 + $0x90] sm:$0xf]
        %v1478 = vsel %vm1391, %v1240, %v1477
        %1479 = vst [vmem:[#allocation2 + $0x90] sm:$0xf] %v1478
        %1480 = vst.msk [vmem:[#allocation2 + $0x94] sm:$0xf] %vm1395, %v1249
        %v1481 = vld [vmem:[#allocation2 + $0x98] sm:$0x1]
        %v1482 = vsel %vm917, %v1250, %v1481
        %1483 = vst [vmem:[#allocation2 + $0x98] sm:$0x1] %v1482
        %v1484 = vld [vmem:[#allocation2 + $0x9c] sm:$0xf]
        %v1485 = vsel %vm1391, %v1257, %v1484
        %1486 = vst [vmem:[#allocation2 + $0x9c] sm:$0xf] %v1485
        %1487 = vst.msk [vmem:[#allocation2 + $0xa0] sm:$0xf] %vm1395, %v1266
        %v1488 = vld [vmem:[#allocation2 + $0xa4] sm:$0x1]
        %v1489 = vsel %vm917, %v1267, %v1488
        %1490 = vst [vmem:[#allocation2 + $0xa4] sm:$0x1] %v1489
        %v1491 = vld [vmem:[#allocation2 + $0xa8] sm:$0xf]
        %v1492 = vsel %vm1391, %v1274, %v1491
        %1493 = vst [vmem:[#allocation2 + $0xa8] sm:$0xf] %v1492
        %1494 = vst.msk [vmem:[#allocation2 + $0xac] sm:$0xf] %vm1395, %v1283
        %v1495 = vld [vmem:[#allocation2 + $0xb0] sm:$0x1]
        %v1496 = vsel %vm917, %v1284, %v1495
        %1497 = vst [vmem:[#allocation2 + $0xb0] sm:$0x1] %v1496
        %v1498 = vld [vmem:[#allocation2 + $0xb4] sm:$0xf]
        %v1499 = vsel %vm1391, %v1291, %v1498
        %1500 = vst [vmem:[#allocation2 + $0xb4] sm:$0xf] %v1499
        %1501 = vst.msk [vmem:[#allocation2 + $0xb8] sm:$0xf] %vm1395, %v1300
        %v1502 = vld [vmem:[#allocation2 + $0xbc] sm:$0x1]
        %v1503 = vsel %vm917, %v1301, %v1502
        %1504 = vst [vmem:[#allocation2 + $0xbc] sm:$0x1] %v1503
        %v1505 = vld [vmem:[#allocation2 + $0xc0] sm:$0xf]
        %v1506 = vsel %vm1391, %v1308, %v1505
        %1507 = vst [vmem:[#allocation2 + $0xc0] sm:$0xf] %v1506
        %1508 = vst.msk [vmem:[#allocation2 + $0xc4] sm:$0xf] %vm1395, %v1317
        %v1509 = vld [vmem:[#allocation2 + $0xc8] sm:$0x1]
        %v1510 = vsel %vm917, %v1318, %v1509
        %1511 = vst [vmem:[#allocation2 + $0xc8] sm:$0x1] %v1510
        %v1512 = vld [vmem:[#allocation2 + $0xcc] sm:$0xf]
        %v1513 = vsel %vm1391, %v1325, %v1512
        %1514 = vst [vmem:[#allocation2 + $0xcc] sm:$0xf] %v1513
        %1515 = vst.msk [vmem:[#allocation2 + $0xd0] sm:$0xf] %vm1395, %v1334
        %v1516 = vld [vmem:[#allocation2 + $0xd4] sm:$0x1]
        %v1517 = vsel %vm917, %v1335, %v1516
        %1518 = vst [vmem:[#allocation2 + $0xd4] sm:$0x1] %v1517
        %p1519 = scmp.eq.s32.totalorder %s34, 0
        // Predicated region
        $region69: #{tpu_custom_call.1} parent=55 // pred_check
          %p1520 = pneg %p1519
        $region70: #{tpu_custom_call.1} parent=55 // pred_check_branch
          %1522 = sbr.rel (%p1520) target = $region72
        $region71: #{tpu_custom_call.1} parent=55 // pred_region
          %1523 = vst.msk [vmem:[#allocation2] sm:$0xf] %vm1395, 0
          %1524 = vst.msk [vmem:[#allocation2 + $0x4] sm:$0xf] %vm1395, 0
          %vm1525 = vcmask 253952
          %1526 = vst.msk [vmem:[#allocation2 + $0x8] sm:$0x1] %vm1525, 0
          %s1527 = scalar_lea.vmem [#allocation2], 204
          %1528 = vst.msk [vmem:[%s1527] sm:$0xf] %vm1395, 0
          %1529 = vst.msk [vmem:[%s1527 + $0x4] sm:$0xf] %vm1395, 0
          %1530 = vst.msk [vmem:[%s1527 + $0x8] sm:$0x1] %vm1525, 0
        $region72: #{tpu_custom_call.1} parent=55 // pred_fallthru
          _
        %v1531 = vld [vmem:[#allocation2] sm:$0xf]
        %v1532 = vld [vmem:[#allocation2 + $0x4] sm:$0xf]
        %v1533 = vld [vmem:[#allocation2 + $0xc] sm:$0xf]
        %v1534 = vld [vmem:[#allocation2 + $0x10] sm:$0xf]
        %v1535 = vld [vmem:[#allocation2 + $0x18] sm:$0xf]
        %v1536 = vld [vmem:[#allocation2 + $0x1c] sm:$0xf]
        %v1537 = vld [vmem:[#allocation2 + $0x24] sm:$0xf]
        %v1538 = vld [vmem:[#allocation2 + $0x28] sm:$0xf]
        %v1539 = vld [vmem:[#allocation2 + $0x30] sm:$0xf]
        %v1540 = vld [vmem:[#allocation2 + $0x34] sm:$0xf]
        %v1541 = vld [vmem:[#allocation2 + $0x3c] sm:$0xf]
        %v1542 = vld [vmem:[#allocation2 + $0x40] sm:$0xf]
        %v1543 = vld [vmem:[#allocation2 + $0x48] sm:$0xf]
        %v1544 = vld [vmem:[#allocation2 + $0x4c] sm:$0xf]
        %v1545 = vld [vmem:[#allocation2 + $0x54] sm:$0xf]
        %v1546 = vld [vmem:[#allocation2 + $0x58] sm:$0xf]
        %v1547 = vld [vmem:[#allocation2 + $0x60] sm:$0xf]
        %v1548 = vld [vmem:[#allocation2 + $0x64] sm:$0xf]
        %v1549 = vld [vmem:[#allocation2 + $0x6c] sm:$0xf]
        %v1550 = vld [vmem:[#allocation2 + $0x70] sm:$0xf]
        %v1551 = vld [vmem:[#allocation2 + $0x78] sm:$0xf]
        %v1552 = vld [vmem:[#allocation2 + $0x7c] sm:$0xf]
        %v1553 = vld [vmem:[#allocation2 + $0x84] sm:$0xf]
        %v1554 = vld [vmem:[#allocation2 + $0x88] sm:$0xf]
        %v1555 = vld [vmem:[#allocation2 + $0x90] sm:$0xf]
        %v1556 = vld [vmem:[#allocation2 + $0x94] sm:$0xf]
        %v1557 = vld [vmem:[#allocation2 + $0x9c] sm:$0xf]
        %v1558 = vld [vmem:[#allocation2 + $0xa0] sm:$0xf]
        %v1559 = vld [vmem:[#allocation2 + $0xa8] sm:$0xf]
        %v1560 = vld [vmem:[#allocation2 + $0xac] sm:$0xf]
        %v1561 = vld [vmem:[#allocation2 + $0xb4] sm:$0xf]
        %v1562 = vld [vmem:[#allocation2 + $0xb8] sm:$0xf]
        %1563 = vst.msk [vmem:[#allocation3] sm:$0xf] %vm1395, %v1531
        %1564 = vst.msk [vmem:[#allocation3 + $0xc] sm:$0xf] %vm1395, %v1532
        %1565 = vst.msk [vmem:[#allocation3 + $0x18] sm:$0xf] %vm1395, %v1533
        %1566 = vst.msk [vmem:[#allocation3 + $0x24] sm:$0xf] %vm1395, %v1534
        %1567 = vst.msk [vmem:[#allocation3 + $0x30] sm:$0xf] %vm1395, %v1535
        %1568 = vst.msk [vmem:[#allocation3 + $0x3c] sm:$0xf] %vm1395, %v1536
        %1569 = vst.msk [vmem:[#allocation3 + $0x48] sm:$0xf] %vm1395, %v1537
        %1570 = vst.msk [vmem:[#allocation3 + $0x54] sm:$0xf] %vm1395, %v1538
        %1571 = vst.msk [vmem:[#allocation3 + $0x60] sm:$0xf] %vm1395, %v1539
        %1572 = vst.msk [vmem:[#allocation3 + $0x6c] sm:$0xf] %vm1395, %v1540
        %1573 = vst.msk [vmem:[#allocation3 + $0x78] sm:$0xf] %vm1395, %v1541
        %1574 = vst.msk [vmem:[#allocation3 + $0x84] sm:$0xf] %vm1395, %v1542
        %1575 = vst.msk [vmem:[#allocation3 + $0x90] sm:$0xf] %vm1395, %v1543
        %1576 = vst.msk [vmem:[#allocation3 + $0x9c] sm:$0xf] %vm1395, %v1544
        %1577 = vst.msk [vmem:[#allocation3 + $0xa8] sm:$0xf] %vm1395, %v1545
        %1578 = vst.msk [vmem:[#allocation3 + $0xb4] sm:$0xf] %vm1395, %v1546
        %1579 = vst.msk [vmem:[#allocation3 + $0xc0] sm:$0xf] %vm1395, %v1547
        %1580 = vst.msk [vmem:[#allocation3 + $0xcc] sm:$0xf] %vm1395, %v1548
        %1581 = vst.msk [vmem:[#allocation3 + $0xd8] sm:$0xf] %vm1395, %v1549
        %1582 = vst.msk [vmem:[#allocation3 + $0xe4] sm:$0xf] %vm1395, %v1550
        %1583 = vst.msk [vmem:[#allocation3 + $0xf0] sm:$0xf] %vm1395, %v1551
        %1584 = vst.msk [vmem:[#allocation3 + $0xfc] sm:$0xf] %vm1395, %v1552
        %1585 = vst.msk [vmem:[#allocation3 + $0x108] sm:$0xf] %vm1395, %v1553
        %1586 = vst.msk [vmem:[#allocation3 + $0x114] sm:$0xf] %vm1395, %v1554
        %1587 = vst.msk [vmem:[#allocation3 + $0x120] sm:$0xf] %vm1395, %v1555
        %1588 = vst.msk [vmem:[#allocation3 + $0x12c] sm:$0xf] %vm1395, %v1556
        %1589 = vst.msk [vmem:[#allocation3 + $0x138] sm:$0xf] %vm1395, %v1557
        %1590 = vst.msk [vmem:[#allocation3 + $0x144] sm:$0xf] %vm1395, %v1558
        %1591 = vst.msk [vmem:[#allocation3 + $0x150] sm:$0xf] %vm1395, %v1559
        %1592 = vst.msk [vmem:[#allocation3 + $0x15c] sm:$0xf] %vm1395, %v1560
        %1593 = vst.msk [vmem:[#allocation3 + $0x168] sm:$0xf] %vm1395, %v1561
        %1594 = vst.msk [vmem:[#allocation3 + $0x174] sm:$0xf] %vm1395, %v1562
        %v1595 = vld [vmem:[#allocation2] sm:$0xf]
        %v1596 = vld [vmem:[#allocation2 + $0x4] sm:$0xf]
        %v1597 = vld [vmem:[#allocation2 + $0x8] sm:$0x1]
        %v1598 = vld [vmem:[#allocation2 + $0xc] sm:$0xf]
        %v1599 = vld [vmem:[#allocation2 + $0x10] sm:$0xf]
        %v1600 = vld [vmem:[#allocation2 + $0x14] sm:$0x1]
        %v1601 = vld [vmem:[#allocation2 + $0x18] sm:$0xf]
        %v1602 = vld [vmem:[#allocation2 + $0x1c] sm:$0xf]
        %v1603 = vld [vmem:[#allocation2 + $0x20] sm:$0x1]
        %v1604 = vld [vmem:[#allocation2 + $0x24] sm:$0xf]
        %v1605 = vld [vmem:[#allocation2 + $0x28] sm:$0xf]
        %v1606 = vld [vmem:[#allocation2 + $0x2c] sm:$0x1]
        %v1607 = vld [vmem:[#allocation2 + $0x30] sm:$0xf]
        %v1608 = vld [vmem:[#allocation2 + $0x34] sm:$0xf]
        %v1609 = vld [vmem:[#allocation2 + $0x38] sm:$0x1]
        %v1610 = vld [vmem:[#allocation2 + $0x3c] sm:$0xf]
        %v1611 = vld [vmem:[#allocation2 + $0x40] sm:$0xf]
        %v1612 = vld [vmem:[#allocation2 + $0x44] sm:$0x1]
        %v1613 = vld [vmem:[#allocation2 + $0x48] sm:$0xf]
        %v1614 = vld [vmem:[#allocation2 + $0x4c] sm:$0xf]
        %v1615 = vld [vmem:[#allocation2 + $0x50] sm:$0x1]
        %v1616 = vld [vmem:[#allocation2 + $0x54] sm:$0xf]
        %v1617 = vld [vmem:[#allocation2 + $0x58] sm:$0xf]
        %v1618 = vld [vmem:[#allocation2 + $0x5c] sm:$0x1]
        %v1619 = vld [vmem:[#allocation2 + $0x60] sm:$0xf]
        %v1620 = vld [vmem:[#allocation2 + $0x64] sm:$0xf]
        %v1621 = vld [vmem:[#allocation2 + $0x68] sm:$0x1]
        %v1622 = vld [vmem:[#allocation2 + $0x6c] sm:$0xf]
        %v1623 = vld [vmem:[#allocation2 + $0x70] sm:$0xf]
        %v1624 = vld [vmem:[#allocation2 + $0x74] sm:$0x1]
        %v1625 = vld [vmem:[#allocation2 + $0x78] sm:$0xf]
        %v1626 = vld [vmem:[#allocation2 + $0x7c] sm:$0xf]
        %v1627 = vld [vmem:[#allocation2 + $0x80] sm:$0x1]
        %v1628 = vld [vmem:[#allocation2 + $0x84] sm:$0xf]
        %v1629 = vld [vmem:[#allocation2 + $0x88] sm:$0xf]
        %v1630 = vld [vmem:[#allocation2 + $0x8c] sm:$0x1]
        %v1631 = vld [vmem:[#allocation2 + $0x90] sm:$0xf]
        %v1632 = vld [vmem:[#allocation2 + $0x94] sm:$0xf]
        %v1633 = vld [vmem:[#allocation2 + $0x98] sm:$0x1]
        %v1634 = vld [vmem:[#allocation2 + $0x9c] sm:$0xf]
        %v1635 = vld [vmem:[#allocation2 + $0xa0] sm:$0xf]
        %v1636 = vld [vmem:[#allocation2 + $0xa4] sm:$0x1]
        %v1637 = vld [vmem:[#allocation2 + $0xa8] sm:$0xf]
        %v1638 = vld [vmem:[#allocation2 + $0xac] sm:$0xf]
        %v1639 = vld [vmem:[#allocation2 + $0xb0] sm:$0x1]
        %v1640 = vld [vmem:[#allocation2 + $0xb4] sm:$0xf]
        %v1641 = vld [vmem:[#allocation2 + $0xb8] sm:$0xf]
        %v1642 = vld [vmem:[#allocation2 + $0xbc] sm:$0x1]
        %vm1643 = vsmask.f32 3328
        %vm1644 = vsmask.f32 7440
        %vm1645 = vmor %vm1643, %vm1644
        %v1647 = vshrl.u32 %v1595, 16
        %v1649 = vrot.slane %v1647, 4
        %v1650 = vshll.u32 %v1595, 16
        %v1652 = vrot.slane %v1650, 5
        %v1653 = vor.u32 %v1649, %v1652
        %v1654 = vrot.slane %v1653, 4
        %v1656 = vshll.u32 %v1596, 16
        %v1658 = vrot.slane %v1656, 5
        %v1659 = vsel %vm1645, %v1654, %v1658
        %v1660 = vshrl.u32 %v1596, 16
        %v1662 = vrot.slane %v1660, 4
        %v1663 = vor.u32 %v1662, %v1658
        %v1664 = vrot.slane %v1663, 4
        %v1666 = vshll.u32 %v1597, 16
        %v1668 = vrot.slane %v1666, 5
        %v1669 = vsel %vm1645, %v1664, %v1668
        %v1671 = vshrl.u32 %v1598, 16
        %v1673 = vrot.slane %v1671, 4
        %v1674 = vshll.u32 %v1598, 16
        %v1676 = vrot.slane %v1674, 5
        %v1677 = vor.u32 %v1673, %v1676
        %v1678 = vrot.slane %v1677, 4
        %v1680 = vshll.u32 %v1599, 16
        %v1682 = vrot.slane %v1680, 5
        %v1683 = vsel %vm1645, %v1678, %v1682
        %v1684 = vshrl.u32 %v1599, 16
        %v1686 = vrot.slane %v1684, 4
        %v1687 = vor.u32 %v1686, %v1682
        %v1688 = vrot.slane %v1687, 4
        %v1690 = vshll.u32 %v1600, 16
        %v1692 = vrot.slane %v1690, 5
        %v1693 = vsel %vm1645, %v1688, %v1692
        %v1695 = vshrl.u32 %v1601, 16
        %v1697 = vrot.slane %v1695, 4
        %v1698 = vshll.u32 %v1601, 16
        %v1700 = vrot.slane %v1698, 5
        %v1701 = vor.u32 %v1697, %v1700
        %v1702 = vrot.slane %v1701, 4
        %v1704 = vshll.u32 %v1602, 16
        %v1706 = vrot.slane %v1704, 5
        %v1707 = vsel %vm1645, %v1702, %v1706
        %v1708 = vshrl.u32 %v1602, 16
        %v1710 = vrot.slane %v1708, 4
        %v1711 = vor.u32 %v1710, %v1706
        %v1712 = vrot.slane %v1711, 4
        %v1714 = vshll.u32 %v1603, 16
        %v1716 = vrot.slane %v1714, 5
        %v1717 = vsel %vm1645, %v1712, %v1716
        %v1719 = vshrl.u32 %v1604, 16
        %v1721 = vrot.slane %v1719, 4
        %v1722 = vshll.u32 %v1604, 16
        %v1724 = vrot.slane %v1722, 5
        %v1725 = vor.u32 %v1721, %v1724
        %v1726 = vrot.slane %v1725, 4
        %v1728 = vshll.u32 %v1605, 16
        %v1730 = vrot.slane %v1728, 5
        %v1731 = vsel %vm1645, %v1726, %v1730
        %v1732 = vshrl.u32 %v1605, 16
        %v1734 = vrot.slane %v1732, 4
        %v1735 = vor.u32 %v1734, %v1730
        %v1736 = vrot.slane %v1735, 4
        %v1738 = vshll.u32 %v1606, 16
        %v1740 = vrot.slane %v1738, 5
        %v1741 = vsel %vm1645, %v1736, %v1740
        %v1743 = vshrl.u32 %v1607, 16
        %v1745 = vrot.slane %v1743, 4
        %v1746 = vshll.u32 %v1607, 16
        %v1748 = vrot.slane %v1746, 5
        %v1749 = vor.u32 %v1745, %v1748
        %v1750 = vrot.slane %v1749, 4
        %v1752 = vshll.u32 %v1608, 16
        %v1754 = vrot.slane %v1752, 5
        %v1755 = vsel %vm1645, %v1750, %v1754
        %v1756 = vshrl.u32 %v1608, 16
        %v1758 = vrot.slane %v1756, 4
        %v1759 = vor.u32 %v1758, %v1754
        %v1760 = vrot.slane %v1759, 4
        %v1762 = vshll.u32 %v1609, 16
        %v1764 = vrot.slane %v1762, 5
        %v1765 = vsel %vm1645, %v1760, %v1764
        %v1767 = vshrl.u32 %v1610, 16
        %v1769 = vrot.slane %v1767, 4
        %v1770 = vshll.u32 %v1610, 16
        %v1772 = vrot.slane %v1770, 5
        %v1773 = vor.u32 %v1769, %v1772
        %v1774 = vrot.slane %v1773, 4
        %v1776 = vshll.u32 %v1611, 16
        %v1778 = vrot.slane %v1776, 5
        %v1779 = vsel %vm1645, %v1774, %v1778
        %v1780 = vshrl.u32 %v1611, 16
        %v1782 = vrot.slane %v1780, 4
        %v1783 = vor.u32 %v1782, %v1778
        %v1784 = vrot.slane %v1783, 4
        %v1786 = vshll.u32 %v1612, 16
        %v1788 = vrot.slane %v1786, 5
        %v1789 = vsel %vm1645, %v1784, %v1788
        %v1791 = vshrl.u32 %v1613, 16
        %v1793 = vrot.slane %v1791, 4
        %v1794 = vshll.u32 %v1613, 16
        %v1796 = vrot.slane %v1794, 5
        %v1797 = vor.u32 %v1793, %v1796
        %v1798 = vrot.slane %v1797, 4
        %v1800 = vshll.u32 %v1614, 16
        %v1802 = vrot.slane %v1800, 5
        %v1803 = vsel %vm1645, %v1798, %v1802
        %v1804 = vshrl.u32 %v1614, 16
        %v1806 = vrot.slane %v1804, 4
        %v1807 = vor.u32 %v1806, %v1802
        %v1808 = vrot.slane %v1807, 4
        %v1810 = vshll.u32 %v1615, 16
        %v1812 = vrot.slane %v1810, 5
        %v1813 = vsel %vm1645, %v1808, %v1812
        %v1815 = vshrl.u32 %v1616, 16
        %v1817 = vrot.slane %v1815, 4
        %v1818 = vshll.u32 %v1616, 16
        %v1820 = vrot.slane %v1818, 5
        %v1821 = vor.u32 %v1817, %v1820
        %v1822 = vrot.slane %v1821, 4
        %v1824 = vshll.u32 %v1617, 16
        %v1826 = vrot.slane %v1824, 5
        %v1827 = vsel %vm1645, %v1822, %v1826
        %v1828 = vshrl.u32 %v1617, 16
        %v1830 = vrot.slane %v1828, 4
        %v1831 = vor.u32 %v1830, %v1826
        %v1832 = vrot.slane %v1831, 4
        %v1834 = vshll.u32 %v1618, 16
        %v1836 = vrot.slane %v1834, 5
        %v1837 = vsel %vm1645, %v1832, %v1836
        %v1839 = vshrl.u32 %v1619, 16
        %v1841 = vrot.slane %v1839, 4
        %v1842 = vshll.u32 %v1619, 16
        %v1844 = vrot.slane %v1842, 5
        %v1845 = vor.u32 %v1841, %v1844
        %v1846 = vrot.slane %v1845, 4
        %v1848 = vshll.u32 %v1620, 16
        %v1850 = vrot.slane %v1848, 5
        %v1851 = vsel %vm1645, %v1846, %v1850
        %v1852 = vshrl.u32 %v1620, 16
        %v1854 = vrot.slane %v1852, 4
        %v1855 = vor.u32 %v1854, %v1850
        %v1856 = vrot.slane %v1855, 4
        %v1858 = vshll.u32 %v1621, 16
        %v1860 = vrot.slane %v1858, 5
        %v1861 = vsel %vm1645, %v1856, %v1860
        %v1863 = vshrl.u32 %v1622, 16
        %v1865 = vrot.slane %v1863, 4
        %v1866 = vshll.u32 %v1622, 16
        %v1868 = vrot.slane %v1866, 5
        %v1869 = vor.u32 %v1865, %v1868
        %v1870 = vrot.slane %v1869, 4
        %v1872 = vshll.u32 %v1623, 16
        %v1874 = vrot.slane %v1872, 5
        %v1875 = vsel %vm1645, %v1870, %v1874
        %v1876 = vshrl.u32 %v1623, 16
        %v1878 = vrot.slane %v1876, 4
        %v1879 = vor.u32 %v1878, %v1874
        %v1880 = vrot.slane %v1879, 4
        %v1882 = vshll.u32 %v1624, 16
        %v1884 = vrot.slane %v1882, 5
        %v1885 = vsel %vm1645, %v1880, %v1884
        %v1887 = vshrl.u32 %v1625, 16
        %v1889 = vrot.slane %v1887, 4
        %v1890 = vshll.u32 %v1625, 16
        %v1892 = vrot.slane %v1890, 5
        %v1893 = vor.u32 %v1889, %v1892
        %v1894 = vrot.slane %v1893, 4
        %v1896 = vshll.u32 %v1626, 16
        %v1898 = vrot.slane %v1896, 5
        %v1899 = vsel %vm1645, %v1894, %v1898
        %v1900 = vshrl.u32 %v1626, 16
        %v1902 = vrot.slane %v1900, 4
        %v1903 = vor.u32 %v1902, %v1898
        %v1904 = vrot.slane %v1903, 4
        %v1906 = vshll.u32 %v1627, 16
        %v1908 = vrot.slane %v1906, 5
        %v1909 = vsel %vm1645, %v1904, %v1908
        %v1911 = vshrl.u32 %v1628, 16
        %v1913 = vrot.slane %v1911, 4
        %v1914 = vshll.u32 %v1628, 16
        %v1916 = vrot.slane %v1914, 5
        %v1917 = vor.u32 %v1913, %v1916
        %v1918 = vrot.slane %v1917, 4
        %v1920 = vshll.u32 %v1629, 16
        %v1922 = vrot.slane %v1920, 5
        %v1923 = vsel %vm1645, %v1918, %v1922
        %v1924 = vshrl.u32 %v1629, 16
        %v1926 = vrot.slane %v1924, 4
        %v1927 = vor.u32 %v1926, %v1922
        %v1928 = vrot.slane %v1927, 4
        %v1930 = vshll.u32 %v1630, 16
        %v1932 = vrot.slane %v1930, 5
        %v1933 = vsel %vm1645, %v1928, %v1932
        %v1935 = vshrl.u32 %v1631, 16
        %v1937 = vrot.slane %v1935, 4
        %v1938 = vshll.u32 %v1631, 16
        %v1940 = vrot.slane %v1938, 5
        %v1941 = vor.u32 %v1937, %v1940
        %v1942 = vrot.slane %v1941, 4
        %v1944 = vshll.u32 %v1632, 16
        %v1946 = vrot.slane %v1944, 5
        %v1947 = vsel %vm1645, %v1942, %v1946
        %v1948 = vshrl.u32 %v1632, 16
        %v1950 = vrot.slane %v1948, 4
        %v1951 = vor.u32 %v1950, %v1946
        %v1952 = vrot.slane %v1951, 4
        %v1954 = vshll.u32 %v1633, 16
        %v1956 = vrot.slane %v1954, 5
        %v1957 = vsel %vm1645, %v1952, %v1956
        %v1959 = vshrl.u32 %v1634, 16
        %v1961 = vrot.slane %v1959, 4
        %v1962 = vshll.u32 %v1634, 16
        %v1964 = vrot.slane %v1962, 5
        %v1965 = vor.u32 %v1961, %v1964
        %v1966 = vrot.slane %v1965, 4
        %v1968 = vshll.u32 %v1635, 16
        %v1970 = vrot.slane %v1968, 5
        %v1971 = vsel %vm1645, %v1966, %v1970
        %v1972 = vshrl.u32 %v1635, 16
        %v1974 = vrot.slane %v1972, 4
        %v1975 = vor.u32 %v1974, %v1970
        %v1976 = vrot.slane %v1975, 4
        %v1978 = vshll.u32 %v1636, 16
        %v1980 = vrot.slane %v1978, 5
        %v1981 = vsel %vm1645, %v1976, %v1980
        %v1983 = vshrl.u32 %v1637, 16
        %v1985 = vrot.slane %v1983, 4
        %v1986 = vshll.u32 %v1637, 16
        %v1988 = vrot.slane %v1986, 5
        %v1989 = vor.u32 %v1985, %v1988
        %v1990 = vrot.slane %v1989, 4
        %v1992 = vshll.u32 %v1638, 16
        %v1994 = vrot.slane %v1992, 5
        %v1995 = vsel %vm1645, %v1990, %v1994
        %v1996 = vshrl.u32 %v1638, 16
        %v1998 = vrot.slane %v1996, 4
        %v1999 = vor.u32 %v1998, %v1994
        %v2000 = vrot.slane %v1999, 4
        %v2002 = vshll.u32 %v1639, 16
        %v2004 = vrot.slane %v2002, 5
        %v2005 = vsel %vm1645, %v2000, %v2004
        %v2007 = vshrl.u32 %v1640, 16
        %v2009 = vrot.slane %v2007, 4
        %v2010 = vshll.u32 %v1640, 16
        %v2012 = vrot.slane %v2010, 5
        %v2013 = vor.u32 %v2009, %v2012
        %v2014 = vrot.slane %v2013, 4
        %v2016 = vshll.u32 %v1641, 16
        %v2018 = vrot.slane %v2016, 5
        %v2019 = vsel %vm1645, %v2014, %v2018
        %v2020 = vshrl.u32 %v1641, 16
        %v2022 = vrot.slane %v2020, 4
        %v2023 = vor.u32 %v2022, %v2018
        %v2024 = vrot.slane %v2023, 4
        %v2026 = vshll.u32 %v1642, 16
        %v2028 = vrot.slane %v2026, 5
        %v2029 = vsel %vm1645, %v2024, %v2028
        %2030 = vrot.lane.b32.xlu0 %v1659, 32
        %v2031 = vpop.permute.xlu0 %2030
        %2032 = vrot.lane.b32.xlu0 %v1669, 32
        %v2033 = vpop.permute.xlu0 %2032
        %2034 = vrot.lane.b32.xlu0 %v1683, 32
        %v2035 = vpop.permute.xlu0 %2034
        %2036 = vrot.lane.b32.xlu0 %v1693, 32
        %v2037 = vpop.permute.xlu0 %2036
        %2038 = vrot.lane.b32.xlu0 %v1707, 32
        %v2039 = vpop.permute.xlu0 %2038
        %2040 = vrot.lane.b32.xlu0 %v1717, 32
        %v2041 = vpop.permute.xlu0 %2040
        %2042 = vrot.lane.b32.xlu0 %v1731, 32
        %v2043 = vpop.permute.xlu0 %2042
        %2044 = vrot.lane.b32.xlu0 %v1741, 32
        %v2045 = vpop.permute.xlu0 %2044
        %2046 = vrot.lane.b32.xlu0 %v1755, 32
        %v2047 = vpop.permute.xlu0 %2046
        %2048 = vrot.lane.b32.xlu0 %v1765, 32
        %v2049 = vpop.permute.xlu0 %2048
        %2050 = vrot.lane.b32.xlu0 %v1779, 32
        %v2051 = vpop.permute.xlu0 %2050
        %2052 = vrot.lane.b32.xlu0 %v1789, 32
        %v2053 = vpop.permute.xlu0 %2052
        %2054 = vrot.lane.b32.xlu0 %v1803, 32
        %v2055 = vpop.permute.xlu0 %2054
        %2056 = vrot.lane.b32.xlu0 %v1813, 32
        %v2057 = vpop.permute.xlu0 %2056
        %2058 = vrot.lane.b32.xlu0 %v1827, 32
        %v2059 = vpop.permute.xlu0 %2058
        %2060 = vrot.lane.b32.xlu0 %v1837, 32
        %v2061 = vpop.permute.xlu0 %2060
        %2062 = vrot.lane.b32.xlu0 %v1851, 32
        %v2063 = vpop.permute.xlu0 %2062
        %2064 = vrot.lane.b32.xlu0 %v1861, 32
        %v2065 = vpop.permute.xlu0 %2064
        %2066 = vrot.lane.b32.xlu0 %v1875, 32
        %v2067 = vpop.permute.xlu0 %2066
        %2068 = vrot.lane.b32.xlu0 %v1885, 32
        %v2069 = vpop.permute.xlu0 %2068
        %2070 = vrot.lane.b32.xlu0 %v1899, 32
        %v2071 = vpop.permute.xlu0 %2070
        %2072 = vrot.lane.b32.xlu0 %v1909, 32
        %v2073 = vpop.permute.xlu0 %2072
        %2074 = vrot.lane.b32.xlu0 %v1923, 32
        %v2075 = vpop.permute.xlu0 %2074
        %2076 = vrot.lane.b32.xlu0 %v1933, 32
        %v2077 = vpop.permute.xlu0 %2076
        %2078 = vrot.lane.b32.xlu0 %v1947, 32
        %v2079 = vpop.permute.xlu0 %2078
        %2080 = vrot.lane.b32.xlu0 %v1957, 32
        %v2081 = vpop.permute.xlu0 %2080
        %2082 = vrot.lane.b32.xlu0 %v1971, 32
        %v2083 = vpop.permute.xlu0 %2082
        %2084 = vrot.lane.b32.xlu0 %v1981, 32
        %v2085 = vpop.permute.xlu0 %2084
        %2086 = vrot.lane.b32.xlu0 %v1995, 32
        %v2087 = vpop.permute.xlu0 %2086
        %2088 = vrot.lane.b32.xlu0 %v2005, 32
        %v2089 = vpop.permute.xlu0 %2088
        %2090 = vrot.lane.b32.xlu0 %v2019, 32
        %v2091 = vpop.permute.xlu0 %2090
        %2092 = vrot.lane.b32.xlu0 %v2029, 32
        %v2093 = vpop.permute.xlu0 %2092
        %vm2126 = vcmask 519424
        %2127 = vst.msk [vmem:[#allocation3] sm:$0xf] %vm2126, %v2031
        %2128 = vst.msk [vmem:[#allocation3 + $0xc] sm:$0xf] %vm2126, %v2033
        %2129 = vst.msk [vmem:[#allocation3 + $0x18] sm:$0xf] %vm2126, %v2035
        %2130 = vst.msk [vmem:[#allocation3 + $0x24] sm:$0xf] %vm2126, %v2037
        %2131 = vst.msk [vmem:[#allocation3 + $0x30] sm:$0xf] %vm2126, %v2039
        %2132 = vst.msk [vmem:[#allocation3 + $0x3c] sm:$0xf] %vm2126, %v2041
        %2133 = vst.msk [vmem:[#allocation3 + $0x48] sm:$0xf] %vm2126, %v2043
        %2134 = vst.msk [vmem:[#allocation3 + $0x54] sm:$0xf] %vm2126, %v2045
        %2135 = vst.msk [vmem:[#allocation3 + $0x60] sm:$0xf] %vm2126, %v2047
        %2136 = vst.msk [vmem:[#allocation3 + $0x6c] sm:$0xf] %vm2126, %v2049
        %2137 = vst.msk [vmem:[#allocation3 + $0x78] sm:$0xf] %vm2126, %v2051
        %2138 = vst.msk [vmem:[#allocation3 + $0x84] sm:$0xf] %vm2126, %v2053
        %2139 = vst.msk [vmem:[#allocation3 + $0x90] sm:$0xf] %vm2126, %v2055
        %2140 = vst.msk [vmem:[#allocation3 + $0x9c] sm:$0xf] %vm2126, %v2057
        %2141 = vst.msk [vmem:[#allocation3 + $0xa8] sm:$0xf] %vm2126, %v2059
        %2142 = vst.msk [vmem:[#allocation3 + $0xb4] sm:$0xf] %vm2126, %v2061
        %2143 = vst.msk [vmem:[#allocation3 + $0xc0] sm:$0xf] %vm2126, %v2063
        %2144 = vst.msk [vmem:[#allocation3 + $0xcc] sm:$0xf] %vm2126, %v2065
        %2145 = vst.msk [vmem:[#allocation3 + $0xd8] sm:$0xf] %vm2126, %v2067
        %2146 = vst.msk [vmem:[#allocation3 + $0xe4] sm:$0xf] %vm2126, %v2069
        %2147 = vst.msk [vmem:[#allocation3 + $0xf0] sm:$0xf] %vm2126, %v2071
        %2148 = vst.msk [vmem:[#allocation3 + $0xfc] sm:$0xf] %vm2126, %v2073
        %2149 = vst.msk [vmem:[#allocation3 + $0x108] sm:$0xf] %vm2126, %v2075
        %2150 = vst.msk [vmem:[#allocation3 + $0x114] sm:$0xf] %vm2126, %v2077
        %2151 = vst.msk [vmem:[#allocation3 + $0x120] sm:$0xf] %vm2126, %v2079
        %2152 = vst.msk [vmem:[#allocation3 + $0x12c] sm:$0xf] %vm2126, %v2081
        %2153 = vst.msk [vmem:[#allocation3 + $0x138] sm:$0xf] %vm2126, %v2083
        %2154 = vst.msk [vmem:[#allocation3 + $0x144] sm:$0xf] %vm2126, %v2085
        %2155 = vst.msk [vmem:[#allocation3 + $0x150] sm:$0xf] %vm2126, %v2087
        %2156 = vst.msk [vmem:[#allocation3 + $0x15c] sm:$0xf] %vm2126, %v2089
        %2157 = vst.msk [vmem:[#allocation3 + $0x168] sm:$0xf] %vm2126, %v2091
        %2158 = vst.msk [vmem:[#allocation3 + $0x174] sm:$0xf] %vm2126, %v2093
        %v2159 = vld [vmem:[#allocation2] sm:$0xe]
        %v2160 = vld [vmem:[#allocation2 + $0x4] sm:$0xf]
        %v2161 = vld [vmem:[#allocation2 + $0x8] sm:$0x1]
        %v2162 = vld [vmem:[#allocation2 + $0xc] sm:$0xe]
        %v2163 = vld [vmem:[#allocation2 + $0x10] sm:$0xf]
        %v2164 = vld [vmem:[#allocation2 + $0x14] sm:$0x1]
        %v2165 = vld [vmem:[#allocation2 + $0x18] sm:$0xe]
        %v2166 = vld [vmem:[#allocation2 + $0x1c] sm:$0xf]
        %v2167 = vld [vmem:[#allocation2 + $0x20] sm:$0x1]
        %v2168 = vld [vmem:[#allocation2 + $0x24] sm:$0xe]
        %v2169 = vld [vmem:[#allocation2 + $0x28] sm:$0xf]
        %v2170 = vld [vmem:[#allocation2 + $0x2c] sm:$0x1]
        %v2171 = vld [vmem:[#allocation2 + $0x30] sm:$0xe]
        %v2172 = vld [vmem:[#allocation2 + $0x34] sm:$0xf]
        %v2173 = vld [vmem:[#allocation2 + $0x38] sm:$0x1]
        %v2174 = vld [vmem:[#allocation2 + $0x3c] sm:$0xe]
        %v2175 = vld [vmem:[#allocation2 + $0x40] sm:$0xf]
        %v2176 = vld [vmem:[#allocation2 + $0x44] sm:$0x1]
        %v2177 = vld [vmem:[#allocation2 + $0x48] sm:$0xe]
        %v2178 = vld [vmem:[#allocation2 + $0x4c] sm:$0xf]
        %v2179 = vld [vmem:[#allocation2 + $0x50] sm:$0x1]
        %v2180 = vld [vmem:[#allocation2 + $0x54] sm:$0xe]
        %v2181 = vld [vmem:[#allocation2 + $0x58] sm:$0xf]
        %v2182 = vld [vmem:[#allocation2 + $0x5c] sm:$0x1]
        %v2183 = vld [vmem:[#allocation2 + $0x60] sm:$0xe]
        %v2184 = vld [vmem:[#allocation2 + $0x64] sm:$0xf]
        %v2185 = vld [vmem:[#allocation2 + $0x68] sm:$0x1]
        %v2186 = vld [vmem:[#allocation2 + $0x6c] sm:$0xe]
        %v2187 = vld [vmem:[#allocation2 + $0x70] sm:$0xf]
        %v2188 = vld [vmem:[#allocation2 + $0x74] sm:$0x1]
        %v2189 = vld [vmem:[#allocation2 + $0x78] sm:$0xe]
        %v2190 = vld [vmem:[#allocation2 + $0x7c] sm:$0xf]
        %v2191 = vld [vmem:[#allocation2 + $0x80] sm:$0x1]
        %v2192 = vld [vmem:[#allocation2 + $0x84] sm:$0xe]
        %v2193 = vld [vmem:[#allocation2 + $0x88] sm:$0xf]
        %v2194 = vld [vmem:[#allocation2 + $0x8c] sm:$0x1]
        %v2195 = vld [vmem:[#allocation2 + $0x90] sm:$0xe]
        %v2196 = vld [vmem:[#allocation2 + $0x94] sm:$0xf]
        %v2197 = vld [vmem:[#allocation2 + $0x98] sm:$0x1]
        %v2198 = vld [vmem:[#allocation2 + $0x9c] sm:$0xe]
        %v2199 = vld [vmem:[#allocation2 + $0xa0] sm:$0xf]
        %v2200 = vld [vmem:[#allocation2 + $0xa4] sm:$0x1]
        %v2201 = vld [vmem:[#allocation2 + $0xa8] sm:$0xe]
        %v2202 = vld [vmem:[#allocation2 + $0xac] sm:$0xf]
        %v2203 = vld [vmem:[#allocation2 + $0xb0] sm:$0x1]
        %v2204 = vld [vmem:[#allocation2 + $0xb4] sm:$0xe]
        %v2205 = vld [vmem:[#allocation2 + $0xb8] sm:$0xf]
        %v2206 = vld [vmem:[#allocation2 + $0xbc] sm:$0x1]
        %vm2255 = vcmask 1042432
        %vm2256 = vcmask 1046532
        %vm2257 = vmor %vm2255, %vm2256
        %v2258 = vrot.slane %v2159, 5
        %v2259 = vrot.slane %v2258, 4
        %v2260 = vrot.slane %v2160, 5
        %v2261 = vsel %vm2257, %v2259, %v2260
        %v2262 = vrot.slane %v2260, 4
        %v2263 = vrot.slane %v2161, 5
        %v2264 = vsel %vm2257, %v2262, %v2263
        %v2265 = vrot.slane %v2162, 5
        %v2266 = vrot.slane %v2265, 4
        %v2267 = vrot.slane %v2163, 5
        %v2268 = vsel %vm2257, %v2266, %v2267
        %v2269 = vrot.slane %v2267, 4
        %v2270 = vrot.slane %v2164, 5
        %v2271 = vsel %vm2257, %v2269, %v2270
        %v2272 = vrot.slane %v2165, 5
        %v2273 = vrot.slane %v2272, 4
        %v2274 = vrot.slane %v2166, 5
        %v2275 = vsel %vm2257, %v2273, %v2274
        %v2276 = vrot.slane %v2274, 4
        %v2277 = vrot.slane %v2167, 5
        %v2278 = vsel %vm2257, %v2276, %v2277
        %v2279 = vrot.slane %v2168, 5
        %v2280 = vrot.slane %v2279, 4
        %v2281 = vrot.slane %v2169, 5
        %v2282 = vsel %vm2257, %v2280, %v2281
        %v2283 = vrot.slane %v2281, 4
        %v2284 = vrot.slane %v2170, 5
        %v2285 = vsel %vm2257, %v2283, %v2284
        %v2286 = vrot.slane %v2171, 5
        %v2287 = vrot.slane %v2286, 4
        %v2288 = vrot.slane %v2172, 5
        %v2289 = vsel %vm2257, %v2287, %v2288
        %v2290 = vrot.slane %v2288, 4
        %v2291 = vrot.slane %v2173, 5
        %v2292 = vsel %vm2257, %v2290, %v2291
        %v2293 = vrot.slane %v2174, 5
        %v2294 = vrot.slane %v2293, 4
        %v2295 = vrot.slane %v2175, 5
        %v2296 = vsel %vm2257, %v2294, %v2295
        %v2297 = vrot.slane %v2295, 4
        %v2298 = vrot.slane %v2176, 5
        %v2299 = vsel %vm2257, %v2297, %v2298
        %v2300 = vrot.slane %v2177, 5
        %v2301 = vrot.slane %v2300, 4
        %v2302 = vrot.slane %v2178, 5
        %v2303 = vsel %vm2257, %v2301, %v2302
        %v2304 = vrot.slane %v2302, 4
        %v2305 = vrot.slane %v2179, 5
        %v2306 = vsel %vm2257, %v2304, %v2305
        %v2307 = vrot.slane %v2180, 5
        %v2308 = vrot.slane %v2307, 4
        %v2309 = vrot.slane %v2181, 5
        %v2310 = vsel %vm2257, %v2308, %v2309
        %v2311 = vrot.slane %v2309, 4
        %v2312 = vrot.slane %v2182, 5
        %v2313 = vsel %vm2257, %v2311, %v2312
        %v2314 = vrot.slane %v2183, 5
        %v2315 = vrot.slane %v2314, 4
        %v2316 = vrot.slane %v2184, 5
        %v2317 = vsel %vm2257, %v2315, %v2316
        %v2318 = vrot.slane %v2316, 4
        %v2319 = vrot.slane %v2185, 5
        %v2320 = vsel %vm2257, %v2318, %v2319
        %v2321 = vrot.slane %v2186, 5
        %v2322 = vrot.slane %v2321, 4
        %v2323 = vrot.slane %v2187, 5
        %v2324 = vsel %vm2257, %v2322, %v2323
        %v2325 = vrot.slane %v2323, 4
        %v2326 = vrot.slane %v2188, 5
        %v2327 = vsel %vm2257, %v2325, %v2326
        %v2328 = vrot.slane %v2189, 5
        %v2329 = vrot.slane %v2328, 4
        %v2330 = vrot.slane %v2190, 5
        %v2331 = vsel %vm2257, %v2329, %v2330
        %v2332 = vrot.slane %v2330, 4
        %v2333 = vrot.slane %v2191, 5
        %v2334 = vsel %vm2257, %v2332, %v2333
        %v2335 = vrot.slane %v2192, 5
        %v2336 = vrot.slane %v2335, 4
        %v2337 = vrot.slane %v2193, 5
        %v2338 = vsel %vm2257, %v2336, %v2337
        %v2339 = vrot.slane %v2337, 4
        %v2340 = vrot.slane %v2194, 5
        %v2341 = vsel %vm2257, %v2339, %v2340
        %v2342 = vrot.slane %v2195, 5
        %v2343 = vrot.slane %v2342, 4
        %v2344 = vrot.slane %v2196, 5
        %v2345 = vsel %vm2257, %v2343, %v2344
        %v2346 = vrot.slane %v2344, 4
        %v2347 = vrot.slane %v2197, 5
        %v2348 = vsel %vm2257, %v2346, %v2347
        %v2349 = vrot.slane %v2198, 5
        %v2350 = vrot.slane %v2349, 4
        %v2351 = vrot.slane %v2199, 5
        %v2352 = vsel %vm2257, %v2350, %v2351
        %v2353 = vrot.slane %v2351, 4
        %v2354 = vrot.slane %v2200, 5
        %v2355 = vsel %vm2257, %v2353, %v2354
        %v2356 = vrot.slane %v2201, 5
        %v2357 = vrot.slane %v2356, 4
        %v2358 = vrot.slane %v2202, 5
        %v2359 = vsel %vm2257, %v2357, %v2358
        %v2360 = vrot.slane %v2358, 4
        %v2361 = vrot.slane %v2203, 5
        %v2362 = vsel %vm2257, %v2360, %v2361
        %v2363 = vrot.slane %v2204, 5
        %v2364 = vrot.slane %v2363, 4
        %v2365 = vrot.slane %v2205, 5
        %v2366 = vsel %vm2257, %v2364, %v2365
        %v2367 = vrot.slane %v2365, 4
        %v2368 = vrot.slane %v2206, 5
        %v2369 = vsel %vm2257, %v2367, %v2368
        %2370 = vrot.lane.b32.xlu0 %v2261, 64
        %v2371 = vpop.permute.xlu0 %2370
        %2372 = vrot.lane.b32.xlu0 %v2264, 64
        %v2373 = vpop.permute.xlu0 %2372
        %2374 = vrot.lane.b32.xlu0 %v2268, 64
        %v2375 = vpop.permute.xlu0 %2374
        %2376 = vrot.lane.b32.xlu0 %v2271, 64
        %v2377 = vpop.permute.xlu0 %2376
        %2378 = vrot.lane.b32.xlu0 %v2275, 64
        %v2379 = vpop.permute.xlu0 %2378
        %2380 = vrot.lane.b32.xlu0 %v2278, 64
        %v2381 = vpop.permute.xlu0 %2380
        %2382 = vrot.lane.b32.xlu0 %v2282, 64
        %v2383 = vpop.permute.xlu0 %2382
        %2384 = vrot.lane.b32.xlu0 %v2285, 64
        %v2385 = vpop.permute.xlu0 %2384
        %2386 = vrot.lane.b32.xlu0 %v2289, 64
        %v2387 = vpop.permute.xlu0 %2386
        %2388 = vrot.lane.b32.xlu0 %v2292, 64
        %v2389 = vpop.permute.xlu0 %2388
        %2390 = vrot.lane.b32.xlu0 %v2296, 64
        %v2391 = vpop.permute.xlu0 %2390
        %2392 = vrot.lane.b32.xlu0 %v2299, 64
        %v2393 = vpop.permute.xlu0 %2392
        %2394 = vrot.lane.b32.xlu0 %v2303, 64
        %v2395 = vpop.permute.xlu0 %2394
        %2396 = vrot.lane.b32.xlu0 %v2306, 64
        %v2397 = vpop.permute.xlu0 %2396
        %2398 = vrot.lane.b32.xlu0 %v2310, 64
        %v2399 = vpop.permute.xlu0 %2398
        %2400 = vrot.lane.b32.xlu0 %v2313, 64
        %v2401 = vpop.permute.xlu0 %2400
        %2402 = vrot.lane.b32.xlu0 %v2317, 64
        %v2403 = vpop.permute.xlu0 %2402
        %2404 = vrot.lane.b32.xlu0 %v2320, 64
        %v2405 = vpop.permute.xlu0 %2404
        %2406 = vrot.lane.b32.xlu0 %v2324, 64
        %v2407 = vpop.permute.xlu0 %2406
        %2408 = vrot.lane.b32.xlu0 %v2327, 64
        %v2409 = vpop.permute.xlu0 %2408
        %2410 = vrot.lane.b32.xlu0 %v2331, 64
        %v2411 = vpop.permute.xlu0 %2410
        %2412 = vrot.lane.b32.xlu0 %v2334, 64
        %v2413 = vpop.permute.xlu0 %2412
        %2414 = vrot.lane.b32.xlu0 %v2338, 64
        %v2415 = vpop.permute.xlu0 %2414
        %2416 = vrot.lane.b32.xlu0 %v2341, 64
        %v2417 = vpop.permute.xlu0 %2416
        %2418 = vrot.lane.b32.xlu0 %v2345, 64
        %v2419 = vpop.permute.xlu0 %2418
        %2420 = vrot.lane.b32.xlu0 %v2348, 64
        %v2421 = vpop.permute.xlu0 %2420
        %2422 = vrot.lane.b32.xlu0 %v2352, 64
        %v2423 = vpop.permute.xlu0 %2422
        %2424 = vrot.lane.b32.xlu0 %v2355, 64
        %v2425 = vpop.permute.xlu0 %2424
        %2426 = vrot.lane.b32.xlu0 %v2359, 64
        %v2427 = vpop.permute.xlu0 %2426
        %2428 = vrot.lane.b32.xlu0 %v2362, 64
        %v2429 = vpop.permute.xlu0 %2428
        %2430 = vrot.lane.b32.xlu0 %v2366, 64
        %v2431 = vpop.permute.xlu0 %2430
        %2432 = vrot.lane.b32.xlu0 %v2369, 64
        %v2433 = vpop.permute.xlu0 %2432
        %vm2466 = vcmask 781824
        %2467 = vst.msk [vmem:[#allocation3] sm:$0xf] %vm2466, %v2371
        %2468 = vst.msk [vmem:[#allocation3 + $0xc] sm:$0xf] %vm2466, %v2373
        %2469 = vst.msk [vmem:[#allocation3 + $0x18] sm:$0xf] %vm2466, %v2375
        %2470 = vst.msk [vmem:[#allocation3 + $0x24] sm:$0xf] %vm2466, %v2377
        %2471 = vst.msk [vmem:[#allocation3 + $0x30] sm:$0xf] %vm2466, %v2379
        %2472 = vst.msk [vmem:[#allocation3 + $0x3c] sm:$0xf] %vm2466, %v2381
        %2473 = vst.msk [vmem:[#allocation3 + $0x48] sm:$0xf] %vm2466, %v2383
        %2474 = vst.msk [vmem:[#allocation3 + $0x54] sm:$0xf] %vm2466, %v2385
        %2475 = vst.msk [vmem:[#allocation3 + $0x60] sm:$0xf] %vm2466, %v2387
        %2476 = vst.msk [vmem:[#allocation3 + $0x6c] sm:$0xf] %vm2466, %v2389
        %2477 = vst.msk [vmem:[#allocation3 + $0x78] sm:$0xf] %vm2466, %v2391
        %2478 = vst.msk [vmem:[#allocation3 + $0x84] sm:$0xf] %vm2466, %v2393
        %2479 = vst.msk [vmem:[#allocation3 + $0x90] sm:$0xf] %vm2466, %v2395
        %2480 = vst.msk [vmem:[#allocation3 + $0x9c] sm:$0xf] %vm2466, %v2397
        %2481 = vst.msk [vmem:[#allocation3 + $0xa8] sm:$0xf] %vm2466, %v2399
        %2482 = vst.msk [vmem:[#allocation3 + $0xb4] sm:$0xf] %vm2466, %v2401
        %2483 = vst.msk [vmem:[#allocation3 + $0xc0] sm:$0xf] %vm2466, %v2403
        %2484 = vst.msk [vmem:[#allocation3 + $0xcc] sm:$0xf] %vm2466, %v2405
        %2485 = vst.msk [vmem:[#allocation3 + $0xd8] sm:$0xf] %vm2466, %v2407
        %2486 = vst.msk [vmem:[#allocation3 + $0xe4] sm:$0xf] %vm2466, %v2409
        %2487 = vst.msk [vmem:[#allocation3 + $0xf0] sm:$0xf] %vm2466, %v2411
        %2488 = vst.msk [vmem:[#allocation3 + $0xfc] sm:$0xf] %vm2466, %v2413
        %2489 = vst.msk [vmem:[#allocation3 + $0x108] sm:$0xf] %vm2466, %v2415
        %2490 = vst.msk [vmem:[#allocation3 + $0x114] sm:$0xf] %vm2466, %v2417
        %2491 = vst.msk [vmem:[#allocation3 + $0x120] sm:$0xf] %vm2466, %v2419
        %2492 = vst.msk [vmem:[#allocation3 + $0x12c] sm:$0xf] %vm2466, %v2421
        %2493 = vst.msk [vmem:[#allocation3 + $0x138] sm:$0xf] %vm2466, %v2423
        %2494 = vst.msk [vmem:[#allocation3 + $0x144] sm:$0xf] %vm2466, %v2425
        %2495 = vst.msk [vmem:[#allocation3 + $0x150] sm:$0xf] %vm2466, %v2427
        %2496 = vst.msk [vmem:[#allocation3 + $0x15c] sm:$0xf] %vm2466, %v2429
        %2497 = vst.msk [vmem:[#allocation3 + $0x168] sm:$0xf] %vm2466, %v2431
        %2498 = vst.msk [vmem:[#allocation3 + $0x174] sm:$0xf] %vm2466, %v2433
        %s2499 = scalar_lea.vmem [#allocation2], 12
        %v2500 = vld [vmem:[%s2499] sm:$0xf]
        %v2501 = vld [vmem:[%s2499 + $0x4] sm:$0xf]
        %v2502 = vld [vmem:[%s2499 + $0xc] sm:$0xf]
        %v2503 = vld [vmem:[%s2499 + $0x10] sm:$0xf]
        %v2504 = vld [vmem:[%s2499 + $0x18] sm:$0xf]
        %v2505 = vld [vmem:[%s2499 + $0x1c] sm:$0xf]
        %v2506 = vld [vmem:[%s2499 + $0x24] sm:$0xf]
        %v2507 = vld [vmem:[%s2499 + $0x28] sm:$0xf]
        %v2508 = vld [vmem:[%s2499 + $0x30] sm:$0xf]
        %v2509 = vld [vmem:[%s2499 + $0x34] sm:$0xf]
        %v2510 = vld [vmem:[%s2499 + $0x3c] sm:$0xf]
        %v2511 = vld [vmem:[%s2499 + $0x40] sm:$0xf]
        %v2512 = vld [vmem:[%s2499 + $0x48] sm:$0xf]
        %v2513 = vld [vmem:[%s2499 + $0x4c] sm:$0xf]
        %v2514 = vld [vmem:[%s2499 + $0x54] sm:$0xf]
        %v2515 = vld [vmem:[%s2499 + $0x58] sm:$0xf]
        %v2516 = vld [vmem:[%s2499 + $0x60] sm:$0xf]
        %v2517 = vld [vmem:[%s2499 + $0x64] sm:$0xf]
        %v2518 = vld [vmem:[%s2499 + $0x6c] sm:$0xf]
        %v2519 = vld [vmem:[%s2499 + $0x70] sm:$0xf]
        %v2520 = vld [vmem:[%s2499 + $0x78] sm:$0xf]
        %v2521 = vld [vmem:[%s2499 + $0x7c] sm:$0xf]
        %v2522 = vld [vmem:[%s2499 + $0x84] sm:$0xf]
        %v2523 = vld [vmem:[%s2499 + $0x88] sm:$0xf]
        %v2524 = vld [vmem:[%s2499 + $0x90] sm:$0xf]
        %v2525 = vld [vmem:[%s2499 + $0x94] sm:$0xf]
        %v2526 = vld [vmem:[%s2499 + $0x9c] sm:$0xf]
        %v2527 = vld [vmem:[%s2499 + $0xa0] sm:$0xf]
        %v2528 = vld [vmem:[%s2499 + $0xa8] sm:$0xf]
        %v2529 = vld [vmem:[%s2499 + $0xac] sm:$0xf]
        %v2530 = vld [vmem:[%s2499 + $0xb4] sm:$0xf]
        %v2531 = vld [vmem:[%s2499 + $0xb8] sm:$0xf]
        %2564 = vrot.lane.b32.xlu0 %v2500, 96
        %v2565 = vpop.permute.xlu0 %2564
        %2566 = vrot.lane.b32.xlu0 %v2501, 96
        %v2567 = vpop.permute.xlu0 %2566
        %2568 = vrot.lane.b32.xlu0 %v2502, 96
        %v2569 = vpop.permute.xlu0 %2568
        %2570 = vrot.lane.b32.xlu0 %v2503, 96
        %v2571 = vpop.permute.xlu0 %2570
        %2572 = vrot.lane.b32.xlu0 %v2504, 96
        %v2573 = vpop.permute.xlu0 %2572
        %2574 = vrot.lane.b32.xlu0 %v2505, 96
        %v2575 = vpop.permute.xlu0 %2574
        %2576 = vrot.lane.b32.xlu0 %v2506, 96
        %v2577 = vpop.permute.xlu0 %2576
        %2578 = vrot.lane.b32.xlu0 %v2507, 96
        %v2579 = vpop.permute.xlu0 %2578
        %2580 = vrot.lane.b32.xlu0 %v2508, 96
        %v2581 = vpop.permute.xlu0 %2580
        %2582 = vrot.lane.b32.xlu0 %v2509, 96
        %v2583 = vpop.permute.xlu0 %2582
        %2584 = vrot.lane.b32.xlu0 %v2510, 96
        %v2585 = vpop.permute.xlu0 %2584
        %2586 = vrot.lane.b32.xlu0 %v2511, 96
        %v2587 = vpop.permute.xlu0 %2586
        %2588 = vrot.lane.b32.xlu0 %v2512, 96
        %v2589 = vpop.permute.xlu0 %2588
        %2590 = vrot.lane.b32.xlu0 %v2513, 96
        %v2591 = vpop.permute.xlu0 %2590
        %2592 = vrot.lane.b32.xlu0 %v2514, 96
        %v2593 = vpop.permute.xlu0 %2592
        %2594 = vrot.lane.b32.xlu0 %v2515, 96
        %v2595 = vpop.permute.xlu0 %2594
        %2596 = vrot.lane.b32.xlu0 %v2516, 96
        %v2597 = vpop.permute.xlu0 %2596
        %2598 = vrot.lane.b32.xlu0 %v2517, 96
        %v2599 = vpop.permute.xlu0 %2598
        %2600 = vrot.lane.b32.xlu0 %v2518, 96
        %v2601 = vpop.permute.xlu0 %2600
        %2602 = vrot.lane.b32.xlu0 %v2519, 96
        %v2603 = vpop.permute.xlu0 %2602
        %2604 = vrot.lane.b32.xlu0 %v2520, 96
        %v2605 = vpop.permute.xlu0 %2604
        %2606 = vrot.lane.b32.xlu0 %v2521, 96
        %v2607 = vpop.permute.xlu0 %2606
        %2608 = vrot.lane.b32.xlu0 %v2522, 96
        %v2609 = vpop.permute.xlu0 %2608
        %2610 = vrot.lane.b32.xlu0 %v2523, 96
        %v2611 = vpop.permute.xlu0 %2610
        %2612 = vrot.lane.b32.xlu0 %v2524, 96
        %v2613 = vpop.permute.xlu0 %2612
        %2614 = vrot.lane.b32.xlu0 %v2525, 96
        %v2615 = vpop.permute.xlu0 %2614
        %2616 = vrot.lane.b32.xlu0 %v2526, 96
        %v2617 = vpop.permute.xlu0 %2616
        %2618 = vrot.lane.b32.xlu0 %v2527, 96
        %v2619 = vpop.permute.xlu0 %2618
        %2620 = vrot.lane.b32.xlu0 %v2528, 96
        %v2621 = vpop.permute.xlu0 %2620
        %2622 = vrot.lane.b32.xlu0 %v2529, 96
        %v2623 = vpop.permute.xlu0 %2622
        %2624 = vrot.lane.b32.xlu0 %v2530, 96
        %v2625 = vpop.permute.xlu0 %2624
        %2626 = vrot.lane.b32.xlu0 %v2531, 96
        %v2627 = vpop.permute.xlu0 %2626
        %vm2660 = vcmask 1044224
        %2661 = vst.msk [vmem:[#allocation3] sm:$0xf] %vm2660, %v2565
        %2662 = vst.msk [vmem:[#allocation3 + $0xc] sm:$0xf] %vm2660, %v2567
        %2663 = vst.msk [vmem:[#allocation3 + $0x18] sm:$0xf] %vm2660, %v2569
        %2664 = vst.msk [vmem:[#allocation3 + $0x24] sm:$0xf] %vm2660, %v2571
        %2665 = vst.msk [vmem:[#allocation3 + $0x30] sm:$0xf] %vm2660, %v2573
        %2666 = vst.msk [vmem:[#allocation3 + $0x3c] sm:$0xf] %vm2660, %v2575
        %2667 = vst.msk [vmem:[#allocation3 + $0x48] sm:$0xf] %vm2660, %v2577
        %2668 = vst.msk [vmem:[#allocation3 + $0x54] sm:$0xf] %vm2660, %v2579
        %2669 = vst.msk [vmem:[#allocation3 + $0x60] sm:$0xf] %vm2660, %v2581
        %2670 = vst.msk [vmem:[#allocation3 + $0x6c] sm:$0xf] %vm2660, %v2583
        %2671 = vst.msk [vmem:[#allocation3 + $0x78] sm:$0xf] %vm2660, %v2585
        %2672 = vst.msk [vmem:[#allocation3 + $0x84] sm:$0xf] %vm2660, %v2587
        %2673 = vst.msk [vmem:[#allocation3 + $0x90] sm:$0xf] %vm2660, %v2589
        %2674 = vst.msk [vmem:[#allocation3 + $0x9c] sm:$0xf] %vm2660, %v2591
        %2675 = vst.msk [vmem:[#allocation3 + $0xa8] sm:$0xf] %vm2660, %v2593
        %2676 = vst.msk [vmem:[#allocation3 + $0xb4] sm:$0xf] %vm2660, %v2595
        %2677 = vst.msk [vmem:[#allocation3 + $0xc0] sm:$0xf] %vm2660, %v2597
        %2678 = vst.msk [vmem:[#allocation3 + $0xcc] sm:$0xf] %vm2660, %v2599
        %2679 = vst.msk [vmem:[#allocation3 + $0xd8] sm:$0xf] %vm2660, %v2601
        %2680 = vst.msk [vmem:[#allocation3 + $0xe4] sm:$0xf] %vm2660, %v2603
        %2681 = vst.msk [vmem:[#allocation3 + $0xf0] sm:$0xf] %vm2660, %v2605
        %2682 = vst.msk [vmem:[#allocation3 + $0xfc] sm:$0xf] %vm2660, %v2607
        %2683 = vst.msk [vmem:[#allocation3 + $0x108] sm:$0xf] %vm2660, %v2609
        %2684 = vst.msk [vmem:[#allocation3 + $0x114] sm:$0xf] %vm2660, %v2611
        %2685 = vst.msk [vmem:[#allocation3 + $0x120] sm:$0xf] %vm2660, %v2613
        %2686 = vst.msk [vmem:[#allocation3 + $0x12c] sm:$0xf] %vm2660, %v2615
        %2687 = vst.msk [vmem:[#allocation3 + $0x138] sm:$0xf] %vm2660, %v2617
        %2688 = vst.msk [vmem:[#allocation3 + $0x144] sm:$0xf] %vm2660, %v2619
        %2689 = vst.msk [vmem:[#allocation3 + $0x150] sm:$0xf] %vm2660, %v2621
        %2690 = vst.msk [vmem:[#allocation3 + $0x15c] sm:$0xf] %vm2660, %v2623
        %2691 = vst.msk [vmem:[#allocation3 + $0x168] sm:$0xf] %vm2660, %v2625
        %2692 = vst.msk [vmem:[#allocation3 + $0x174] sm:$0xf] %vm2660, %v2627
        %v2693 = vld [vmem:[%s2499] sm:$0xf]
        %v2694 = vld [vmem:[%s2499 + $0x4] sm:$0xf]
        %v2695 = vld [vmem:[%s2499 + $0x8] sm:$0x1]
        %v2696 = vld [vmem:[%s2499 + $0xc] sm:$0xf]
        %v2697 = vld [vmem:[%s2499 + $0x10] sm:$0xf]
        %v2698 = vld [vmem:[%s2499 + $0x14] sm:$0x1]
        %v2699 = vld [vmem:[%s2499 + $0x18] sm:$0xf]
        %v2700 = vld [vmem:[%s2499 + $0x1c] sm:$0xf]
        %v2701 = vld [vmem:[%s2499 + $0x20] sm:$0x1]
        %v2702 = vld [vmem:[%s2499 + $0x24] sm:$0xf]
        %v2703 = vld [vmem:[%s2499 + $0x28] sm:$0xf]
        %v2704 = vld [vmem:[%s2499 + $0x2c] sm:$0x1]
        %v2705 = vld [vmem:[%s2499 + $0x30] sm:$0xf]
        %v2706 = vld [vmem:[%s2499 + $0x34] sm:$0xf]
        %v2707 = vld [vmem:[%s2499 + $0x38] sm:$0x1]
        %v2708 = vld [vmem:[%s2499 + $0x3c] sm:$0xf]
        %v2709 = vld [vmem:[%s2499 + $0x40] sm:$0xf]
        %v2710 = vld [vmem:[%s2499 + $0x44] sm:$0x1]
        %v2711 = vld [vmem:[%s2499 + $0x48] sm:$0xf]
        %v2712 = vld [vmem:[%s2499 + $0x4c] sm:$0xf]
        %v2713 = vld [vmem:[%s2499 + $0x50] sm:$0x1]
        %v2714 = vld [vmem:[%s2499 + $0x54] sm:$0xf]
        %v2715 = vld [vmem:[%s2499 + $0x58] sm:$0xf]
        %v2716 = vld [vmem:[%s2499 + $0x5c] sm:$0x1]
        %v2717 = vld [vmem:[%s2499 + $0x60] sm:$0xf]
        %v2718 = vld [vmem:[%s2499 + $0x64] sm:$0xf]
        %v2719 = vld [vmem:[%s2499 + $0x68] sm:$0x1]
        %v2720 = vld [vmem:[%s2499 + $0x6c] sm:$0xf]
        %v2721 = vld [vmem:[%s2499 + $0x70] sm:$0xf]
        %v2722 = vld [vmem:[%s2499 + $0x74] sm:$0x1]
        %v2723 = vld [vmem:[%s2499 + $0x78] sm:$0xf]
        %v2724 = vld [vmem:[%s2499 + $0x7c] sm:$0xf]
        %v2725 = vld [vmem:[%s2499 + $0x80] sm:$0x1]
        %v2726 = vld [vmem:[%s2499 + $0x84] sm:$0xf]
        %v2727 = vld [vmem:[%s2499 + $0x88] sm:$0xf]
        %v2728 = vld [vmem:[%s2499 + $0x8c] sm:$0x1]
        %v2729 = vld [vmem:[%s2499 + $0x90] sm:$0xf]
        %v2730 = vld [vmem:[%s2499 + $0x94] sm:$0xf]
        %v2731 = vld [vmem:[%s2499 + $0x98] sm:$0x1]
        %v2732 = vld [vmem:[%s2499 + $0x9c] sm:$0xf]
        %v2733 = vld [vmem:[%s2499 + $0xa0] sm:$0xf]
        %v2734 = vld [vmem:[%s2499 + $0xa4] sm:$0x1]
        %v2735 = vld [vmem:[%s2499 + $0xa8] sm:$0xf]
        %v2736 = vld [vmem:[%s2499 + $0xac] sm:$0xf]
        %v2737 = vld [vmem:[%s2499 + $0xb0] sm:$0x1]
        %v2738 = vld [vmem:[%s2499 + $0xb4] sm:$0xf]
        %v2739 = vld [vmem:[%s2499 + $0xb8] sm:$0xf]
        %v2740 = vld [vmem:[%s2499 + $0xbc] sm:$0x1]
        %v2742 = vshrl.u32 %v2693, 16
        %v2744 = vrot.slane %v2742, 4
        %v2745 = vshll.u32 %v2693, 16
        %v2747 = vrot.slane %v2745, 5
        %v2748 = vor.u32 %v2744, %v2747
        %v2749 = vrot.slane %v2748, 4
        %v2751 = vshll.u32 %v2694, 16
        %v2753 = vrot.slane %v2751, 5
        %v2754 = vsel %vm1645, %v2749, %v2753
        %v2755 = vshrl.u32 %v2694, 16
        %v2757 = vrot.slane %v2755, 4
        %v2758 = vor.u32 %v2757, %v2753
        %v2759 = vrot.slane %v2758, 4
        %v2761 = vshll.u32 %v2695, 16
        %v2763 = vrot.slane %v2761, 5
        %v2764 = vsel %vm1645, %v2759, %v2763
        %v2766 = vshrl.u32 %v2696, 16
        %v2768 = vrot.slane %v2766, 4
        %v2769 = vshll.u32 %v2696, 16
        %v2771 = vrot.slane %v2769, 5
        %v2772 = vor.u32 %v2768, %v2771
        %v2773 = vrot.slane %v2772, 4
        %v2775 = vshll.u32 %v2697, 16
        %v2777 = vrot.slane %v2775, 5
        %v2778 = vsel %vm1645, %v2773, %v2777
        %v2779 = vshrl.u32 %v2697, 16
        %v2781 = vrot.slane %v2779, 4
        %v2782 = vor.u32 %v2781, %v2777
        %v2783 = vrot.slane %v2782, 4
        %v2785 = vshll.u32 %v2698, 16
        %v2787 = vrot.slane %v2785, 5
        %v2788 = vsel %vm1645, %v2783, %v2787
        %v2790 = vshrl.u32 %v2699, 16
        %v2792 = vrot.slane %v2790, 4
        %v2793 = vshll.u32 %v2699, 16
        %v2795 = vrot.slane %v2793, 5
        %v2796 = vor.u32 %v2792, %v2795
        %v2797 = vrot.slane %v2796, 4
        %v2799 = vshll.u32 %v2700, 16
        %v2801 = vrot.slane %v2799, 5
        %v2802 = vsel %vm1645, %v2797, %v2801
        %v2803 = vshrl.u32 %v2700, 16
        %v2805 = vrot.slane %v2803, 4
        %v2806 = vor.u32 %v2805, %v2801
        %v2807 = vrot.slane %v2806, 4
        %v2809 = vshll.u32 %v2701, 16
        %v2811 = vrot.slane %v2809, 5
        %v2812 = vsel %vm1645, %v2807, %v2811
        %v2814 = vshrl.u32 %v2702, 16
        %v2816 = vrot.slane %v2814, 4
        %v2817 = vshll.u32 %v2702, 16
        %v2819 = vrot.slane %v2817, 5
        %v2820 = vor.u32 %v2816, %v2819
        %v2821 = vrot.slane %v2820, 4
        %v2823 = vshll.u32 %v2703, 16
        %v2825 = vrot.slane %v2823, 5
        %v2826 = vsel %vm1645, %v2821, %v2825
        %v2827 = vshrl.u32 %v2703, 16
        %v2829 = vrot.slane %v2827, 4
        %v2830 = vor.u32 %v2829, %v2825
        %v2831 = vrot.slane %v2830, 4
        %v2833 = vshll.u32 %v2704, 16
        %v2835 = vrot.slane %v2833, 5
        %v2836 = vsel %vm1645, %v2831, %v2835
        %v2838 = vshrl.u32 %v2705, 16
        %v2840 = vrot.slane %v2838, 4
        %v2841 = vshll.u32 %v2705, 16
        %v2843 = vrot.slane %v2841, 5
        %v2844 = vor.u32 %v2840, %v2843
        %v2845 = vrot.slane %v2844, 4
        %v2847 = vshll.u32 %v2706, 16
        %v2849 = vrot.slane %v2847, 5
        %v2850 = vsel %vm1645, %v2845, %v2849
        %v2851 = vshrl.u32 %v2706, 16
        %v2853 = vrot.slane %v2851, 4
        %v2854 = vor.u32 %v2853, %v2849
        %v2855 = vrot.slane %v2854, 4
        %v2857 = vshll.u32 %v2707, 16
        %v2859 = vrot.slane %v2857, 5
        %v2860 = vsel %vm1645, %v2855, %v2859
        %v2862 = vshrl.u32 %v2708, 16
        %v2864 = vrot.slane %v2862, 4
        %v2865 = vshll.u32 %v2708, 16
        %v2867 = vrot.slane %v2865, 5
        %v2868 = vor.u32 %v2864, %v2867
        %v2869 = vrot.slane %v2868, 4
        %v2871 = vshll.u32 %v2709, 16
        %v2873 = vrot.slane %v2871, 5
        %v2874 = vsel %vm1645, %v2869, %v2873
        %v2875 = vshrl.u32 %v2709, 16
        %v2877 = vrot.slane %v2875, 4
        %v2878 = vor.u32 %v2877, %v2873
        %v2879 = vrot.slane %v2878, 4
        %v2881 = vshll.u32 %v2710, 16
        %v2883 = vrot.slane %v2881, 5
        %v2884 = vsel %vm1645, %v2879, %v2883
        %v2886 = vshrl.u32 %v2711, 16
        %v2888 = vrot.slane %v2886, 4
        %v2889 = vshll.u32 %v2711, 16
        %v2891 = vrot.slane %v2889, 5
        %v2892 = vor.u32 %v2888, %v2891
        %v2893 = vrot.slane %v2892, 4
        %v2895 = vshll.u32 %v2712, 16
        %v2897 = vrot.slane %v2895, 5
        %v2898 = vsel %vm1645, %v2893, %v2897
        %v2899 = vshrl.u32 %v2712, 16
        %v2901 = vrot.slane %v2899, 4
        %v2902 = vor.u32 %v2901, %v2897
        %v2903 = vrot.slane %v2902, 4
        %v2905 = vshll.u32 %v2713, 16
        %v2907 = vrot.slane %v2905, 5
        %v2908 = vsel %vm1645, %v2903, %v2907
        %v2910 = vshrl.u32 %v2714, 16
        %v2912 = vrot.slane %v2910, 4
        %v2913 = vshll.u32 %v2714, 16
        %v2915 = vrot.slane %v2913, 5
        %v2916 = vor.u32 %v2912, %v2915
        %v2917 = vrot.slane %v2916, 4
        %v2919 = vshll.u32 %v2715, 16
        %v2921 = vrot.slane %v2919, 5
        %v2922 = vsel %vm1645, %v2917, %v2921
        %v2923 = vshrl.u32 %v2715, 16
        %v2925 = vrot.slane %v2923, 4
        %v2926 = vor.u32 %v2925, %v2921
        %v2927 = vrot.slane %v2926, 4
        %v2929 = vshll.u32 %v2716, 16
        %v2931 = vrot.slane %v2929, 5
        %v2932 = vsel %vm1645, %v2927, %v2931
        %v2934 = vshrl.u32 %v2717, 16
        %v2936 = vrot.slane %v2934, 4
        %v2937 = vshll.u32 %v2717, 16
        %v2939 = vrot.slane %v2937, 5
        %v2940 = vor.u32 %v2936, %v2939
        %v2941 = vrot.slane %v2940, 4
        %v2943 = vshll.u32 %v2718, 16
        %v2945 = vrot.slane %v2943, 5
        %v2946 = vsel %vm1645, %v2941, %v2945
        %v2947 = vshrl.u32 %v2718, 16
        %v2949 = vrot.slane %v2947, 4
        %v2950 = vor.u32 %v2949, %v2945
        %v2951 = vrot.slane %v2950, 4
        %v2953 = vshll.u32 %v2719, 16
        %v2955 = vrot.slane %v2953, 5
        %v2956 = vsel %vm1645, %v2951, %v2955
        %v2958 = vshrl.u32 %v2720, 16
        %v2960 = vrot.slane %v2958, 4
        %v2961 = vshll.u32 %v2720, 16
        %v2963 = vrot.slane %v2961, 5
        %v2964 = vor.u32 %v2960, %v2963
        %v2965 = vrot.slane %v2964, 4
        %v2967 = vshll.u32 %v2721, 16
        %v2969 = vrot.slane %v2967, 5
        %v2970 = vsel %vm1645, %v2965, %v2969
        %v2971 = vshrl.u32 %v2721, 16
        %v2973 = vrot.slane %v2971, 4
        %v2974 = vor.u32 %v2973, %v2969
        %v2975 = vrot.slane %v2974, 4
        %v2977 = vshll.u32 %v2722, 16
        %v2979 = vrot.slane %v2977, 5
        %v2980 = vsel %vm1645, %v2975, %v2979
        %v2982 = vshrl.u32 %v2723, 16
        %v2984 = vrot.slane %v2982, 4
        %v2985 = vshll.u32 %v2723, 16
        %v2987 = vrot.slane %v2985, 5
        %v2988 = vor.u32 %v2984, %v2987
        %v2989 = vrot.slane %v2988, 4
        %v2991 = vshll.u32 %v2724, 16
        %v2993 = vrot.slane %v2991, 5
        %v2994 = vsel %vm1645, %v2989, %v2993
        %v2995 = vshrl.u32 %v2724, 16
        %v2997 = vrot.slane %v2995, 4
        %v2998 = vor.u32 %v2997, %v2993
        %v2999 = vrot.slane %v2998, 4
        %v3001 = vshll.u32 %v2725, 16
        %v3003 = vrot.slane %v3001, 5
        %v3004 = vsel %vm1645, %v2999, %v3003
        %v3006 = vshrl.u32 %v2726, 16
        %v3008 = vrot.slane %v3006, 4
        %v3009 = vshll.u32 %v2726, 16
        %v3011 = vrot.slane %v3009, 5
        %v3012 = vor.u32 %v3008, %v3011
        %v3013 = vrot.slane %v3012, 4
        %v3015 = vshll.u32 %v2727, 16
        %v3017 = vrot.slane %v3015, 5
        %v3018 = vsel %vm1645, %v3013, %v3017
        %v3019 = vshrl.u32 %v2727, 16
        %v3021 = vrot.slane %v3019, 4
        %v3022 = vor.u32 %v3021, %v3017
        %v3023 = vrot.slane %v3022, 4
        %v3025 = vshll.u32 %v2728, 16
        %v3027 = vrot.slane %v3025, 5
        %v3028 = vsel %vm1645, %v3023, %v3027
        %v3030 = vshrl.u32 %v2729, 16
        %v3032 = vrot.slane %v3030, 4
        %v3033 = vshll.u32 %v2729, 16
        %v3035 = vrot.slane %v3033, 5
        %v3036 = vor.u32 %v3032, %v3035
        %v3037 = vrot.slane %v3036, 4
        %v3039 = vshll.u32 %v2730, 16
        %v3041 = vrot.slane %v3039, 5
        %v3042 = vsel %vm1645, %v3037, %v3041
        %v3043 = vshrl.u32 %v2730, 16
        %v3045 = vrot.slane %v3043, 4
        %v3046 = vor.u32 %v3045, %v3041
        %v3047 = vrot.slane %v3046, 4
        %v3049 = vshll.u32 %v2731, 16
        %v3051 = vrot.slane %v3049, 5
        %v3052 = vsel %vm1645, %v3047, %v3051
        %v3054 = vshrl.u32 %v2732, 16
        %v3056 = vrot.slane %v3054, 4
        %v3057 = vshll.u32 %v2732, 16
        %v3059 = vrot.slane %v3057, 5
        %v3060 = vor.u32 %v3056, %v3059
        %v3061 = vrot.slane %v3060, 4
        %v3063 = vshll.u32 %v2733, 16
        %v3065 = vrot.slane %v3063, 5
        %v3066 = vsel %vm1645, %v3061, %v3065
        %v3067 = vshrl.u32 %v2733, 16
        %v3069 = vrot.slane %v3067, 4
        %v3070 = vor.u32 %v3069, %v3065
        %v3071 = vrot.slane %v3070, 4
        %v3073 = vshll.u32 %v2734, 16
        %v3075 = vrot.slane %v3073, 5
        %v3076 = vsel %vm1645, %v3071, %v3075
        %v3078 = vshrl.u32 %v2735, 16
        %v3080 = vrot.slane %v3078, 4
        %v3081 = vshll.u32 %v2735, 16
        %v3083 = vrot.slane %v3081, 5
        %v3084 = vor.u32 %v3080, %v3083
        %v3085 = vrot.slane %v3084, 4
        %v3087 = vshll.u32 %v2736, 16
        %v3089 = vrot.slane %v3087, 5
        %v3090 = vsel %vm1645, %v3085, %v3089
        %v3091 = vshrl.u32 %v2736, 16
        %v3093 = vrot.slane %v3091, 4
        %v3094 = vor.u32 %v3093, %v3089
        %v3095 = vrot.slane %v3094, 4
        %v3097 = vshll.u32 %v2737, 16
        %v3099 = vrot.slane %v3097, 5
        %v3100 = vsel %vm1645, %v3095, %v3099
        %v3102 = vshrl.u32 %v2738, 16
        %v3104 = vrot.slane %v3102, 4
        %v3105 = vshll.u32 %v2738, 16
        %v3107 = vrot.slane %v3105, 5
        %v3108 = vor.u32 %v3104, %v3107
        %v3109 = vrot.slane %v3108, 4
        %v3111 = vshll.u32 %v2739, 16
        %v3113 = vrot.slane %v3111, 5
        %v3114 = vsel %vm1645, %v3109, %v3113
        %v3115 = vshrl.u32 %v2739, 16
        %v3117 = vrot.slane %v3115, 4
        %v3118 = vor.u32 %v3117, %v3113
        %v3119 = vrot.slane %v3118, 4
        %v3121 = vshll.u32 %v2740, 16
        %v3123 = vrot.slane %v3121, 5
        %v3124 = vsel %vm1645, %v3119, %v3123
        %3157 = vst.msk [vmem:[#allocation3 + $0x4] sm:$0xf] %vm1395, %v2754
        %3158 = vst.msk [vmem:[#allocation3 + $0x10] sm:$0xf] %vm1395, %v2764
        %3159 = vst.msk [vmem:[#allocation3 + $0x1c] sm:$0xf] %vm1395, %v2778
        %3160 = vst.msk [vmem:[#allocation3 + $0x28] sm:$0xf] %vm1395, %v2788
        %3161 = vst.msk [vmem:[#allocation3 + $0x34] sm:$0xf] %vm1395, %v2802
        %3162 = vst.msk [vmem:[#allocation3 + $0x40] sm:$0xf] %vm1395, %v2812
        %3163 = vst.msk [vmem:[#allocation3 + $0x4c] sm:$0xf] %vm1395, %v2826
        %3164 = vst.msk [vmem:[#allocation3 + $0x58] sm:$0xf] %vm1395, %v2836
        %3165 = vst.msk [vmem:[#allocation3 + $0x64] sm:$0xf] %vm1395, %v2850
        %3166 = vst.msk [vmem:[#allocation3 + $0x70] sm:$0xf] %vm1395, %v2860
        %3167 = vst.msk [vmem:[#allocation3 + $0x7c] sm:$0xf] %vm1395, %v2874
        %3168 = vst.msk [vmem:[#allocation3 + $0x88] sm:$0xf] %vm1395, %v2884
        %3169 = vst.msk [vmem:[#allocation3 + $0x94] sm:$0xf] %vm1395, %v2898
        %3170 = vst.msk [vmem:[#allocation3 + $0xa0] sm:$0xf] %vm1395, %v2908
        %3171 = vst.msk [vmem:[#allocation3 + $0xac] sm:$0xf] %vm1395, %v2922
        %3172 = vst.msk [vmem:[#allocation3 + $0xb8] sm:$0xf] %vm1395, %v2932
        %3173 = vst.msk [vmem:[#allocation3 + $0xc4] sm:$0xf] %vm1395, %v2946
        %3174 = vst.msk [vmem:[#allocation3 + $0xd0] sm:$0xf] %vm1395, %v2956
        %3175 = vst.msk [vmem:[#allocation3 + $0xdc] sm:$0xf] %vm1395, %v2970
        %3176 = vst.msk [vmem:[#allocation3 + $0xe8] sm:$0xf] %vm1395, %v2980
        %3177 = vst.msk [vmem:[#allocation3 + $0xf4] sm:$0xf] %vm1395, %v2994
        %3178 = vst.msk [vmem:[#allocation3 + $0x100] sm:$0xf] %vm1395, %v3004
        %3179 = vst.msk [vmem:[#allocation3 + $0x10c] sm:$0xf] %vm1395, %v3018
        %3180 = vst.msk [vmem:[#allocation3 + $0x118] sm:$0xf] %vm1395, %v3028
        %3181 = vst.msk [vmem:[#allocation3 + $0x124] sm:$0xf] %vm1395, %v3042
        %3182 = vst.msk [vmem:[#allocation3 + $0x130] sm:$0xf] %vm1395, %v3052
        %3183 = vst.msk [vmem:[#allocation3 + $0x13c] sm:$0xf] %vm1395, %v3066
        %3184 = vst.msk [vmem:[#allocation3 + $0x148] sm:$0xf] %vm1395, %v3076
        %3185 = vst.msk [vmem:[#allocation3 + $0x154] sm:$0xf] %vm1395, %v3090
        %3186 = vst.msk [vmem:[#allocation3 + $0x160] sm:$0xf] %vm1395, %v3100
        %3187 = vst.msk [vmem:[#allocation3 + $0x16c] sm:$0xf] %vm1395, %v3114
        %3188 = vst.msk [vmem:[#allocation3 + $0x178] sm:$0xf] %vm1395, %v3124
        %v3189 = vld [vmem:[%s2499] sm:$0xe]
        %v3190 = vld [vmem:[%s2499 + $0x4] sm:$0xf]
        %v3191 = vld [vmem:[%s2499 + $0x8] sm:$0x1]
        %v3192 = vld [vmem:[%s2499 + $0xc] sm:$0xe]
        %v3193 = vld [vmem:[%s2499 + $0x10] sm:$0xf]
        %v3194 = vld [vmem:[%s2499 + $0x14] sm:$0x1]
        %v3195 = vld [vmem:[%s2499 + $0x18] sm:$0xe]
        %v3196 = vld [vmem:[%s2499 + $0x1c] sm:$0xf]
        %v3197 = vld [vmem:[%s2499 + $0x20] sm:$0x1]
        %v3198 = vld [vmem:[%s2499 + $0x24] sm:$0xe]
        %v3199 = vld [vmem:[%s2499 + $0x28] sm:$0xf]
        %v3200 = vld [vmem:[%s2499 + $0x2c] sm:$0x1]
        %v3201 = vld [vmem:[%s2499 + $0x30] sm:$0xe]
        %v3202 = vld [vmem:[%s2499 + $0x34] sm:$0xf]
        %v3203 = vld [vmem:[%s2499 + $0x38] sm:$0x1]
        %v3204 = vld [vmem:[%s2499 + $0x3c] sm:$0xe]
        %v3205 = vld [vmem:[%s2499 + $0x40] sm:$0xf]
        %v3206 = vld [vmem:[%s2499 + $0x44] sm:$0x1]
        %v3207 = vld [vmem:[%s2499 + $0x48] sm:$0xe]
        %v3208 = vld [vmem:[%s2499 + $0x4c] sm:$0xf]
        %v3209 = vld [vmem:[%s2499 + $0x50] sm:$0x1]
        %v3210 = vld [vmem:[%s2499 + $0x54] sm:$0xe]
        %v3211 = vld [vmem:[%s2499 + $0x58] sm:$0xf]
        %v3212 = vld [vmem:[%s2499 + $0x5c] sm:$0x1]
        %v3213 = vld [vmem:[%s2499 + $0x60] sm:$0xe]
        %v3214 = vld [vmem:[%s2499 + $0x64] sm:$0xf]
        %v3215 = vld [vmem:[%s2499 + $0x68] sm:$0x1]
        %v3216 = vld [vmem:[%s2499 + $0x6c] sm:$0xe]
        %v3217 = vld [vmem:[%s2499 + $0x70] sm:$0xf]
        %v3218 = vld [vmem:[%s2499 + $0x74] sm:$0x1]
        %v3219 = vld [vmem:[%s2499 + $0x78] sm:$0xe]
        %v3220 = vld [vmem:[%s2499 + $0x7c] sm:$0xf]
        %v3221 = vld [vmem:[%s2499 + $0x80] sm:$0x1]
        %v3222 = vld [vmem:[%s2499 + $0x84] sm:$0xe]
        %v3223 = vld [vmem:[%s2499 + $0x88] sm:$0xf]
        %v3224 = vld [vmem:[%s2499 + $0x8c] sm:$0x1]
        %v3225 = vld [vmem:[%s2499 + $0x90] sm:$0xe]
        %v3226 = vld [vmem:[%s2499 + $0x94] sm:$0xf]
        %v3227 = vld [vmem:[%s2499 + $0x98] sm:$0x1]
        %v3228 = vld [vmem:[%s2499 + $0x9c] sm:$0xe]
        %v3229 = vld [vmem:[%s2499 + $0xa0] sm:$0xf]
        %v3230 = vld [vmem:[%s2499 + $0xa4] sm:$0x1]
        %v3231 = vld [vmem:[%s2499 + $0xa8] sm:$0xe]
        %v3232 = vld [vmem:[%s2499 + $0xac] sm:$0xf]
        %v3233 = vld [vmem:[%s2499 + $0xb0] sm:$0x1]
        %v3234 = vld [vmem:[%s2499 + $0xb4] sm:$0xe]
        %v3235 = vld [vmem:[%s2499 + $0xb8] sm:$0xf]
        %v3236 = vld [vmem:[%s2499 + $0xbc] sm:$0x1]
        %v3285 = vrot.slane %v3189, 5
        %v3286 = vrot.slane %v3285, 4
        %v3287 = vrot.slane %v3190, 5
        %v3288 = vsel %vm2257, %v3286, %v3287
        %v3289 = vrot.slane %v3287, 4
        %v3290 = vrot.slane %v3191, 5
        %v3291 = vsel %vm2257, %v3289, %v3290
        %v3292 = vrot.slane %v3192, 5
        %v3293 = vrot.slane %v3292, 4
        %v3294 = vrot.slane %v3193, 5
        %v3295 = vsel %vm2257, %v3293, %v3294
        %v3296 = vrot.slane %v3294, 4
        %v3297 = vrot.slane %v3194, 5
        %v3298 = vsel %vm2257, %v3296, %v3297
        %v3299 = vrot.slane %v3195, 5
        %v3300 = vrot.slane %v3299, 4
        %v3301 = vrot.slane %v3196, 5
        %v3302 = vsel %vm2257, %v3300, %v3301
        %v3303 = vrot.slane %v3301, 4
        %v3304 = vrot.slane %v3197, 5
        %v3305 = vsel %vm2257, %v3303, %v3304
        %v3306 = vrot.slane %v3198, 5
        %v3307 = vrot.slane %v3306, 4
        %v3308 = vrot.slane %v3199, 5
        %v3309 = vsel %vm2257, %v3307, %v3308
        %v3310 = vrot.slane %v3308, 4
        %v3311 = vrot.slane %v3200, 5
        %v3312 = vsel %vm2257, %v3310, %v3311
        %v3313 = vrot.slane %v3201, 5
        %v3314 = vrot.slane %v3313, 4
        %v3315 = vrot.slane %v3202, 5
        %v3316 = vsel %vm2257, %v3314, %v3315
        %v3317 = vrot.slane %v3315, 4
        %v3318 = vrot.slane %v3203, 5
        %v3319 = vsel %vm2257, %v3317, %v3318
        %v3320 = vrot.slane %v3204, 5
        %v3321 = vrot.slane %v3320, 4
        %v3322 = vrot.slane %v3205, 5
        %v3323 = vsel %vm2257, %v3321, %v3322
        %v3324 = vrot.slane %v3322, 4
        %v3325 = vrot.slane %v3206, 5
        %v3326 = vsel %vm2257, %v3324, %v3325
        %v3327 = vrot.slane %v3207, 5
        %v3328 = vrot.slane %v3327, 4
        %v3329 = vrot.slane %v3208, 5
        %v3330 = vsel %vm2257, %v3328, %v3329
        %v3331 = vrot.slane %v3329, 4
        %v3332 = vrot.slane %v3209, 5
        %v3333 = vsel %vm2257, %v3331, %v3332
        %v3334 = vrot.slane %v3210, 5
        %v3335 = vrot.slane %v3334, 4
        %v3336 = vrot.slane %v3211, 5
        %v3337 = vsel %vm2257, %v3335, %v3336
        %v3338 = vrot.slane %v3336, 4
        %v3339 = vrot.slane %v3212, 5
        %v3340 = vsel %vm2257, %v3338, %v3339
        %v3341 = vrot.slane %v3213, 5
        %v3342 = vrot.slane %v3341, 4
        %v3343 = vrot.slane %v3214, 5
        %v3344 = vsel %vm2257, %v3342, %v3343
        %v3345 = vrot.slane %v3343, 4
        %v3346 = vrot.slane %v3215, 5
        %v3347 = vsel %vm2257, %v3345, %v3346
        %v3348 = vrot.slane %v3216, 5
        %v3349 = vrot.slane %v3348, 4
        %v3350 = vrot.slane %v3217, 5
        %v3351 = vsel %vm2257, %v3349, %v3350
        %v3352 = vrot.slane %v3350, 4
        %v3353 = vrot.slane %v3218, 5
        %v3354 = vsel %vm2257, %v3352, %v3353
        %v3355 = vrot.slane %v3219, 5
        %v3356 = vrot.slane %v3355, 4
        %v3357 = vrot.slane %v3220, 5
        %v3358 = vsel %vm2257, %v3356, %v3357
        %v3359 = vrot.slane %v3357, 4
        %v3360 = vrot.slane %v3221, 5
        %v3361 = vsel %vm2257, %v3359, %v3360
        %v3362 = vrot.slane %v3222, 5
        %v3363 = vrot.slane %v3362, 4
        %v3364 = vrot.slane %v3223, 5
        %v3365 = vsel %vm2257, %v3363, %v3364
        %v3366 = vrot.slane %v3364, 4
        %v3367 = vrot.slane %v3224, 5
        %v3368 = vsel %vm2257, %v3366, %v3367
        %v3369 = vrot.slane %v3225, 5
        %v3370 = vrot.slane %v3369, 4
        %v3371 = vrot.slane %v3226, 5
        %v3372 = vsel %vm2257, %v3370, %v3371
        %v3373 = vrot.slane %v3371, 4
        %v3374 = vrot.slane %v3227, 5
        %v3375 = vsel %vm2257, %v3373, %v3374
        %v3376 = vrot.slane %v3228, 5
        %v3377 = vrot.slane %v3376, 4
        %v3378 = vrot.slane %v3229, 5
        %v3379 = vsel %vm2257, %v3377, %v3378
        %v3380 = vrot.slane %v3378, 4
        %v3381 = vrot.slane %v3230, 5
        %v3382 = vsel %vm2257, %v3380, %v3381
        %v3383 = vrot.slane %v3231, 5
        %v3384 = vrot.slane %v3383, 4
        %v3385 = vrot.slane %v3232, 5
        %v3386 = vsel %vm2257, %v3384, %v3385
        %v3387 = vrot.slane %v3385, 4
        %v3388 = vrot.slane %v3233, 5
        %v3389 = vsel %vm2257, %v3387, %v3388
        %v3390 = vrot.slane %v3234, 5
        %v3391 = vrot.slane %v3390, 4
        %v3392 = vrot.slane %v3235, 5
        %v3393 = vsel %vm2257, %v3391, %v3392
        %v3394 = vrot.slane %v3392, 4
        %v3395 = vrot.slane %v3236, 5
        %v3396 = vsel %vm2257, %v3394, %v3395
        %3397 = vrot.lane.b32.xlu0 %v3288, 32
        %v3398 = vpop.permute.xlu0 %3397
        %3399 = vrot.lane.b32.xlu0 %v3291, 32
        %v3400 = vpop.permute.xlu0 %3399
        %3401 = vrot.lane.b32.xlu0 %v3295, 32
        %v3402 = vpop.permute.xlu0 %3401
        %3403 = vrot.lane.b32.xlu0 %v3298, 32
        %v3404 = vpop.permute.xlu0 %3403
        %3405 = vrot.lane.b32.xlu0 %v3302, 32
        %v3406 = vpop.permute.xlu0 %3405
        %3407 = vrot.lane.b32.xlu0 %v3305, 32
        %v3408 = vpop.permute.xlu0 %3407
        %3409 = vrot.lane.b32.xlu0 %v3309, 32
        %v3410 = vpop.permute.xlu0 %3409
        %3411 = vrot.lane.b32.xlu0 %v3312, 32
        %v3412 = vpop.permute.xlu0 %3411
        %3413 = vrot.lane.b32.xlu0 %v3316, 32
        %v3414 = vpop.permute.xlu0 %3413
        %3415 = vrot.lane.b32.xlu0 %v3319, 32
        %v3416 = vpop.permute.xlu0 %3415
        %3417 = vrot.lane.b32.xlu0 %v3323, 32
        %v3418 = vpop.permute.xlu0 %3417
        %3419 = vrot.lane.b32.xlu0 %v3326, 32
        %v3420 = vpop.permute.xlu0 %3419
        %3421 = vrot.lane.b32.xlu0 %v3330, 32
        %v3422 = vpop.permute.xlu0 %3421
        %3423 = vrot.lane.b32.xlu0 %v3333, 32
        %v3424 = vpop.permute.xlu0 %3423
        %3425 = vrot.lane.b32.xlu0 %v3337, 32
        %v3426 = vpop.permute.xlu0 %3425
        %3427 = vrot.lane.b32.xlu0 %v3340, 32
        %v3428 = vpop.permute.xlu0 %3427
        %3429 = vrot.lane.b32.xlu0 %v3344, 32
        %v3430 = vpop.permute.xlu0 %3429
        %3431 = vrot.lane.b32.xlu0 %v3347, 32
        %v3432 = vpop.permute.xlu0 %3431
        %3433 = vrot.lane.b32.xlu0 %v3351, 32
        %v3434 = vpop.permute.xlu0 %3433
        %3435 = vrot.lane.b32.xlu0 %v3354, 32
        %v3436 = vpop.permute.xlu0 %3435
        %3437 = vrot.lane.b32.xlu0 %v3358, 32
        %v3438 = vpop.permute.xlu0 %3437
        %3439 = vrot.lane.b32.xlu0 %v3361, 32
        %v3440 = vpop.permute.xlu0 %3439
        %3441 = vrot.lane.b32.xlu0 %v3365, 32
        %v3442 = vpop.permute.xlu0 %3441
        %3443 = vrot.lane.b32.xlu0 %v3368, 32
        %v3444 = vpop.permute.xlu0 %3443
        %3445 = vrot.lane.b32.xlu0 %v3372, 32
        %v3446 = vpop.permute.xlu0 %3445
        %3447 = vrot.lane.b32.xlu0 %v3375, 32
        %v3448 = vpop.permute.xlu0 %3447
        %3449 = vrot.lane.b32.xlu0 %v3379, 32
        %v3450 = vpop.permute.xlu0 %3449
        %3451 = vrot.lane.b32.xlu0 %v3382, 32
        %v3452 = vpop.permute.xlu0 %3451
        %3453 = vrot.lane.b32.xlu0 %v3386, 32
        %v3454 = vpop.permute.xlu0 %3453
        %3455 = vrot.lane.b32.xlu0 %v3389, 32
        %v3456 = vpop.permute.xlu0 %3455
        %3457 = vrot.lane.b32.xlu0 %v3393, 32
        %v3458 = vpop.permute.xlu0 %3457
        %3459 = vrot.lane.b32.xlu0 %v3396, 32
        %v3460 = vpop.permute.xlu0 %3459
        %3493 = vst.msk [vmem:[#allocation3 + $0x4] sm:$0xf] %vm2126, %v3398
        %3494 = vst.msk [vmem:[#allocation3 + $0x10] sm:$0xf] %vm2126, %v3400
        %3495 = vst.msk [vmem:[#allocation3 + $0x1c] sm:$0xf] %vm2126, %v3402
        %3496 = vst.msk [vmem:[#allocation3 + $0x28] sm:$0xf] %vm2126, %v3404
        %3497 = vst.msk [vmem:[#allocation3 + $0x34] sm:$0xf] %vm2126, %v3406
        %3498 = vst.msk [vmem:[#allocation3 + $0x40] sm:$0xf] %vm2126, %v3408
        %3499 = vst.msk [vmem:[#allocation3 + $0x4c] sm:$0xf] %vm2126, %v3410
        %3500 = vst.msk [vmem:[#allocation3 + $0x58] sm:$0xf] %vm2126, %v3412
        %3501 = vst.msk [vmem:[#allocation3 + $0x64] sm:$0xf] %vm2126, %v3414
        %3502 = vst.msk [vmem:[#allocation3 + $0x70] sm:$0xf] %vm2126, %v3416
        %3503 = vst.msk [vmem:[#allocation3 + $0x7c] sm:$0xf] %vm2126, %v3418
        %3504 = vst.msk [vmem:[#allocation3 + $0x88] sm:$0xf] %vm2126, %v3420
        %3505 = vst.msk [vmem:[#allocation3 + $0x94] sm:$0xf] %vm2126, %v3422
        %3506 = vst.msk [vmem:[#allocation3 + $0xa0] sm:$0xf] %vm2126, %v3424
        %3507 = vst.msk [vmem:[#allocation3 + $0xac] sm:$0xf] %vm2126, %v3426
        %3508 = vst.msk [vmem:[#allocation3 + $0xb8] sm:$0xf] %vm2126, %v3428
        %3509 = vst.msk [vmem:[#allocation3 + $0xc4] sm:$0xf] %vm2126, %v3430
        %3510 = vst.msk [vmem:[#allocation3 + $0xd0] sm:$0xf] %vm2126, %v3432
        %3511 = vst.msk [vmem:[#allocation3 + $0xdc] sm:$0xf] %vm2126, %v3434
        %3512 = vst.msk [vmem:[#allocation3 + $0xe8] sm:$0xf] %vm2126, %v3436
        %3513 = vst.msk [vmem:[#allocation3 + $0xf4] sm:$0xf] %vm2126, %v3438
        %3514 = vst.msk [vmem:[#allocation3 + $0x100] sm:$0xf] %vm2126, %v3440
        %3515 = vst.msk [vmem:[#allocation3 + $0x10c] sm:$0xf] %vm2126, %v3442
        %3516 = vst.msk [vmem:[#allocation3 + $0x118] sm:$0xf] %vm2126, %v3444
        %3517 = vst.msk [vmem:[#allocation3 + $0x124] sm:$0xf] %vm2126, %v3446
        %3518 = vst.msk [vmem:[#allocation3 + $0x130] sm:$0xf] %vm2126, %v3448
        %3519 = vst.msk [vmem:[#allocation3 + $0x13c] sm:$0xf] %vm2126, %v3450
        %3520 = vst.msk [vmem:[#allocation3 + $0x148] sm:$0xf] %vm2126, %v3452
        %3521 = vst.msk [vmem:[#allocation3 + $0x154] sm:$0xf] %vm2126, %v3454
        %3522 = vst.msk [vmem:[#allocation3 + $0x160] sm:$0xf] %vm2126, %v3456
        %3523 = vst.msk [vmem:[#allocation3 + $0x16c] sm:$0xf] %vm2126, %v3458
        %3524 = vst.msk [vmem:[#allocation3 + $0x178] sm:$0xf] %vm2126, %v3460
        %s3525 = scalar_lea.vmem [#allocation2], 24
        %v3526 = vld [vmem:[%s3525] sm:$0xf]
        %v3527 = vld [vmem:[%s3525 + $0x4] sm:$0xf]
        %v3528 = vld [vmem:[%s3525 + $0xc] sm:$0xf]
        %v3529 = vld [vmem:[%s3525 + $0x10] sm:$0xf]
        %v3530 = vld [vmem:[%s3525 + $0x18] sm:$0xf]
        %v3531 = vld [vmem:[%s3525 + $0x1c] sm:$0xf]
        %v3532 = vld [vmem:[%s3525 + $0x24] sm:$0xf]
        %v3533 = vld [vmem:[%s3525 + $0x28] sm:$0xf]
        %v3534 = vld [vmem:[%s3525 + $0x30] sm:$0xf]
        %v3535 = vld [vmem:[%s3525 + $0x34] sm:$0xf]
        %v3536 = vld [vmem:[%s3525 + $0x3c] sm:$0xf]
        %v3537 = vld [vmem:[%s3525 + $0x40] sm:$0xf]
        %v3538 = vld [vmem:[%s3525 + $0x48] sm:$0xf]
        %v3539 = vld [vmem:[%s3525 + $0x4c] sm:$0xf]
        %v3540 = vld [vmem:[%s3525 + $0x54] sm:$0xf]
        %v3541 = vld [vmem:[%s3525 + $0x58] sm:$0xf]
        %v3542 = vld [vmem:[%s3525 + $0x60] sm:$0xf]
        %v3543 = vld [vmem:[%s3525 + $0x64] sm:$0xf]
        %v3544 = vld [vmem:[%s3525 + $0x6c] sm:$0xf]
        %v3545 = vld [vmem:[%s3525 + $0x70] sm:$0xf]
        %v3546 = vld [vmem:[%s3525 + $0x78] sm:$0xf]
        %v3547 = vld [vmem:[%s3525 + $0x7c] sm:$0xf]
        %v3548 = vld [vmem:[%s3525 + $0x84] sm:$0xf]
        %v3549 = vld [vmem:[%s3525 + $0x88] sm:$0xf]
        %v3550 = vld [vmem:[%s3525 + $0x90] sm:$0xf]
        %v3551 = vld [vmem:[%s3525 + $0x94] sm:$0xf]
        %v3552 = vld [vmem:[%s3525 + $0x9c] sm:$0xf]
        %v3553 = vld [vmem:[%s3525 + $0xa0] sm:$0xf]
        %v3554 = vld [vmem:[%s3525 + $0xa8] sm:$0xf]
        %v3555 = vld [vmem:[%s3525 + $0xac] sm:$0xf]
        %v3556 = vld [vmem:[%s3525 + $0xb4] sm:$0xf]
        %v3557 = vld [vmem:[%s3525 + $0xb8] sm:$0xf]
        %3590 = vrot.lane.b32.xlu0 %v3526, 64
        %v3591 = vpop.permute.xlu0 %3590
        %3592 = vrot.lane.b32.xlu0 %v3527, 64
        %v3593 = vpop.permute.xlu0 %3592
        %3594 = vrot.lane.b32.xlu0 %v3528, 64
        %v3595 = vpop.permute.xlu0 %3594
        %3596 = vrot.lane.b32.xlu0 %v3529, 64
        %v3597 = vpop.permute.xlu0 %3596
        %3598 = vrot.lane.b32.xlu0 %v3530, 64
        %v3599 = vpop.permute.xlu0 %3598
        %3600 = vrot.lane.b32.xlu0 %v3531, 64
        %v3601 = vpop.permute.xlu0 %3600
        %3602 = vrot.lane.b32.xlu0 %v3532, 64
        %v3603 = vpop.permute.xlu0 %3602
        %3604 = vrot.lane.b32.xlu0 %v3533, 64
        %v3605 = vpop.permute.xlu0 %3604
        %3606 = vrot.lane.b32.xlu0 %v3534, 64
        %v3607 = vpop.permute.xlu0 %3606
        %3608 = vrot.lane.b32.xlu0 %v3535, 64
        %v3609 = vpop.permute.xlu0 %3608
        %3610 = vrot.lane.b32.xlu0 %v3536, 64
        %v3611 = vpop.permute.xlu0 %3610
        %3612 = vrot.lane.b32.xlu0 %v3537, 64
        %v3613 = vpop.permute.xlu0 %3612
        %3614 = vrot.lane.b32.xlu0 %v3538, 64
        %v3615 = vpop.permute.xlu0 %3614
        %3616 = vrot.lane.b32.xlu0 %v3539, 64
        %v3617 = vpop.permute.xlu0 %3616
        %3618 = vrot.lane.b32.xlu0 %v3540, 64
        %v3619 = vpop.permute.xlu0 %3618
        %3620 = vrot.lane.b32.xlu0 %v3541, 64
        %v3621 = vpop.permute.xlu0 %3620
        %3622 = vrot.lane.b32.xlu0 %v3542, 64
        %v3623 = vpop.permute.xlu0 %3622
        %3624 = vrot.lane.b32.xlu0 %v3543, 64
        %v3625 = vpop.permute.xlu0 %3624
        %3626 = vrot.lane.b32.xlu0 %v3544, 64
        %v3627 = vpop.permute.xlu0 %3626
        %3628 = vrot.lane.b32.xlu0 %v3545, 64
        %v3629 = vpop.permute.xlu0 %3628
        %3630 = vrot.lane.b32.xlu0 %v3546, 64
        %v3631 = vpop.permute.xlu0 %3630
        %3632 = vrot.lane.b32.xlu0 %v3547, 64
        %v3633 = vpop.permute.xlu0 %3632
        %3634 = vrot.lane.b32.xlu0 %v3548, 64
        %v3635 = vpop.permute.xlu0 %3634
        %3636 = vrot.lane.b32.xlu0 %v3549, 64
        %v3637 = vpop.permute.xlu0 %3636
        %3638 = vrot.lane.b32.xlu0 %v3550, 64
        %v3639 = vpop.permute.xlu0 %3638
        %3640 = vrot.lane.b32.xlu0 %v3551, 64
        %v3641 = vpop.permute.xlu0 %3640
        %3642 = vrot.lane.b32.xlu0 %v3552, 64
        %v3643 = vpop.permute.xlu0 %3642
        %3644 = vrot.lane.b32.xlu0 %v3553, 64
        %v3645 = vpop.permute.xlu0 %3644
        %3646 = vrot.lane.b32.xlu0 %v3554, 64
        %v3647 = vpop.permute.xlu0 %3646
        %3648 = vrot.lane.b32.xlu0 %v3555, 64
        %v3649 = vpop.permute.xlu0 %3648
        %3650 = vrot.lane.b32.xlu0 %v3556, 64
        %v3651 = vpop.permute.xlu0 %3650
        %3652 = vrot.lane.b32.xlu0 %v3557, 64
        %v3653 = vpop.permute.xlu0 %3652
        %3686 = vst.msk [vmem:[#allocation3 + $0x4] sm:$0xf] %vm2466, %v3591
        %3687 = vst.msk [vmem:[#allocation3 + $0x10] sm:$0xf] %vm2466, %v3593
        %3688 = vst.msk [vmem:[#allocation3 + $0x1c] sm:$0xf] %vm2466, %v3595
        %3689 = vst.msk [vmem:[#allocation3 + $0x28] sm:$0xf] %vm2466, %v3597
        %3690 = vst.msk [vmem:[#allocation3 + $0x34] sm:$0xf] %vm2466, %v3599
        %3691 = vst.msk [vmem:[#allocation3 + $0x40] sm:$0xf] %vm2466, %v3601
        %3692 = vst.msk [vmem:[#allocation3 + $0x4c] sm:$0xf] %vm2466, %v3603
        %3693 = vst.msk [vmem:[#allocation3 + $0x58] sm:$0xf] %vm2466, %v3605
        %3694 = vst.msk [vmem:[#allocation3 + $0x64] sm:$0xf] %vm2466, %v3607
        %3695 = vst.msk [vmem:[#allocation3 + $0x70] sm:$0xf] %vm2466, %v3609
        %3696 = vst.msk [vmem:[#allocation3 + $0x7c] sm:$0xf] %vm2466, %v3611
        %3697 = vst.msk [vmem:[#allocation3 + $0x88] sm:$0xf] %vm2466, %v3613
        %3698 = vst.msk [vmem:[#allocation3 + $0x94] sm:$0xf] %vm2466, %v3615
        %3699 = vst.msk [vmem:[#allocation3 + $0xa0] sm:$0xf] %vm2466, %v3617
        %3700 = vst.msk [vmem:[#allocation3 + $0xac] sm:$0xf] %vm2466, %v3619
        %3701 = vst.msk [vmem:[#allocation3 + $0xb8] sm:$0xf] %vm2466, %v3621
        %3702 = vst.msk [vmem:[#allocation3 + $0xc4] sm:$0xf] %vm2466, %v3623
        %3703 = vst.msk [vmem:[#allocation3 + $0xd0] sm:$0xf] %vm2466, %v3625
        %3704 = vst.msk [vmem:[#allocation3 + $0xdc] sm:$0xf] %vm2466, %v3627
        %3705 = vst.msk [vmem:[#allocation3 + $0xe8] sm:$0xf] %vm2466, %v3629
        %3706 = vst.msk [vmem:[#allocation3 + $0xf4] sm:$0xf] %vm2466, %v3631
        %3707 = vst.msk [vmem:[#allocation3 + $0x100] sm:$0xf] %vm2466, %v3633
        %3708 = vst.msk [vmem:[#allocation3 + $0x10c] sm:$0xf] %vm2466, %v3635
        %3709 = vst.msk [vmem:[#allocation3 + $0x118] sm:$0xf] %vm2466, %v3637
        %3710 = vst.msk [vmem:[#allocation3 + $0x124] sm:$0xf] %vm2466, %v3639
        %3711 = vst.msk [vmem:[#allocation3 + $0x130] sm:$0xf] %vm2466, %v3641
        %3712 = vst.msk [vmem:[#allocation3 + $0x13c] sm:$0xf] %vm2466, %v3643
        %3713 = vst.msk [vmem:[#allocation3 + $0x148] sm:$0xf] %vm2466, %v3645
        %3714 = vst.msk [vmem:[#allocation3 + $0x154] sm:$0xf] %vm2466, %v3647
        %3715 = vst.msk [vmem:[#allocation3 + $0x160] sm:$0xf] %vm2466, %v3649
        %3716 = vst.msk [vmem:[#allocation3 + $0x16c] sm:$0xf] %vm2466, %v3651
        %3717 = vst.msk [vmem:[#allocation3 + $0x178] sm:$0xf] %vm2466, %v3653
        %v3718 = vld [vmem:[%s3525] sm:$0xf]
        %v3719 = vld [vmem:[%s3525 + $0x4] sm:$0xf]
        %v3720 = vld [vmem:[%s3525 + $0x8] sm:$0x1]
        %v3721 = vld [vmem:[%s3525 + $0xc] sm:$0xf]
        %v3722 = vld [vmem:[%s3525 + $0x10] sm:$0xf]
        %v3723 = vld [vmem:[%s3525 + $0x14] sm:$0x1]
        %v3724 = vld [vmem:[%s3525 + $0x18] sm:$0xf]
        %v3725 = vld [vmem:[%s3525 + $0x1c] sm:$0xf]
        %v3726 = vld [vmem:[%s3525 + $0x20] sm:$0x1]
        %v3727 = vld [vmem:[%s3525 + $0x24] sm:$0xf]
        %v3728 = vld [vmem:[%s3525 + $0x28] sm:$0xf]
        %v3729 = vld [vmem:[%s3525 + $0x2c] sm:$0x1]
        %v3730 = vld [vmem:[%s3525 + $0x30] sm:$0xf]
        %v3731 = vld [vmem:[%s3525 + $0x34] sm:$0xf]
        %v3732 = vld [vmem:[%s3525 + $0x38] sm:$0x1]
        %v3733 = vld [vmem:[%s3525 + $0x3c] sm:$0xf]
        %v3734 = vld [vmem:[%s3525 + $0x40] sm:$0xf]
        %v3735 = vld [vmem:[%s3525 + $0x44] sm:$0x1]
        %v3736 = vld [vmem:[%s3525 + $0x48] sm:$0xf]
        %v3737 = vld [vmem:[%s3525 + $0x4c] sm:$0xf]
        %v3738 = vld [vmem:[%s3525 + $0x50] sm:$0x1]
        %v3739 = vld [vmem:[%s3525 + $0x54] sm:$0xf]
        %v3740 = vld [vmem:[%s3525 + $0x58] sm:$0xf]
        %v3741 = vld [vmem:[%s3525 + $0x5c] sm:$0x1]
        %v3742 = vld [vmem:[%s3525 + $0x60] sm:$0xf]
        %v3743 = vld [vmem:[%s3525 + $0x64] sm:$0xf]
        %v3744 = vld [vmem:[%s3525 + $0x68] sm:$0x1]
        %v3745 = vld [vmem:[%s3525 + $0x6c] sm:$0xf]
        %v3746 = vld [vmem:[%s3525 + $0x70] sm:$0xf]
        %v3747 = vld [vmem:[%s3525 + $0x74] sm:$0x1]
        %v3748 = vld [vmem:[%s3525 + $0x78] sm:$0xf]
        %v3749 = vld [vmem:[%s3525 + $0x7c] sm:$0xf]
        %v3750 = vld [vmem:[%s3525 + $0x80] sm:$0x1]
        %v3751 = vld [vmem:[%s3525 + $0x84] sm:$0xf]
        %v3752 = vld [vmem:[%s3525 + $0x88] sm:$0xf]
        %v3753 = vld [vmem:[%s3525 + $0x8c] sm:$0x1]
        %v3754 = vld [vmem:[%s3525 + $0x90] sm:$0xf]
        %v3755 = vld [vmem:[%s3525 + $0x94] sm:$0xf]
        %v3756 = vld [vmem:[%s3525 + $0x98] sm:$0x1]
        %v3757 = vld [vmem:[%s3525 + $0x9c] sm:$0xf]
        %v3758 = vld [vmem:[%s3525 + $0xa0] sm:$0xf]
        %v3759 = vld [vmem:[%s3525 + $0xa4] sm:$0x1]
        %v3760 = vld [vmem:[%s3525 + $0xa8] sm:$0xf]
        %v3761 = vld [vmem:[%s3525 + $0xac] sm:$0xf]
        %v3762 = vld [vmem:[%s3525 + $0xb0] sm:$0x1]
        %v3763 = vld [vmem:[%s3525 + $0xb4] sm:$0xf]
        %v3764 = vld [vmem:[%s3525 + $0xb8] sm:$0xf]
        %v3765 = vld [vmem:[%s3525 + $0xbc] sm:$0x1]
        %v3767 = vshrl.u32 %v3718, 16
        %v3769 = vrot.slane %v3767, 4
        %v3770 = vshll.u32 %v3718, 16
        %v3772 = vrot.slane %v3770, 5
        %v3773 = vor.u32 %v3769, %v3772
        %v3774 = vrot.slane %v3773, 4
        %v3776 = vshll.u32 %v3719, 16
        %v3778 = vrot.slane %v3776, 5
        %v3779 = vsel %vm1645, %v3774, %v3778
        %v3780 = vshrl.u32 %v3719, 16
        %v3782 = vrot.slane %v3780, 4
        %v3783 = vor.u32 %v3782, %v3778
        %v3784 = vrot.slane %v3783, 4
        %v3786 = vshll.u32 %v3720, 16
        %v3788 = vrot.slane %v3786, 5
        %v3789 = vsel %vm1645, %v3784, %v3788
        %v3791 = vshrl.u32 %v3721, 16
        %v3793 = vrot.slane %v3791, 4
        %v3794 = vshll.u32 %v3721, 16
        %v3796 = vrot.slane %v3794, 5
        %v3797 = vor.u32 %v3793, %v3796
        %v3798 = vrot.slane %v3797, 4
        %v3800 = vshll.u32 %v3722, 16
        %v3802 = vrot.slane %v3800, 5
        %v3803 = vsel %vm1645, %v3798, %v3802
        %v3804 = vshrl.u32 %v3722, 16
        %v3806 = vrot.slane %v3804, 4
        %v3807 = vor.u32 %v3806, %v3802
        %v3808 = vrot.slane %v3807, 4
        %v3810 = vshll.u32 %v3723, 16
        %v3812 = vrot.slane %v3810, 5
        %v3813 = vsel %vm1645, %v3808, %v3812
        %v3815 = vshrl.u32 %v3724, 16
        %v3817 = vrot.slane %v3815, 4
        %v3818 = vshll.u32 %v3724, 16
        %v3820 = vrot.slane %v3818, 5
        %v3821 = vor.u32 %v3817, %v3820
        %v3822 = vrot.slane %v3821, 4
        %v3824 = vshll.u32 %v3725, 16
        %v3826 = vrot.slane %v3824, 5
        %v3827 = vsel %vm1645, %v3822, %v3826
        %v3828 = vshrl.u32 %v3725, 16
        %v3830 = vrot.slane %v3828, 4
        %v3831 = vor.u32 %v3830, %v3826
        %v3832 = vrot.slane %v3831, 4
        %v3834 = vshll.u32 %v3726, 16
        %v3836 = vrot.slane %v3834, 5
        %v3837 = vsel %vm1645, %v3832, %v3836
        %v3839 = vshrl.u32 %v3727, 16
        %v3841 = vrot.slane %v3839, 4
        %v3842 = vshll.u32 %v3727, 16
        %v3844 = vrot.slane %v3842, 5
        %v3845 = vor.u32 %v3841, %v3844
        %v3846 = vrot.slane %v3845, 4
        %v3848 = vshll.u32 %v3728, 16
        %v3850 = vrot.slane %v3848, 5
        %v3851 = vsel %vm1645, %v3846, %v3850
        %v3852 = vshrl.u32 %v3728, 16
        %v3854 = vrot.slane %v3852, 4
        %v3855 = vor.u32 %v3854, %v3850
        %v3856 = vrot.slane %v3855, 4
        %v3858 = vshll.u32 %v3729, 16
        %v3860 = vrot.slane %v3858, 5
        %v3861 = vsel %vm1645, %v3856, %v3860
        %v3863 = vshrl.u32 %v3730, 16
        %v3865 = vrot.slane %v3863, 4
        %v3866 = vshll.u32 %v3730, 16
        %v3868 = vrot.slane %v3866, 5
        %v3869 = vor.u32 %v3865, %v3868
        %v3870 = vrot.slane %v3869, 4
        %v3872 = vshll.u32 %v3731, 16
        %v3874 = vrot.slane %v3872, 5
        %v3875 = vsel %vm1645, %v3870, %v3874
        %v3876 = vshrl.u32 %v3731, 16
        %v3878 = vrot.slane %v3876, 4
        %v3879 = vor.u32 %v3878, %v3874
        %v3880 = vrot.slane %v3879, 4
        %v3882 = vshll.u32 %v3732, 16
        %v3884 = vrot.slane %v3882, 5
        %v3885 = vsel %vm1645, %v3880, %v3884
        %v3887 = vshrl.u32 %v3733, 16
        %v3889 = vrot.slane %v3887, 4
        %v3890 = vshll.u32 %v3733, 16
        %v3892 = vrot.slane %v3890, 5
        %v3893 = vor.u32 %v3889, %v3892
        %v3894 = vrot.slane %v3893, 4
        %v3896 = vshll.u32 %v3734, 16
        %v3898 = vrot.slane %v3896, 5
        %v3899 = vsel %vm1645, %v3894, %v3898
        %v3900 = vshrl.u32 %v3734, 16
        %v3902 = vrot.slane %v3900, 4
        %v3903 = vor.u32 %v3902, %v3898
        %v3904 = vrot.slane %v3903, 4
        %v3906 = vshll.u32 %v3735, 16
        %v3908 = vrot.slane %v3906, 5
        %v3909 = vsel %vm1645, %v3904, %v3908
        %v3911 = vshrl.u32 %v3736, 16
        %v3913 = vrot.slane %v3911, 4
        %v3914 = vshll.u32 %v3736, 16
        %v3916 = vrot.slane %v3914, 5
        %v3917 = vor.u32 %v3913, %v3916
        %v3918 = vrot.slane %v3917, 4
        %v3920 = vshll.u32 %v3737, 16
        %v3922 = vrot.slane %v3920, 5
        %v3923 = vsel %vm1645, %v3918, %v3922
        %v3924 = vshrl.u32 %v3737, 16
        %v3926 = vrot.slane %v3924, 4
        %v3927 = vor.u32 %v3926, %v3922
        %v3928 = vrot.slane %v3927, 4
        %v3930 = vshll.u32 %v3738, 16
        %v3932 = vrot.slane %v3930, 5
        %v3933 = vsel %vm1645, %v3928, %v3932
        %v3935 = vshrl.u32 %v3739, 16
        %v3937 = vrot.slane %v3935, 4
        %v3938 = vshll.u32 %v3739, 16
        %v3940 = vrot.slane %v3938, 5
        %v3941 = vor.u32 %v3937, %v3940
        %v3942 = vrot.slane %v3941, 4
        %v3944 = vshll.u32 %v3740, 16
        %v3946 = vrot.slane %v3944, 5
        %v3947 = vsel %vm1645, %v3942, %v3946
        %v3948 = vshrl.u32 %v3740, 16
        %v3950 = vrot.slane %v3948, 4
        %v3951 = vor.u32 %v3950, %v3946
        %v3952 = vrot.slane %v3951, 4
        %v3954 = vshll.u32 %v3741, 16
        %v3956 = vrot.slane %v3954, 5
        %v3957 = vsel %vm1645, %v3952, %v3956
        %v3959 = vshrl.u32 %v3742, 16
        %v3961 = vrot.slane %v3959, 4
        %v3962 = vshll.u32 %v3742, 16
        %v3964 = vrot.slane %v3962, 5
        %v3965 = vor.u32 %v3961, %v3964
        %v3966 = vrot.slane %v3965, 4
        %v3968 = vshll.u32 %v3743, 16
        %v3970 = vrot.slane %v3968, 5
        %v3971 = vsel %vm1645, %v3966, %v3970
        %v3972 = vshrl.u32 %v3743, 16
        %v3974 = vrot.slane %v3972, 4
        %v3975 = vor.u32 %v3974, %v3970
        %v3976 = vrot.slane %v3975, 4
        %v3978 = vshll.u32 %v3744, 16
        %v3980 = vrot.slane %v3978, 5
        %v3981 = vsel %vm1645, %v3976, %v3980
        %v3983 = vshrl.u32 %v3745, 16
        %v3985 = vrot.slane %v3983, 4
        %v3986 = vshll.u32 %v3745, 16
        %v3988 = vrot.slane %v3986, 5
        %v3989 = vor.u32 %v3985, %v3988
        %v3990 = vrot.slane %v3989, 4
        %v3992 = vshll.u32 %v3746, 16
        %v3994 = vrot.slane %v3992, 5
        %v3995 = vsel %vm1645, %v3990, %v3994
        %v3996 = vshrl.u32 %v3746, 16
        %v3998 = vrot.slane %v3996, 4
        %v3999 = vor.u32 %v3998, %v3994
        %v4000 = vrot.slane %v3999, 4
        %v4002 = vshll.u32 %v3747, 16
        %v4004 = vrot.slane %v4002, 5
        %v4005 = vsel %vm1645, %v4000, %v4004
        %v4007 = vshrl.u32 %v3748, 16
        %v4009 = vrot.slane %v4007, 4
        %v4010 = vshll.u32 %v3748, 16
        %v4012 = vrot.slane %v4010, 5
        %v4013 = vor.u32 %v4009, %v4012
        %v4014 = vrot.slane %v4013, 4
        %v4016 = vshll.u32 %v3749, 16
        %v4018 = vrot.slane %v4016, 5
        %v4019 = vsel %vm1645, %v4014, %v4018
        %v4020 = vshrl.u32 %v3749, 16
        %v4022 = vrot.slane %v4020, 4
        %v4023 = vor.u32 %v4022, %v4018
        %v4024 = vrot.slane %v4023, 4
        %v4026 = vshll.u32 %v3750, 16
        %v4028 = vrot.slane %v4026, 5
        %v4029 = vsel %vm1645, %v4024, %v4028
        %v4031 = vshrl.u32 %v3751, 16
        %v4033 = vrot.slane %v4031, 4
        %v4034 = vshll.u32 %v3751, 16
        %v4036 = vrot.slane %v4034, 5
        %v4037 = vor.u32 %v4033, %v4036
        %v4038 = vrot.slane %v4037, 4
        %v4040 = vshll.u32 %v3752, 16
        %v4042 = vrot.slane %v4040, 5
        %v4043 = vsel %vm1645, %v4038, %v4042
        %v4044 = vshrl.u32 %v3752, 16
        %v4046 = vrot.slane %v4044, 4
        %v4047 = vor.u32 %v4046, %v4042
        %v4048 = vrot.slane %v4047, 4
        %v4050 = vshll.u32 %v3753, 16
        %v4052 = vrot.slane %v4050, 5
        %v4053 = vsel %vm1645, %v4048, %v4052
        %v4055 = vshrl.u32 %v3754, 16
        %v4057 = vrot.slane %v4055, 4
        %v4058 = vshll.u32 %v3754, 16
        %v4060 = vrot.slane %v4058, 5
        %v4061 = vor.u32 %v4057, %v4060
        %v4062 = vrot.slane %v4061, 4
        %v4064 = vshll.u32 %v3755, 16
        %v4066 = vrot.slane %v4064, 5
        %v4067 = vsel %vm1645, %v4062, %v4066
        %v4068 = vshrl.u32 %v3755, 16
        %v4070 = vrot.slane %v4068, 4
        %v4071 = vor.u32 %v4070, %v4066
        %v4072 = vrot.slane %v4071, 4
        %v4074 = vshll.u32 %v3756, 16
        %v4076 = vrot.slane %v4074, 5
        %v4077 = vsel %vm1645, %v4072, %v4076
        %v4079 = vshrl.u32 %v3757, 16
        %v4081 = vrot.slane %v4079, 4
        %v4082 = vshll.u32 %v3757, 16
        %v4084 = vrot.slane %v4082, 5
        %v4085 = vor.u32 %v4081, %v4084
        %v4086 = vrot.slane %v4085, 4
        %v4088 = vshll.u32 %v3758, 16
        %v4090 = vrot.slane %v4088, 5
        %v4091 = vsel %vm1645, %v4086, %v4090
        %v4092 = vshrl.u32 %v3758, 16
        %v4094 = vrot.slane %v4092, 4
        %v4095 = vor.u32 %v4094, %v4090
        %v4096 = vrot.slane %v4095, 4
        %v4098 = vshll.u32 %v3759, 16
        %v4100 = vrot.slane %v4098, 5
        %v4101 = vsel %vm1645, %v4096, %v4100
        %v4103 = vshrl.u32 %v3760, 16
        %v4105 = vrot.slane %v4103, 4
        %v4106 = vshll.u32 %v3760, 16
        %v4108 = vrot.slane %v4106, 5
        %v4109 = vor.u32 %v4105, %v4108
        %v4110 = vrot.slane %v4109, 4
        %v4112 = vshll.u32 %v3761, 16
        %v4114 = vrot.slane %v4112, 5
        %v4115 = vsel %vm1645, %v4110, %v4114
        %v4116 = vshrl.u32 %v3761, 16
        %v4118 = vrot.slane %v4116, 4
        %v4119 = vor.u32 %v4118, %v4114
        %v4120 = vrot.slane %v4119, 4
        %v4122 = vshll.u32 %v3762, 16
        %v4124 = vrot.slane %v4122, 5
        %v4125 = vsel %vm1645, %v4120, %v4124
        %v4127 = vshrl.u32 %v3763, 16
        %v4129 = vrot.slane %v4127, 4
        %v4130 = vshll.u32 %v3763, 16
        %v4132 = vrot.slane %v4130, 5
        %v4133 = vor.u32 %v4129, %v4132
        %v4134 = vrot.slane %v4133, 4
        %v4136 = vshll.u32 %v3764, 16
        %v4138 = vrot.slane %v4136, 5
        %v4139 = vsel %vm1645, %v4134, %v4138
        %v4140 = vshrl.u32 %v3764, 16
        %v4142 = vrot.slane %v4140, 4
        %v4143 = vor.u32 %v4142, %v4138
        %v4144 = vrot.slane %v4143, 4
        %v4146 = vshll.u32 %v3765, 16
        %v4148 = vrot.slane %v4146, 5
        %v4149 = vsel %vm1645, %v4144, %v4148
        %4150 = vrot.lane.b32.xlu0 %v3779, 96
        %v4151 = vpop.permute.xlu0 %4150
        %4152 = vrot.lane.b32.xlu0 %v3789, 96
        %v4153 = vpop.permute.xlu0 %4152
        %4154 = vrot.lane.b32.xlu0 %v3803, 96
        %v4155 = vpop.permute.xlu0 %4154
        %4156 = vrot.lane.b32.xlu0 %v3813, 96
        %v4157 = vpop.permute.xlu0 %4156
        %4158 = vrot.lane.b32.xlu0 %v3827, 96
        %v4159 = vpop.permute.xlu0 %4158
        %4160 = vrot.lane.b32.xlu0 %v3837, 96
        %v4161 = vpop.permute.xlu0 %4160
        %4162 = vrot.lane.b32.xlu0 %v3851, 96
        %v4163 = vpop.permute.xlu0 %4162
        %4164 = vrot.lane.b32.xlu0 %v3861, 96
        %v4165 = vpop.permute.xlu0 %4164
        %4166 = vrot.lane.b32.xlu0 %v3875, 96
        %v4167 = vpop.permute.xlu0 %4166
        %4168 = vrot.lane.b32.xlu0 %v3885, 96
        %v4169 = vpop.permute.xlu0 %4168
        %4170 = vrot.lane.b32.xlu0 %v3899, 96
        %v4171 = vpop.permute.xlu0 %4170
        %4172 = vrot.lane.b32.xlu0 %v3909, 96
        %v4173 = vpop.permute.xlu0 %4172
        %4174 = vrot.lane.b32.xlu0 %v3923, 96
        %v4175 = vpop.permute.xlu0 %4174
        %4176 = vrot.lane.b32.xlu0 %v3933, 96
        %v4177 = vpop.permute.xlu0 %4176
        %4178 = vrot.lane.b32.xlu0 %v3947, 96
        %v4179 = vpop.permute.xlu0 %4178
        %4180 = vrot.lane.b32.xlu0 %v3957, 96
        %v4181 = vpop.permute.xlu0 %4180
        %4182 = vrot.lane.b32.xlu0 %v3971, 96
        %v4183 = vpop.permute.xlu0 %4182
        %4184 = vrot.lane.b32.xlu0 %v3981, 96
        %v4185 = vpop.permute.xlu0 %4184
        %4186 = vrot.lane.b32.xlu0 %v3995, 96
        %v4187 = vpop.permute.xlu0 %4186
        %4188 = vrot.lane.b32.xlu0 %v4005, 96
        %v4189 = vpop.permute.xlu0 %4188
        %4190 = vrot.lane.b32.xlu0 %v4019, 96
        %v4191 = vpop.permute.xlu0 %4190
        %4192 = vrot.lane.b32.xlu0 %v4029, 96
        %v4193 = vpop.permute.xlu0 %4192
        %4194 = vrot.lane.b32.xlu0 %v4043, 96
        %v4195 = vpop.permute.xlu0 %4194
        %4196 = vrot.lane.b32.xlu0 %v4053, 96
        %v4197 = vpop.permute.xlu0 %4196
        %4198 = vrot.lane.b32.xlu0 %v4067, 96
        %v4199 = vpop.permute.xlu0 %4198
        %4200 = vrot.lane.b32.xlu0 %v4077, 96
        %v4201 = vpop.permute.xlu0 %4200
        %4202 = vrot.lane.b32.xlu0 %v4091, 96
        %v4203 = vpop.permute.xlu0 %4202
        %4204 = vrot.lane.b32.xlu0 %v4101, 96
        %v4205 = vpop.permute.xlu0 %4204
        %4206 = vrot.lane.b32.xlu0 %v4115, 96
        %v4207 = vpop.permute.xlu0 %4206
        %4208 = vrot.lane.b32.xlu0 %v4125, 96
        %v4209 = vpop.permute.xlu0 %4208
        %4210 = vrot.lane.b32.xlu0 %v4139, 96
        %v4211 = vpop.permute.xlu0 %4210
        %4212 = vrot.lane.b32.xlu0 %v4149, 96
        %v4213 = vpop.permute.xlu0 %4212
        %4246 = vst.msk [vmem:[#allocation3 + $0x4] sm:$0xf] %vm2660, %v4151
        %4247 = vst.msk [vmem:[#allocation3 + $0x10] sm:$0xf] %vm2660, %v4153
        %4248 = vst.msk [vmem:[#allocation3 + $0x1c] sm:$0xf] %vm2660, %v4155
        %4249 = vst.msk [vmem:[#allocation3 + $0x28] sm:$0xf] %vm2660, %v4157
        %4250 = vst.msk [vmem:[#allocation3 + $0x34] sm:$0xf] %vm2660, %v4159
        %4251 = vst.msk [vmem:[#allocation3 + $0x40] sm:$0xf] %vm2660, %v4161
        %4252 = vst.msk [vmem:[#allocation3 + $0x4c] sm:$0xf] %vm2660, %v4163
        %4253 = vst.msk [vmem:[#allocation3 + $0x58] sm:$0xf] %vm2660, %v4165
        %4254 = vst.msk [vmem:[#allocation3 + $0x64] sm:$0xf] %vm2660, %v4167
        %4255 = vst.msk [vmem:[#allocation3 + $0x70] sm:$0xf] %vm2660, %v4169
        %4256 = vst.msk [vmem:[#allocation3 + $0x7c] sm:$0xf] %vm2660, %v4171
        %4257 = vst.msk [vmem:[#allocation3 + $0x88] sm:$0xf] %vm2660, %v4173
        %4258 = vst.msk [vmem:[#allocation3 + $0x94] sm:$0xf] %vm2660, %v4175
        %4259 = vst.msk [vmem:[#allocation3 + $0xa0] sm:$0xf] %vm2660, %v4177
        %4260 = vst.msk [vmem:[#allocation3 + $0xac] sm:$0xf] %vm2660, %v4179
        %4261 = vst.msk [vmem:[#allocation3 + $0xb8] sm:$0xf] %vm2660, %v4181
        %4262 = vst.msk [vmem:[#allocation3 + $0xc4] sm:$0xf] %vm2660, %v4183
        %4263 = vst.msk [vmem:[#allocation3 + $0xd0] sm:$0xf] %vm2660, %v4185
        %4264 = vst.msk [vmem:[#allocation3 + $0xdc] sm:$0xf] %vm2660, %v4187
        %4265 = vst.msk [vmem:[#allocation3 + $0xe8] sm:$0xf] %vm2660, %v4189
        %4266 = vst.msk [vmem:[#allocation3 + $0xf4] sm:$0xf] %vm2660, %v4191
        %4267 = vst.msk [vmem:[#allocation3 + $0x100] sm:$0xf] %vm2660, %v4193
        %4268 = vst.msk [vmem:[#allocation3 + $0x10c] sm:$0xf] %vm2660, %v4195
        %4269 = vst.msk [vmem:[#allocation3 + $0x118] sm:$0xf] %vm2660, %v4197
        %4270 = vst.msk [vmem:[#allocation3 + $0x124] sm:$0xf] %vm2660, %v4199
        %4271 = vst.msk [vmem:[#allocation3 + $0x130] sm:$0xf] %vm2660, %v4201
        %4272 = vst.msk [vmem:[#allocation3 + $0x13c] sm:$0xf] %vm2660, %v4203
        %4273 = vst.msk [vmem:[#allocation3 + $0x148] sm:$0xf] %vm2660, %v4205
        %4274 = vst.msk [vmem:[#allocation3 + $0x154] sm:$0xf] %vm2660, %v4207
        %4275 = vst.msk [vmem:[#allocation3 + $0x160] sm:$0xf] %vm2660, %v4209
        %4276 = vst.msk [vmem:[#allocation3 + $0x16c] sm:$0xf] %vm2660, %v4211
        %4277 = vst.msk [vmem:[#allocation3 + $0x178] sm:$0xf] %vm2660, %v4213
        %v4278 = vld [vmem:[%s3525] sm:$0xe]
        %v4279 = vld [vmem:[%s3525 + $0x4] sm:$0xf]
        %v4280 = vld [vmem:[%s3525 + $0x8] sm:$0x1]
        %v4281 = vld [vmem:[%s3525 + $0xc] sm:$0xe]
        %v4282 = vld [vmem:[%s3525 + $0x10] sm:$0xf]
        %v4283 = vld [vmem:[%s3525 + $0x14] sm:$0x1]
        %v4284 = vld [vmem:[%s3525 + $0x18] sm:$0xe]
        %v4285 = vld [vmem:[%s3525 + $0x1c] sm:$0xf]
        %v4286 = vld [vmem:[%s3525 + $0x20] sm:$0x1]
        %v4287 = vld [vmem:[%s3525 + $0x24] sm:$0xe]
        %v4288 = vld [vmem:[%s3525 + $0x28] sm:$0xf]
        %v4289 = vld [vmem:[%s3525 + $0x2c] sm:$0x1]
        %v4290 = vld [vmem:[%s3525 + $0x30] sm:$0xe]
        %v4291 = vld [vmem:[%s3525 + $0x34] sm:$0xf]
        %v4292 = vld [vmem:[%s3525 + $0x38] sm:$0x1]
        %v4293 = vld [vmem:[%s3525 + $0x3c] sm:$0xe]
        %v4294 = vld [vmem:[%s3525 + $0x40] sm:$0xf]
        %v4295 = vld [vmem:[%s3525 + $0x44] sm:$0x1]
        %v4296 = vld [vmem:[%s3525 + $0x48] sm:$0xe]
        %v4297 = vld [vmem:[%s3525 + $0x4c] sm:$0xf]
        %v4298 = vld [vmem:[%s3525 + $0x50] sm:$0x1]
        %v4299 = vld [vmem:[%s3525 + $0x54] sm:$0xe]
        %v4300 = vld [vmem:[%s3525 + $0x58] sm:$0xf]
        %v4301 = vld [vmem:[%s3525 + $0x5c] sm:$0x1]
        %v4302 = vld [vmem:[%s3525 + $0x60] sm:$0xe]
        %v4303 = vld [vmem:[%s3525 + $0x64] sm:$0xf]
        %v4304 = vld [vmem:[%s3525 + $0x68] sm:$0x1]
        %v4305 = vld [vmem:[%s3525 + $0x6c] sm:$0xe]
        %v4306 = vld [vmem:[%s3525 + $0x70] sm:$0xf]
        %v4307 = vld [vmem:[%s3525 + $0x74] sm:$0x1]
        %v4308 = vld [vmem:[%s3525 + $0x78] sm:$0xe]
        %v4309 = vld [vmem:[%s3525 + $0x7c] sm:$0xf]
        %v4310 = vld [vmem:[%s3525 + $0x80] sm:$0x1]
        %v4311 = vld [vmem:[%s3525 + $0x84] sm:$0xe]
        %v4312 = vld [vmem:[%s3525 + $0x88] sm:$0xf]
        %v4313 = vld [vmem:[%s3525 + $0x8c] sm:$0x1]
        %v4314 = vld [vmem:[%s3525 + $0x90] sm:$0xe]
        %v4315 = vld [vmem:[%s3525 + $0x94] sm:$0xf]
        %v4316 = vld [vmem:[%s3525 + $0x98] sm:$0x1]
        %v4317 = vld [vmem:[%s3525 + $0x9c] sm:$0xe]
        %v4318 = vld [vmem:[%s3525 + $0xa0] sm:$0xf]
        %v4319 = vld [vmem:[%s3525 + $0xa4] sm:$0x1]
        %v4320 = vld [vmem:[%s3525 + $0xa8] sm:$0xe]
        %v4321 = vld [vmem:[%s3525 + $0xac] sm:$0xf]
        %v4322 = vld [vmem:[%s3525 + $0xb0] sm:$0x1]
        %v4323 = vld [vmem:[%s3525 + $0xb4] sm:$0xe]
        %v4324 = vld [vmem:[%s3525 + $0xb8] sm:$0xf]
        %v4325 = vld [vmem:[%s3525 + $0xbc] sm:$0x1]
        %v4374 = vrot.slane %v4278, 5
        %v4375 = vrot.slane %v4374, 4
        %v4376 = vrot.slane %v4279, 5
        %v4377 = vsel %vm2257, %v4375, %v4376
        %v4378 = vrot.slane %v4376, 4
        %v4379 = vrot.slane %v4280, 5
        %v4380 = vsel %vm2257, %v4378, %v4379
        %v4381 = vrot.slane %v4281, 5
        %v4382 = vrot.slane %v4381, 4
        %v4383 = vrot.slane %v4282, 5
        %v4384 = vsel %vm2257, %v4382, %v4383
        %v4385 = vrot.slane %v4383, 4
        %v4386 = vrot.slane %v4283, 5
        %v4387 = vsel %vm2257, %v4385, %v4386
        %v4388 = vrot.slane %v4284, 5
        %v4389 = vrot.slane %v4388, 4
        %v4390 = vrot.slane %v4285, 5
        %v4391 = vsel %vm2257, %v4389, %v4390
        %v4392 = vrot.slane %v4390, 4
        %v4393 = vrot.slane %v4286, 5
        %v4394 = vsel %vm2257, %v4392, %v4393
        %v4395 = vrot.slane %v4287, 5
        %v4396 = vrot.slane %v4395, 4
        %v4397 = vrot.slane %v4288, 5
        %v4398 = vsel %vm2257, %v4396, %v4397
        %v4399 = vrot.slane %v4397, 4
        %v4400 = vrot.slane %v4289, 5
        %v4401 = vsel %vm2257, %v4399, %v4400
        %v4402 = vrot.slane %v4290, 5
        %v4403 = vrot.slane %v4402, 4
        %v4404 = vrot.slane %v4291, 5
        %v4405 = vsel %vm2257, %v4403, %v4404
        %v4406 = vrot.slane %v4404, 4
        %v4407 = vrot.slane %v4292, 5
        %v4408 = vsel %vm2257, %v4406, %v4407
        %v4409 = vrot.slane %v4293, 5
        %v4410 = vrot.slane %v4409, 4
        %v4411 = vrot.slane %v4294, 5
        %v4412 = vsel %vm2257, %v4410, %v4411
        %v4413 = vrot.slane %v4411, 4
        %v4414 = vrot.slane %v4295, 5
        %v4415 = vsel %vm2257, %v4413, %v4414
        %v4416 = vrot.slane %v4296, 5
        %v4417 = vrot.slane %v4416, 4
        %v4418 = vrot.slane %v4297, 5
        %v4419 = vsel %vm2257, %v4417, %v4418
        %v4420 = vrot.slane %v4418, 4
        %v4421 = vrot.slane %v4298, 5
        %v4422 = vsel %vm2257, %v4420, %v4421
        %v4423 = vrot.slane %v4299, 5
        %v4424 = vrot.slane %v4423, 4
        %v4425 = vrot.slane %v4300, 5
        %v4426 = vsel %vm2257, %v4424, %v4425
        %v4427 = vrot.slane %v4425, 4
        %v4428 = vrot.slane %v4301, 5
        %v4429 = vsel %vm2257, %v4427, %v4428
        %v4430 = vrot.slane %v4302, 5
        %v4431 = vrot.slane %v4430, 4
        %v4432 = vrot.slane %v4303, 5
        %v4433 = vsel %vm2257, %v4431, %v4432
        %v4434 = vrot.slane %v4432, 4
        %v4435 = vrot.slane %v4304, 5
        %v4436 = vsel %vm2257, %v4434, %v4435
        %v4437 = vrot.slane %v4305, 5
        %v4438 = vrot.slane %v4437, 4
        %v4439 = vrot.slane %v4306, 5
        %v4440 = vsel %vm2257, %v4438, %v4439
        %v4441 = vrot.slane %v4439, 4
        %v4442 = vrot.slane %v4307, 5
        %v4443 = vsel %vm2257, %v4441, %v4442
        %v4444 = vrot.slane %v4308, 5
        %v4445 = vrot.slane %v4444, 4
        %v4446 = vrot.slane %v4309, 5
        %v4447 = vsel %vm2257, %v4445, %v4446
        %v4448 = vrot.slane %v4446, 4
        %v4449 = vrot.slane %v4310, 5
        %v4450 = vsel %vm2257, %v4448, %v4449
        %v4451 = vrot.slane %v4311, 5
        %v4452 = vrot.slane %v4451, 4
        %v4453 = vrot.slane %v4312, 5
        %v4454 = vsel %vm2257, %v4452, %v4453
        %v4455 = vrot.slane %v4453, 4
        %v4456 = vrot.slane %v4313, 5
        %v4457 = vsel %vm2257, %v4455, %v4456
        %v4458 = vrot.slane %v4314, 5
        %v4459 = vrot.slane %v4458, 4
        %v4460 = vrot.slane %v4315, 5
        %v4461 = vsel %vm2257, %v4459, %v4460
        %v4462 = vrot.slane %v4460, 4
        %v4463 = vrot.slane %v4316, 5
        %v4464 = vsel %vm2257, %v4462, %v4463
        %v4465 = vrot.slane %v4317, 5
        %v4466 = vrot.slane %v4465, 4
        %v4467 = vrot.slane %v4318, 5
        %v4468 = vsel %vm2257, %v4466, %v4467
        %v4469 = vrot.slane %v4467, 4
        %v4470 = vrot.slane %v4319, 5
        %v4471 = vsel %vm2257, %v4469, %v4470
        %v4472 = vrot.slane %v4320, 5
        %v4473 = vrot.slane %v4472, 4
        %v4474 = vrot.slane %v4321, 5
        %v4475 = vsel %vm2257, %v4473, %v4474
        %v4476 = vrot.slane %v4474, 4
        %v4477 = vrot.slane %v4322, 5
        %v4478 = vsel %vm2257, %v4476, %v4477
        %v4479 = vrot.slane %v4323, 5
        %v4480 = vrot.slane %v4479, 4
        %v4481 = vrot.slane %v4324, 5
        %v4482 = vsel %vm2257, %v4480, %v4481
        %v4483 = vrot.slane %v4481, 4
        %v4484 = vrot.slane %v4325, 5
        %v4485 = vsel %vm2257, %v4483, %v4484
        %4518 = vst.msk [vmem:[#allocation3 + $0x8] sm:$0xf] %vm1395, %v4377
        %4519 = vst.msk [vmem:[#allocation3 + $0x14] sm:$0xf] %vm1395, %v4380
        %4520 = vst.msk [vmem:[#allocation3 + $0x20] sm:$0xf] %vm1395, %v4384
        %4521 = vst.msk [vmem:[#allocation3 + $0x2c] sm:$0xf] %vm1395, %v4387
        %4522 = vst.msk [vmem:[#allocation3 + $0x38] sm:$0xf] %vm1395, %v4391
        %4523 = vst.msk [vmem:[#allocation3 + $0x44] sm:$0xf] %vm1395, %v4394
        %4524 = vst.msk [vmem:[#allocation3 + $0x50] sm:$0xf] %vm1395, %v4398
        %4525 = vst.msk [vmem:[#allocation3 + $0x5c] sm:$0xf] %vm1395, %v4401
        %4526 = vst.msk [vmem:[#allocation3 + $0x68] sm:$0xf] %vm1395, %v4405
        %4527 = vst.msk [vmem:[#allocation3 + $0x74] sm:$0xf] %vm1395, %v4408
        %4528 = vst.msk [vmem:[#allocation3 + $0x80] sm:$0xf] %vm1395, %v4412
        %4529 = vst.msk [vmem:[#allocation3 + $0x8c] sm:$0xf] %vm1395, %v4415
        %4530 = vst.msk [vmem:[#allocation3 + $0x98] sm:$0xf] %vm1395, %v4419
        %4531 = vst.msk [vmem:[#allocation3 + $0xa4] sm:$0xf] %vm1395, %v4422
        %4532 = vst.msk [vmem:[#allocation3 + $0xb0] sm:$0xf] %vm1395, %v4426
        %4533 = vst.msk [vmem:[#allocation3 + $0xbc] sm:$0xf] %vm1395, %v4429
        %4534 = vst.msk [vmem:[#allocation3 + $0xc8] sm:$0xf] %vm1395, %v4433
        %4535 = vst.msk [vmem:[#allocation3 + $0xd4] sm:$0xf] %vm1395, %v4436
        %4536 = vst.msk [vmem:[#allocation3 + $0xe0] sm:$0xf] %vm1395, %v4440
        %4537 = vst.msk [vmem:[#allocation3 + $0xec] sm:$0xf] %vm1395, %v4443
        %4538 = vst.msk [vmem:[#allocation3 + $0xf8] sm:$0xf] %vm1395, %v4447
        %4539 = vst.msk [vmem:[#allocation3 + $0x104] sm:$0xf] %vm1395, %v4450
        %4540 = vst.msk [vmem:[#allocation3 + $0x110] sm:$0xf] %vm1395, %v4454
        %4541 = vst.msk [vmem:[#allocation3 + $0x11c] sm:$0xf] %vm1395, %v4457
        %4542 = vst.msk [vmem:[#allocation3 + $0x128] sm:$0xf] %vm1395, %v4461
        %4543 = vst.msk [vmem:[#allocation3 + $0x134] sm:$0xf] %vm1395, %v4464
        %4544 = vst.msk [vmem:[#allocation3 + $0x140] sm:$0xf] %vm1395, %v4468
        %4545 = vst.msk [vmem:[#allocation3 + $0x14c] sm:$0xf] %vm1395, %v4471
        %4546 = vst.msk [vmem:[#allocation3 + $0x158] sm:$0xf] %vm1395, %v4475
        %4547 = vst.msk [vmem:[#allocation3 + $0x164] sm:$0xf] %vm1395, %v4478
        %4548 = vst.msk [vmem:[#allocation3 + $0x170] sm:$0xf] %vm1395, %v4482
        %4549 = vst.msk [vmem:[#allocation3 + $0x17c] sm:$0xf] %vm1395, %v4485
        %v4550 = vld [vmem:[#allocation3] sm:$0xff]
        %v4551 = vld [vmem:[#allocation3 + $0x8] sm:$0xf]
        %v4552 = vld [vmem:[#allocation3 + $0xc] sm:$0xff]
        %v4553 = vld [vmem:[#allocation3 + $0x14] sm:$0xf]
        %v4554 = vld [vmem:[#allocation3 + $0x18] sm:$0xff]
        %v4555 = vld [vmem:[#allocation3 + $0x20] sm:$0xf]
        %v4556 = vld [vmem:[#allocation3 + $0x24] sm:$0xff]
        %v4557 = vld [vmem:[#allocation3 + $0x2c] sm:$0xf]
        %v4558 = vld [vmem:[#allocation3 + $0x30] sm:$0xff]
        %v4559 = vld [vmem:[#allocation3 + $0x38] sm:$0xf]
        %v4560 = vld [vmem:[#allocation3 + $0x3c] sm:$0xff]
        %v4561 = vld [vmem:[#allocation3 + $0x44] sm:$0xf]
        %v4562 = vld [vmem:[#allocation3 + $0x48] sm:$0xff]
        %v4563 = vld [vmem:[#allocation3 + $0x50] sm:$0xf]
        %v4564 = vld [vmem:[#allocation3 + $0x54] sm:$0xff]
        %v4565 = vld [vmem:[#allocation3 + $0x5c] sm:$0xf]
        %v4566 = vld [vmem:[#allocation3 + $0x60] sm:$0xff]
        %v4567 = vld [vmem:[#allocation3 + $0x68] sm:$0xf]
        %v4568 = vld [vmem:[#allocation3 + $0x6c] sm:$0xff]
        %v4569 = vld [vmem:[#allocation3 + $0x74] sm:$0xf]
        %v4570 = vld [vmem:[#allocation3 + $0x78] sm:$0xff]
        %v4571 = vld [vmem:[#allocation3 + $0x80] sm:$0xf]
        %v4572 = vld [vmem:[#allocation3 + $0x84] sm:$0xff]
        %v4573 = vld [vmem:[#allocation3 + $0x8c] sm:$0xf]
        %v4574 = vld [vmem:[#allocation3 + $0x90] sm:$0xff]
        %v4575 = vld [vmem:[#allocation3 + $0x98] sm:$0xf]
        %v4576 = vld [vmem:[#allocation3 + $0x9c] sm:$0xff]
        %v4577 = vld [vmem:[#allocation3 + $0xa4] sm:$0xf]
        %v4578 = vld [vmem:[#allocation3 + $0xa8] sm:$0xff]
        %v4579 = vld [vmem:[#allocation3 + $0xb0] sm:$0xf]
        %v4580 = vld [vmem:[#allocation3 + $0xb4] sm:$0xff]
        %v4581 = vld [vmem:[#allocation3 + $0xbc] sm:$0xf]
        %v4582 = vld [vmem:[#allocation3 + $0xc0] sm:$0xff]
        %v4583 = vld [vmem:[#allocation3 + $0xc8] sm:$0xf]
        %v4584 = vld [vmem:[#allocation3 + $0xcc] sm:$0xff]
        %v4585 = vld [vmem:[#allocation3 + $0xd4] sm:$0xf]
        %v4586 = vld [vmem:[#allocation3 + $0xd8] sm:$0xff]
        %v4587 = vld [vmem:[#allocation3 + $0xe0] sm:$0xf]
        %v4588 = vld [vmem:[#allocation3 + $0xe4] sm:$0xff]
        %v4589 = vld [vmem:[#allocation3 + $0xec] sm:$0xf]
        %v4590 = vld [vmem:[#allocation3 + $0xf0] sm:$0xff]
        %v4591 = vld [vmem:[#allocation3 + $0xf8] sm:$0xf]
        %v4592 = vld [vmem:[#allocation3 + $0xfc] sm:$0xff]
        %v4593 = vld [vmem:[#allocation3 + $0x104] sm:$0xf]
        %v4594 = vld [vmem:[#allocation3 + $0x108] sm:$0xff]
        %v4595 = vld [vmem:[#allocation3 + $0x110] sm:$0xf]
        %v4596 = vld [vmem:[#allocation3 + $0x114] sm:$0xff]
        %v4597 = vld [vmem:[#allocation3 + $0x11c] sm:$0xf]
        %v4598 = vld [vmem:[#allocation3 + $0x120] sm:$0xff]
        %v4599 = vld [vmem:[#allocation3 + $0x128] sm:$0xf]
        %v4600 = vld [vmem:[#allocation3 + $0x12c] sm:$0xff]
        %v4601 = vld [vmem:[#allocation3 + $0x134] sm:$0xf]
        %v4602 = vld [vmem:[#allocation3 + $0x138] sm:$0xff]
        %v4603 = vld [vmem:[#allocation3 + $0x140] sm:$0xf]
        %v4604 = vld [vmem:[#allocation3 + $0x144] sm:$0xff]
        %v4605 = vld [vmem:[#allocation3 + $0x14c] sm:$0xf]
        %v4606 = vld [vmem:[#allocation3 + $0x150] sm:$0xff]
        %v4607 = vld [vmem:[#allocation3 + $0x158] sm:$0xf]
        %v4608 = vld [vmem:[#allocation3 + $0x15c] sm:$0xff]
        %v4609 = vld [vmem:[#allocation3 + $0x164] sm:$0xf]
        %v4610 = vld [vmem:[#allocation3 + $0x168] sm:$0xff]
        %v4611 = vld [vmem:[#allocation3 + $0x170] sm:$0xf]
        %v4612 = vld [vmem:[#allocation3 + $0x174] sm:$0xff]
        %v4613 = vld [vmem:[#allocation3 + $0x17c] sm:$0xf]
        %v4614 = vld [vmem:[%s5] sm:$0xf]
        %v4615 = vld [vmem:[%s5 + $0x4] sm:$0xf]
        %v4616 = vld [vmem:[%s5 + $0x8] sm:$0xf]
        %v4617 = vld [vmem:[%s5 + $0xc] sm:$0xf]
        %v4618 = vld [vmem:[%s5 + $0x10] sm:$0xf]
        %v4619 = vld [vmem:[%s5 + $0x14] sm:$0xf]
        %v4620 = vld [vmem:[%s5 + $0x18] sm:$0xf]
        %v4621 = vld [vmem:[%s5 + $0x1c] sm:$0xf]
        %v4622 = vld [vmem:[%s5 + $0x20] sm:$0xf]
        %v4623 = vld [vmem:[%s5 + $0x24] sm:$0xf]
        %v4624 = vld [vmem:[%s5 + $0x28] sm:$0xf]
        %v4625 = vld [vmem:[%s5 + $0x2c] sm:$0xf]
        %v4626 = vld [vmem:[%s5 + $0x30] sm:$0xf]
        %v4627 = vld [vmem:[%s5 + $0x34] sm:$0xf]
        %v4628 = vld [vmem:[%s5 + $0x38] sm:$0xf]
        %v4629 = vld [vmem:[%s5 + $0x3c] sm:$0xf]
        %v4630 = vld [vmem:[%s5 + $0x40] sm:$0xf]
        %v4631 = vld [vmem:[%s5 + $0x44] sm:$0xf]
        %v4632 = vld [vmem:[%s5 + $0x48] sm:$0xf]
        %v4633 = vld [vmem:[%s5 + $0x4c] sm:$0xf]
        %v4634 = vld [vmem:[%s5 + $0x50] sm:$0xf]
        %v4635 = vld [vmem:[%s5 + $0x54] sm:$0xf]
        %v4636 = vld [vmem:[%s5 + $0x58] sm:$0xf]
        %v4637 = vld [vmem:[%s5 + $0x5c] sm:$0xf]
        %v4638 = vld [vmem:[%s5 + $0x60] sm:$0xf]
        %v4639 = vld [vmem:[%s5 + $0x64] sm:$0xf]
        %v4640 = vld [vmem:[%s5 + $0x68] sm:$0xf]
        %v4641 = vld [vmem:[%s5 + $0x6c] sm:$0xf]
        %v4642 = vld [vmem:[%s5 + $0x70] sm:$0xf]
        %v4643 = vld [vmem:[%s5 + $0x74] sm:$0xf]
        %v4644 = vld [vmem:[%s5 + $0x78] sm:$0xf]
        %v4645 = vld [vmem:[%s5 + $0x7c] sm:$0xf]
        %v4646 = vld [vmem:[%s5 + $0x80] sm:$0xf]
        %v4647 = vld [vmem:[%s5 + $0x84] sm:$0xf]
        %v4648 = vld [vmem:[%s5 + $0x88] sm:$0xf]
        %v4649 = vld [vmem:[%s5 + $0x8c] sm:$0xf]
        %v4650 = vld [vmem:[%s6] sm:$0x1]
        %v4652 = vperm.slane %v4650, 0
        %v4718 = vunpack.c.l.b16 %v4550
        %v4719 = vunpack.c.h.b16 %v4550
        %v4720 = vunpack.c.l.b16 %v4551
        %v4721 = vunpack.c.l.b16 %v4552
        %v4722 = vunpack.c.h.b16 %v4552
        %v4723 = vunpack.c.l.b16 %v4553
        %v4724 = vunpack.c.l.b16 %v4554
        %v4725 = vunpack.c.h.b16 %v4554
        %v4726 = vunpack.c.l.b16 %v4555
        %v4727 = vunpack.c.l.b16 %v4556
        %v4728 = vunpack.c.h.b16 %v4556
        %v4729 = vunpack.c.l.b16 %v4557
        %v4730 = vunpack.c.l.b16 %v4558
        %v4731 = vunpack.c.h.b16 %v4558
        %v4732 = vunpack.c.l.b16 %v4559
        %v4733 = vunpack.c.l.b16 %v4560
        %v4734 = vunpack.c.h.b16 %v4560
        %v4735 = vunpack.c.l.b16 %v4561
        %v4736 = vunpack.c.l.b16 %v4562
        %v4737 = vunpack.c.h.b16 %v4562
        %v4738 = vunpack.c.l.b16 %v4563
        %v4739 = vunpack.c.l.b16 %v4564
        %v4740 = vunpack.c.h.b16 %v4564
        %v4741 = vunpack.c.l.b16 %v4565
        %v4742 = vunpack.c.l.b16 %v4566
        %v4743 = vunpack.c.h.b16 %v4566
        %v4744 = vunpack.c.l.b16 %v4567
        %v4745 = vunpack.c.l.b16 %v4568
        %v4746 = vunpack.c.h.b16 %v4568
        %v4747 = vunpack.c.l.b16 %v4569
        %v4748 = vunpack.c.l.b16 %v4570
        %v4749 = vunpack.c.h.b16 %v4570
        %v4750 = vunpack.c.l.b16 %v4571
        %v4751 = vunpack.c.l.b16 %v4572
        %v4752 = vunpack.c.h.b16 %v4572
        %v4753 = vunpack.c.l.b16 %v4573
        %v4754 = vunpack.c.l.b16 %v4574
        %v4755 = vunpack.c.h.b16 %v4574
        %v4756 = vunpack.c.l.b16 %v4575
        %v4757 = vunpack.c.l.b16 %v4576
        %v4758 = vunpack.c.h.b16 %v4576
        %v4759 = vunpack.c.l.b16 %v4577
        %v4760 = vunpack.c.l.b16 %v4578
        %v4761 = vunpack.c.h.b16 %v4578
        %v4762 = vunpack.c.l.b16 %v4579
        %v4763 = vunpack.c.l.b16 %v4580
        %v4764 = vunpack.c.h.b16 %v4580
        %v4765 = vunpack.c.l.b16 %v4581
        %v4766 = vunpack.c.l.b16 %v4582
        %v4767 = vunpack.c.h.b16 %v4582
        %v4768 = vunpack.c.l.b16 %v4583
        %v4769 = vunpack.c.l.b16 %v4584
        %v4770 = vunpack.c.h.b16 %v4584
        %v4771 = vunpack.c.l.b16 %v4585
        %v4772 = vunpack.c.l.b16 %v4586
        %v4773 = vunpack.c.h.b16 %v4586
        %v4774 = vunpack.c.l.b16 %v4587
        %v4775 = vunpack.c.l.b16 %v4588
        %v4776 = vunpack.c.h.b16 %v4588
        %v4777 = vunpack.c.l.b16 %v4589
        %v4778 = vunpack.c.l.b16 %v4590
        %v4779 = vunpack.c.h.b16 %v4590
        %v4780 = vunpack.c.l.b16 %v4591
        %v4781 = vunpack.c.l.b16 %v4592
        %v4782 = vunpack.c.h.b16 %v4592
        %v4783 = vunpack.c.l.b16 %v4593
        %v4784 = vunpack.c.l.b16 %v4594
        %v4785 = vunpack.c.h.b16 %v4594
        %v4786 = vunpack.c.l.b16 %v4595
        %v4787 = vunpack.c.l.b16 %v4596
        %v4788 = vunpack.c.h.b16 %v4596
        %v4789 = vunpack.c.l.b16 %v4597
        %v4790 = vunpack.c.l.b16 %v4598
        %v4791 = vunpack.c.h.b16 %v4598
        %v4792 = vunpack.c.l.b16 %v4599
        %v4793 = vunpack.c.l.b16 %v4600
        %v4794 = vunpack.c.h.b16 %v4600
        %v4795 = vunpack.c.l.b16 %v4601
        %v4796 = vunpack.c.l.b16 %v4602
        %v4797 = vunpack.c.h.b16 %v4602
        %v4798 = vunpack.c.l.b16 %v4603
        %v4799 = vunpack.c.l.b16 %v4604
        %v4800 = vunpack.c.h.b16 %v4604
        %v4801 = vunpack.c.l.b16 %v4605
        %v4802 = vunpack.c.l.b16 %v4606
        %v4803 = vunpack.c.h.b16 %v4606
        %v4804 = vunpack.c.l.b16 %v4607
        %v4805 = vunpack.c.l.b16 %v4608
        %v4806 = vunpack.c.h.b16 %v4608
        %v4807 = vunpack.c.l.b16 %v4609
        %v4808 = vunpack.c.l.b16 %v4610
        %v4809 = vunpack.c.h.b16 %v4610
        %v4810 = vunpack.c.l.b16 %v4611
        %v4811 = vunpack.c.l.b16 %v4612
        %v4812 = vunpack.c.h.b16 %v4612
        %v4813 = vunpack.c.l.b16 %v4613
        %v4814 = vpack.c.b16 %v4721, %v4718
        %v4815 = vpack.c.b16 %v4722, %v4719
        %v4816 = vpack.c.b16 %v4723, %v4720
        %v4817 = vpack.c.b16 %v4727, %v4724
        %v4818 = vpack.c.b16 %v4728, %v4725
        %v4819 = vpack.c.b16 %v4729, %v4726
        %v4820 = vpack.c.b16 %v4733, %v4730
        %v4821 = vpack.c.b16 %v4734, %v4731
        %v4822 = vpack.c.b16 %v4735, %v4732
        %v4823 = vpack.c.b16 %v4739, %v4736
        %v4824 = vpack.c.b16 %v4740, %v4737
        %v4825 = vpack.c.b16 %v4741, %v4738
        %v4826 = vpack.c.b16 %v4745, %v4742
        %v4827 = vpack.c.b16 %v4746, %v4743
        %v4828 = vpack.c.b16 %v4747, %v4744
        %v4829 = vpack.c.b16 %v4751, %v4748
        %v4830 = vpack.c.b16 %v4752, %v4749
        %v4831 = vpack.c.b16 %v4753, %v4750
        %v4832 = vpack.c.b16 %v4757, %v4754
        %v4833 = vpack.c.b16 %v4758, %v4755
        %v4834 = vpack.c.b16 %v4759, %v4756
        %v4835 = vpack.c.b16 %v4763, %v4760
        %v4836 = vpack.c.b16 %v4764, %v4761
        %v4837 = vpack.c.b16 %v4765, %v4762
        %v4838 = vpack.c.b16 %v4769, %v4766
        %v4839 = vpack.c.b16 %v4770, %v4767
        %v4840 = vpack.c.b16 %v4771, %v4768
        %v4841 = vpack.c.b16 %v4775, %v4772
        %v4842 = vpack.c.b16 %v4776, %v4773
        %v4843 = vpack.c.b16 %v4777, %v4774
        %v4844 = vpack.c.b16 %v4781, %v4778
        %v4845 = vpack.c.b16 %v4782, %v4779
        %v4846 = vpack.c.b16 %v4783, %v4780
        %v4847 = vpack.c.b16 %v4787, %v4784
        %v4848 = vpack.c.b16 %v4788, %v4785
        %v4849 = vpack.c.b16 %v4789, %v4786
        %v4850 = vpack.c.b16 %v4793, %v4790
        %v4851 = vpack.c.b16 %v4794, %v4791
        %v4852 = vpack.c.b16 %v4795, %v4792
        %v4853 = vpack.c.b16 %v4799, %v4796
        %v4854 = vpack.c.b16 %v4800, %v4797
        %v4855 = vpack.c.b16 %v4801, %v4798
        %v4856 = vpack.c.b16 %v4805, %v4802
        %v4857 = vpack.c.b16 %v4806, %v4803
        %v4858 = vpack.c.b16 %v4807, %v4804
        %v4859 = vpack.c.b16 %v4811, %v4808
        %v4860 = vpack.c.b16 %v4812, %v4809
        %v4861 = vpack.c.b16 %v4813, %v4810
        %v4930 = vunpack.c.l.b16 %v4614
        %v4931 = vunpack.c.l.b16 %v4615
        %v4932 = vunpack.c.l.b16 %v4616
        %v4933 = vunpack.c.l.b16 %v4617
        %v4934 = vunpack.c.l.b16 %v4618
        %v4935 = vunpack.c.l.b16 %v4619
        %v4936 = vunpack.c.l.b16 %v4620
        %v4937 = vunpack.c.l.b16 %v4621
        %v4938 = vunpack.c.l.b16 %v4622
        %v4939 = vunpack.c.l.b16 %v4623
        %v4940 = vunpack.c.l.b16 %v4624
        %v4941 = vunpack.c.l.b16 %v4625
        %v4942 = vunpack.c.l.b16 %v4626
        %v4943 = vunpack.c.l.b16 %v4627
        %v4944 = vunpack.c.l.b16 %v4628
        %v4945 = vunpack.c.l.b16 %v4629
        %v4946 = vunpack.c.l.b16 %v4630
        %v4947 = vunpack.c.l.b16 %v4631
        %v4948 = vunpack.c.l.b16 %v4632
        %v4949 = vunpack.c.l.b16 %v4633
        %v4950 = vunpack.c.l.b16 %v4634
        %v4951 = vunpack.c.l.b16 %v4635
        %v4952 = vunpack.c.l.b16 %v4636
        %v4953 = vunpack.c.l.b16 %v4637
        %v4954 = vunpack.c.l.b16 %v4638
        %v4955 = vunpack.c.l.b16 %v4639
        %v4956 = vunpack.c.l.b16 %v4640
        %v4957 = vunpack.c.l.b16 %v4641
        %v4958 = vunpack.c.l.b16 %v4642
        %v4959 = vunpack.c.l.b16 %v4643
        %v4960 = vunpack.c.l.b16 %v4644
        %v4961 = vunpack.c.l.b16 %v4645
        %v4962 = vunpack.c.l.b16 %v4646
        %v4963 = vunpack.c.l.b16 %v4647
        %v4964 = vunpack.c.l.b16 %v4648
        %v4965 = vunpack.c.l.b16 %v4649
        %v4966 = vpack.c.b16 %v4931, %v4930
        %v4967 = vpack.c.b16 %v4933, %v4932
        %v4968 = vpack.c.b16 %v4935, %v4934
        %v4969 = vpack.c.b16 %v4937, %v4936
        %v4970 = vpack.c.b16 %v4939, %v4938
        %v4971 = vpack.c.b16 %v4941, %v4940
        %v4972 = vpack.c.b16 %v4943, %v4942
        %v4973 = vpack.c.b16 %v4945, %v4944
        %v4974 = vpack.c.b16 %v4947, %v4946
        %v4975 = vpack.c.b16 %v4949, %v4948
        %v4976 = vpack.c.b16 %v4951, %v4950
        %v4977 = vpack.c.b16 %v4953, %v4952
        %v4978 = vpack.c.b16 %v4955, %v4954
        %v4979 = vpack.c.b16 %v4957, %v4956
        %v4980 = vpack.c.b16 %v4959, %v4958
        %v4981 = vpack.c.b16 %v4961, %v4960
        %v4982 = vpack.c.b16 %v4963, %v4962
        %v4983 = vpack.c.b16 %v4965, %v4964
        %vm5002 = vcmask 261120
        %v5004 = vsel %vm5002, %v4816, 0
        %v5007 = vsel %vm5002, %v4819, 0
        %v5010 = vsel %vm5002, %v4822, 0
        %v5013 = vsel %vm5002, %v4825, 0
        %v5016 = vsel %vm5002, %v4828, 0
        %v5019 = vsel %vm5002, %v4831, 0
        %v5022 = vsel %vm5002, %v4834, 0
        %v5025 = vsel %vm5002, %v4837, 0
        %v5028 = vsel %vm5002, %v4840, 0
        %v5031 = vsel %vm5002, %v4843, 0
        %v5034 = vsel %vm5002, %v4846, 0
        %v5037 = vsel %vm5002, %v4849, 0
        %v5040 = vsel %vm5002, %v4852, 0
        %v5043 = vsel %vm5002, %v4855, 0
        %v5046 = vsel %vm5002, %v4858, 0
        %v5049 = vsel %vm5002, %v4861, 0
        %5051 = vmatpush.bf16.msra.mxu0 %v4973
        %5052 = vmatpush.bf16.msra.mxu0 %v4972
        %5053 = vmatpush.bf16.msra.mxu0 %v4971
        %5054 = vmatpush.bf16.msra.mxu0 %v4970
        %5055 = vmatpush.bf16.msra.mxu0 %v4969
        %5056 = vmatpush.bf16.msra.mxu0 %v4968
        %5057 = vmatpush.bf16.msra.mxu0 %v4967
        %5058 = vmatpush.bf16.msra.mxu0 %v4966
        %5059 = vmatmul.bf16.gmra.mxu0 %v4814
        %v5060 = vpop.f32.mrf.mxu0
        %v5061 = vadd.f32 %v4652, %v5060
        %v5062 = vpop.f32.mrf.mxu0
        %v5063 = vadd.f32 %v4652, %v5062
        %5064 = vmatmul.bf16.gmra.mxu0 %v4817
        %v5065 = vpop.f32.mrf.mxu0
        %v5066 = vadd.f32 %v4652, %v5065
        %v5067 = vpop.f32.mrf.mxu0
        %v5068 = vadd.f32 %v4652, %v5067
        %5069 = vmatmul.bf16.gmra.mxu0 %v4820
        %v5070 = vpop.f32.mrf.mxu0
        %v5071 = vadd.f32 %v4652, %v5070
        %v5072 = vpop.f32.mrf.mxu0
        %v5073 = vadd.f32 %v4652, %v5072
        %5074 = vmatmul.bf16.gmra.mxu0 %v4823
        %v5075 = vpop.f32.mrf.mxu0
        %v5076 = vadd.f32 %v4652, %v5075
        %v5077 = vpop.f32.mrf.mxu0
        %v5078 = vadd.f32 %v4652, %v5077
        %5079 = vmatmul.bf16.gmra.mxu0 %v4826
        %v5080 = vpop.f32.mrf.mxu0
        %v5081 = vadd.f32 %v4652, %v5080
        %v5082 = vpop.f32.mrf.mxu0
        %v5083 = vadd.f32 %v4652, %v5082
        %5084 = vmatmul.bf16.gmra.mxu0 %v4829
        %v5085 = vpop.f32.mrf.mxu0
        %v5086 = vadd.f32 %v4652, %v5085
        %v5087 = vpop.f32.mrf.mxu0
        %v5088 = vadd.f32 %v4652, %v5087
        %5089 = vmatmul.bf16.gmra.mxu0 %v4832
        %v5090 = vpop.f32.mrf.mxu0
        %v5091 = vadd.f32 %v4652, %v5090
        %v5092 = vpop.f32.mrf.mxu0
        %v5093 = vadd.f32 %v4652, %v5092
        %5094 = vmatmul.bf16.gmra.mxu0 %v4835
        %v5095 = vpop.f32.mrf.mxu0
        %v5096 = vadd.f32 %v4652, %v5095
        %v5097 = vpop.f32.mrf.mxu0
        %v5098 = vadd.f32 %v4652, %v5097
        %5099 = vmatmul.bf16.gmra.mxu0 %v4838
        %v5100 = vpop.f32.mrf.mxu0
        %v5101 = vadd.f32 %v4652, %v5100
        %v5102 = vpop.f32.mrf.mxu0
        %v5103 = vadd.f32 %v4652, %v5102
        %5104 = vmatmul.bf16.gmra.mxu0 %v4841
        %v5105 = vpop.f32.mrf.mxu0
        %v5106 = vadd.f32 %v4652, %v5105
        %v5107 = vpop.f32.mrf.mxu0
        %v5108 = vadd.f32 %v4652, %v5107
        %5109 = vmatmul.bf16.gmra.mxu0 %v4844
        %v5110 = vpop.f32.mrf.mxu0
        %v5111 = vadd.f32 %v4652, %v5110
        %v5112 = vpop.f32.mrf.mxu0
        %v5113 = vadd.f32 %v4652, %v5112
        %5114 = vmatmul.bf16.gmra.mxu0 %v4847
        %v5115 = vpop.f32.mrf.mxu0
        %v5116 = vadd.f32 %v4652, %v5115
        %v5117 = vpop.f32.mrf.mxu0
        %v5118 = vadd.f32 %v4652, %v5117
        %5119 = vmatmul.bf16.gmra.mxu0 %v4850
        %v5120 = vpop.f32.mrf.mxu0
        %v5121 = vadd.f32 %v4652, %v5120
        %v5122 = vpop.f32.mrf.mxu0
        %v5123 = vadd.f32 %v4652, %v5122
        %5124 = vmatmul.bf16.gmra.mxu0 %v4853
        %v5125 = vpop.f32.mrf.mxu0
        %v5126 = vadd.f32 %v4652, %v5125
        %v5127 = vpop.f32.mrf.mxu0
        %v5128 = vadd.f32 %v4652, %v5127
        %5129 = vmatmul.bf16.gmra.mxu0 %v4856
        %v5130 = vpop.f32.mrf.mxu0
        %v5131 = vadd.f32 %v4652, %v5130
        %v5132 = vpop.f32.mrf.mxu0
        %v5133 = vadd.f32 %v4652, %v5132
        %5134 = vmatmul.bf16.gmra.mxu0 %v4859
        %v5135 = vpop.f32.mrf.mxu0
        %v5136 = vadd.f32 %v4652, %v5135
        %v5137 = vpop.f32.mrf.mxu0
        %v5138 = vadd.f32 %v4652, %v5137
        %5139 = vdwg.mxu0
        %5140 = vmatpush.bf16.msra.mxu0 %v4981
        %5141 = vmatpush.bf16.msra.mxu0 %v4980
        %5142 = vmatpush.bf16.msra.mxu0 %v4979
        %5143 = vmatpush.bf16.msra.mxu0 %v4978
        %5144 = vmatpush.bf16.msra.mxu0 %v4977
        %5145 = vmatpush.bf16.msra.mxu0 %v4976
        %5146 = vmatpush.bf16.msra.mxu0 %v4975
        %5147 = vmatpush.bf16.msra.mxu0 %v4974
        %5148 = vmatmul.bf16.gmra.mxu0 %v4815
        %v5149 = vpop.f32.mrf.mxu0
        %v5150 = vadd.f32 %v5061, %v5149
        %v5151 = vpop.f32.mrf.mxu0
        %v5152 = vadd.f32 %v5063, %v5151
        %5153 = vmatmul.bf16.gmra.mxu0 %v4818
        %v5154 = vpop.f32.mrf.mxu0
        %v5155 = vadd.f32 %v5066, %v5154
        %v5156 = vpop.f32.mrf.mxu0
        %v5157 = vadd.f32 %v5068, %v5156
        %5158 = vmatmul.bf16.gmra.mxu0 %v4821
        %v5159 = vpop.f32.mrf.mxu0
        %v5160 = vadd.f32 %v5071, %v5159
        %v5161 = vpop.f32.mrf.mxu0
        %v5162 = vadd.f32 %v5073, %v5161
        %5163 = vmatmul.bf16.gmra.mxu0 %v4824
        %v5164 = vpop.f32.mrf.mxu0
        %v5165 = vadd.f32 %v5076, %v5164
        %v5166 = vpop.f32.mrf.mxu0
        %v5167 = vadd.f32 %v5078, %v5166
        %5168 = vmatmul.bf16.gmra.mxu0 %v4827
        %v5169 = vpop.f32.mrf.mxu0
        %v5170 = vadd.f32 %v5081, %v5169
        %v5171 = vpop.f32.mrf.mxu0
        %v5172 = vadd.f32 %v5083, %v5171
        %5173 = vmatmul.bf16.gmra.mxu0 %v4830
        %v5174 = vpop.f32.mrf.mxu0
        %v5175 = vadd.f32 %v5086, %v5174
        %v5176 = vpop.f32.mrf.mxu0
        %v5177 = vadd.f32 %v5088, %v5176
        %5178 = vmatmul.bf16.gmra.mxu0 %v4833
        %v5179 = vpop.f32.mrf.mxu0
        %v5180 = vadd.f32 %v5091, %v5179
        %v5181 = vpop.f32.mrf.mxu0
        %v5182 = vadd.f32 %v5093, %v5181
        %5183 = vmatmul.bf16.gmra.mxu0 %v4836
        %v5184 = vpop.f32.mrf.mxu0
        %v5185 = vadd.f32 %v5096, %v5184
        %v5186 = vpop.f32.mrf.mxu0
        %v5187 = vadd.f32 %v5098, %v5186
        %5188 = vmatmul.bf16.gmra.mxu0 %v4839
        %v5189 = vpop.f32.mrf.mxu0
        %v5190 = vadd.f32 %v5101, %v5189
        %v5191 = vpop.f32.mrf.mxu0
        %v5192 = vadd.f32 %v5103, %v5191
        %5193 = vmatmul.bf16.gmra.mxu0 %v4842
        %v5194 = vpop.f32.mrf.mxu0
        %v5195 = vadd.f32 %v5106, %v5194
        %v5196 = vpop.f32.mrf.mxu0
        %v5197 = vadd.f32 %v5108, %v5196
        %5198 = vmatmul.bf16.gmra.mxu0 %v4845
        %v5199 = vpop.f32.mrf.mxu0
        %v5200 = vadd.f32 %v5111, %v5199
        %v5201 = vpop.f32.mrf.mxu0
        %v5202 = vadd.f32 %v5113, %v5201
        %5203 = vmatmul.bf16.gmra.mxu0 %v4848
        %v5204 = vpop.f32.mrf.mxu0
        %v5205 = vadd.f32 %v5116, %v5204
        %v5206 = vpop.f32.mrf.mxu0
        %v5207 = vadd.f32 %v5118, %v5206
        %5208 = vmatmul.bf16.gmra.mxu0 %v4851
        %v5209 = vpop.f32.mrf.mxu0
        %v5210 = vadd.f32 %v5121, %v5209
        %v5211 = vpop.f32.mrf.mxu0
        %v5212 = vadd.f32 %v5123, %v5211
        %5213 = vmatmul.bf16.gmra.mxu0 %v4854
        %v5214 = vpop.f32.mrf.mxu0
        %v5215 = vadd.f32 %v5126, %v5214
        %v5216 = vpop.f32.mrf.mxu0
        %v5217 = vadd.f32 %v5128, %v5216
        %5218 = vmatmul.bf16.gmra.mxu0 %v4857
        %v5219 = vpop.f32.mrf.mxu0
        %v5220 = vadd.f32 %v5131, %v5219
        %v5221 = vpop.f32.mrf.mxu0
        %v5222 = vadd.f32 %v5133, %v5221
        %5223 = vmatmul.bf16.gmra.mxu0 %v4860
        %v5224 = vpop.f32.mrf.mxu0
        %v5225 = vadd.f32 %v5136, %v5224
        %v5226 = vpop.f32.mrf.mxu0
        %v5227 = vadd.f32 %v5138, %v5226
        %5228 = vdwg.mxu0
        %5229 = vmatpush.bf16.msra.mxu0 0
        %5230 = vmatpush.bf16.msra.mxu0 0
        %5231 = vmatpush.bf16.msra.mxu0 0
        %5232 = vmatpush.bf16.msra.mxu0 0
        %5233 = vmatpush.bf16.msra.mxu0 0
        %5234 = vmatpush.bf16.msra.mxu0 0
        %5235 = vmatpush.bf16.msra.mxu0 %v4983
        %5236 = vmatpush.bf16.msra.mxu0 %v4982
        %5237 = vmatmul.bf16.gmra.mxu0 %v5004
        %v5238 = vpop.f32.mrf.mxu0
        %v5239 = vadd.f32 %v5150, %v5238
        %v5240 = vpop.f32.mrf.mxu0
        %v5241 = vadd.f32 %v5152, %v5240
        %5242 = vmatmul.bf16.gmra.mxu0 %v5007
        %v5243 = vpop.f32.mrf.mxu0
        %v5244 = vadd.f32 %v5155, %v5243
        %v5245 = vpop.f32.mrf.mxu0
        %v5246 = vadd.f32 %v5157, %v5245
        %5247 = vmatmul.bf16.gmra.mxu0 %v5010
        %v5248 = vpop.f32.mrf.mxu0
        %v5249 = vadd.f32 %v5160, %v5248
        %v5250 = vpop.f32.mrf.mxu0
        %v5251 = vadd.f32 %v5162, %v5250
        %5252 = vmatmul.bf16.gmra.mxu0 %v5013
        %v5253 = vpop.f32.mrf.mxu0
        %v5254 = vadd.f32 %v5165, %v5253
        %v5255 = vpop.f32.mrf.mxu0
        %v5256 = vadd.f32 %v5167, %v5255
        %5257 = vmatmul.bf16.gmra.mxu0 %v5016
        %v5258 = vpop.f32.mrf.mxu0
        %v5259 = vadd.f32 %v5170, %v5258
        %v5260 = vpop.f32.mrf.mxu0
        %v5261 = vadd.f32 %v5172, %v5260
        %5262 = vmatmul.bf16.gmra.mxu0 %v5019
        %v5263 = vpop.f32.mrf.mxu0
        %v5264 = vadd.f32 %v5175, %v5263
        %v5265 = vpop.f32.mrf.mxu0
        %v5266 = vadd.f32 %v5177, %v5265
        %5267 = vmatmul.bf16.gmra.mxu0 %v5022
        %v5268 = vpop.f32.mrf.mxu0
        %v5269 = vadd.f32 %v5180, %v5268
        %v5270 = vpop.f32.mrf.mxu0
        %v5271 = vadd.f32 %v5182, %v5270
        %5272 = vmatmul.bf16.gmra.mxu0 %v5025
        %v5273 = vpop.f32.mrf.mxu0
        %v5274 = vadd.f32 %v5185, %v5273
        %v5275 = vpop.f32.mrf.mxu0
        %v5276 = vadd.f32 %v5187, %v5275
        %5277 = vmatmul.bf16.gmra.mxu0 %v5028
        %v5278 = vpop.f32.mrf.mxu0
        %v5279 = vadd.f32 %v5190, %v5278
        %v5280 = vpop.f32.mrf.mxu0
        %v5281 = vadd.f32 %v5192, %v5280
        %5282 = vmatmul.bf16.gmra.mxu0 %v5031
        %v5283 = vpop.f32.mrf.mxu0
        %v5284 = vadd.f32 %v5195, %v5283
        %v5285 = vpop.f32.mrf.mxu0
        %v5286 = vadd.f32 %v5197, %v5285
        %5287 = vmatmul.bf16.gmra.mxu0 %v5034
        %v5288 = vpop.f32.mrf.mxu0
        %v5289 = vadd.f32 %v5200, %v5288
        %v5290 = vpop.f32.mrf.mxu0
        %v5291 = vadd.f32 %v5202, %v5290
        %5292 = vmatmul.bf16.gmra.mxu0 %v5037
        %v5293 = vpop.f32.mrf.mxu0
        %v5294 = vadd.f32 %v5205, %v5293
        %v5295 = vpop.f32.mrf.mxu0
        %v5296 = vadd.f32 %v5207, %v5295
        %5297 = vmatmul.bf16.gmra.mxu0 %v5040
        %v5298 = vpop.f32.mrf.mxu0
        %v5299 = vadd.f32 %v5210, %v5298
        %v5300 = vpop.f32.mrf.mxu0
        %v5301 = vadd.f32 %v5212, %v5300
        %5302 = vmatmul.bf16.gmra.mxu0 %v5043
        %v5303 = vpop.f32.mrf.mxu0
        %v5304 = vadd.f32 %v5215, %v5303
        %v5305 = vpop.f32.mrf.mxu0
        %v5306 = vadd.f32 %v5217, %v5305
        %5307 = vmatmul.bf16.gmra.mxu0 %v5046
        %v5308 = vpop.f32.mrf.mxu0
        %v5309 = vadd.f32 %v5220, %v5308
        %v5310 = vpop.f32.mrf.mxu0
        %v5311 = vadd.f32 %v5222, %v5310
        %5312 = vmatmul.bf16.gmra.mxu0 %v5049
        %v5313 = vpop.f32.mrf.mxu0
        %v5314 = vadd.f32 %v5225, %v5313
        %v5315 = vpop.f32.mrf.mxu0
        %v5316 = vadd.f32 %v5227, %v5315
        %5317 = vdwg.mxu0
        %v5318 = vmax.f32 %v5239, 0.0
        %v5319 = vmax.f32 %v5241, 0.0
        %v5320 = vmax.f32 %v5244, 0.0
        %v5321 = vmax.f32 %v5246, 0.0
        %v5322 = vmax.f32 %v5249, 0.0
        %v5323 = vmax.f32 %v5251, 0.0
        %v5324 = vmax.f32 %v5254, 0.0
        %v5325 = vmax.f32 %v5256, 0.0
        %v5326 = vmax.f32 %v5259, 0.0
        %v5327 = vmax.f32 %v5261, 0.0
        %v5328 = vmax.f32 %v5264, 0.0
        %v5329 = vmax.f32 %v5266, 0.0
        %v5330 = vmax.f32 %v5269, 0.0
        %v5331 = vmax.f32 %v5271, 0.0
        %v5332 = vmax.f32 %v5274, 0.0
        %v5333 = vmax.f32 %v5276, 0.0
        %v5334 = vmax.f32 %v5279, 0.0
        %v5335 = vmax.f32 %v5281, 0.0
        %v5336 = vmax.f32 %v5284, 0.0
        %v5337 = vmax.f32 %v5286, 0.0
        %v5338 = vmax.f32 %v5289, 0.0
        %v5339 = vmax.f32 %v5291, 0.0
        %v5340 = vmax.f32 %v5294, 0.0
        %v5341 = vmax.f32 %v5296, 0.0
        %v5342 = vmax.f32 %v5299, 0.0
        %v5343 = vmax.f32 %v5301, 0.0
        %v5344 = vmax.f32 %v5304, 0.0
        %v5345 = vmax.f32 %v5306, 0.0
        %v5346 = vmax.f32 %v5309, 0.0
        %v5347 = vmax.f32 %v5311, 0.0
        %v5348 = vmax.f32 %v5314, 0.0
        %v5349 = vmax.f32 %v5316, 0.0
        %v5350 = vpack.c.bf16 %v5319, %v5318
        %v5351 = vpack.c.bf16 %v5321, %v5320
        %v5352 = vpack.c.bf16 %v5323, %v5322
        %v5353 = vpack.c.bf16 %v5325, %v5324
        %v5354 = vpack.c.bf16 %v5327, %v5326
        %v5355 = vpack.c.bf16 %v5329, %v5328
        %v5356 = vpack.c.bf16 %v5331, %v5330
        %v5357 = vpack.c.bf16 %v5333, %v5332
        %v5358 = vpack.c.bf16 %v5335, %v5334
        %v5359 = vpack.c.bf16 %v5337, %v5336
        %v5360 = vpack.c.bf16 %v5339, %v5338
        %v5361 = vpack.c.bf16 %v5341, %v5340
        %v5362 = vpack.c.bf16 %v5343, %v5342
        %v5363 = vpack.c.bf16 %v5345, %v5344
        %v5364 = vpack.c.bf16 %v5347, %v5346
        %v5365 = vpack.c.bf16 %v5349, %v5348
        %v5366 = vld [vmem:[%s7] sm:$0xf]
        %v5367 = vld [vmem:[%s7 + $0x4] sm:$0xf]
        %v5368 = vld [vmem:[%s7 + $0x8] sm:$0xf]
        %v5369 = vld [vmem:[%s7 + $0xc] sm:$0xf]
        %v5370 = vld [vmem:[%s8] sm:$0x1]
        %v5372 = vperm.slane %v5370, 0
        %v5378 = vunpack.c.l.b16 %v5366
        %v5379 = vunpack.c.l.b16 %v5367
        %v5380 = vunpack.c.l.b16 %v5368
        %v5381 = vunpack.c.l.b16 %v5369
        %v5382 = vpack.c.b16 %v5379, %v5378
        %v5383 = vpack.c.b16 %v5381, %v5380
        %v5387 = vsel %vm5002, %v5350, 0
        %v5390 = vsel %vm5002, %v5351, 0
        %v5393 = vsel %vm5002, %v5352, 0
        %v5396 = vsel %vm5002, %v5353, 0
        %v5399 = vsel %vm5002, %v5354, 0
        %v5402 = vsel %vm5002, %v5355, 0
        %v5405 = vsel %vm5002, %v5356, 0
        %v5408 = vsel %vm5002, %v5357, 0
        %v5411 = vsel %vm5002, %v5358, 0
        %v5414 = vsel %vm5002, %v5359, 0
        %v5417 = vsel %vm5002, %v5360, 0
        %v5420 = vsel %vm5002, %v5361, 0
        %v5423 = vsel %vm5002, %v5362, 0
        %v5426 = vsel %vm5002, %v5363, 0
        %v5429 = vsel %vm5002, %v5364, 0
        %v5432 = vsel %vm5002, %v5365, 0
        %5434 = vmatpush.bf16.msra.mxu0 0
        %5435 = vmatpush.bf16.msra.mxu0 0
        %5436 = vmatpush.bf16.msra.mxu0 0
        %5437 = vmatpush.bf16.msra.mxu0 0
        %5438 = vmatpush.bf16.msra.mxu0 0
        %5439 = vmatpush.bf16.msra.mxu0 0
        %5440 = vmatpush.bf16.msra.mxu0 %v5383
        %5441 = vmatpush.bf16.msra.mxu0 %v5382
        %5442 = vmatmul.bf16.gmra.mxu0 %v5387
        %v5443 = vpop.f32.mrf.mxu0
        %v5444 = vadd.f32 %v5372, %v5443
        %v5445 = vpop.f32.mrf.mxu0
        %v5446 = vadd.f32 %v5372, %v5445
        %5447 = vmatmul.bf16.gmra.mxu0 %v5390
        %v5448 = vpop.f32.mrf.mxu0
        %v5449 = vadd.f32 %v5372, %v5448
        %v5450 = vpop.f32.mrf.mxu0
        %v5451 = vadd.f32 %v5372, %v5450
        %5452 = vmatmul.bf16.gmra.mxu0 %v5393
        %v5453 = vpop.f32.mrf.mxu0
        %v5454 = vadd.f32 %v5372, %v5453
        %v5455 = vpop.f32.mrf.mxu0
        %v5456 = vadd.f32 %v5372, %v5455
        %5457 = vmatmul.bf16.gmra.mxu0 %v5396
        %v5458 = vpop.f32.mrf.mxu0
        %v5459 = vadd.f32 %v5372, %v5458
        %v5460 = vpop.f32.mrf.mxu0
        %v5461 = vadd.f32 %v5372, %v5460
        %5462 = vmatmul.bf16.gmra.mxu0 %v5399
        %v5463 = vpop.f32.mrf.mxu0
        %v5464 = vadd.f32 %v5372, %v5463
        %v5465 = vpop.f32.mrf.mxu0
        %v5466 = vadd.f32 %v5372, %v5465
        %5467 = vmatmul.bf16.gmra.mxu0 %v5402
        %v5468 = vpop.f32.mrf.mxu0
        %v5469 = vadd.f32 %v5372, %v5468
        %v5470 = vpop.f32.mrf.mxu0
        %v5471 = vadd.f32 %v5372, %v5470
        %5472 = vmatmul.bf16.gmra.mxu0 %v5405
        %v5473 = vpop.f32.mrf.mxu0
        %v5474 = vadd.f32 %v5372, %v5473
        %v5475 = vpop.f32.mrf.mxu0
        %v5476 = vadd.f32 %v5372, %v5475
        %5477 = vmatmul.bf16.gmra.mxu0 %v5408
        %v5478 = vpop.f32.mrf.mxu0
        %v5479 = vadd.f32 %v5372, %v5478
        %v5480 = vpop.f32.mrf.mxu0
        %v5481 = vadd.f32 %v5372, %v5480
        %5482 = vmatmul.bf16.gmra.mxu0 %v5411
        %v5483 = vpop.f32.mrf.mxu0
        %v5484 = vadd.f32 %v5372, %v5483
        %v5485 = vpop.f32.mrf.mxu0
        %v5486 = vadd.f32 %v5372, %v5485
        %5487 = vmatmul.bf16.gmra.mxu0 %v5414
        %v5488 = vpop.f32.mrf.mxu0
        %v5489 = vadd.f32 %v5372, %v5488
        %v5490 = vpop.f32.mrf.mxu0
        %v5491 = vadd.f32 %v5372, %v5490
        %5492 = vmatmul.bf16.gmra.mxu0 %v5417
        %v5493 = vpop.f32.mrf.mxu0
        %v5494 = vadd.f32 %v5372, %v5493
        %v5495 = vpop.f32.mrf.mxu0
        %v5496 = vadd.f32 %v5372, %v5495
        %5497 = vmatmul.bf16.gmra.mxu0 %v5420
        %v5498 = vpop.f32.mrf.mxu0
        %v5499 = vadd.f32 %v5372, %v5498
        %v5500 = vpop.f32.mrf.mxu0
        %v5501 = vadd.f32 %v5372, %v5500
        %5502 = vmatmul.bf16.gmra.mxu0 %v5423
        %v5503 = vpop.f32.mrf.mxu0
        %v5504 = vadd.f32 %v5372, %v5503
        %v5505 = vpop.f32.mrf.mxu0
        %v5506 = vadd.f32 %v5372, %v5505
        %5507 = vmatmul.bf16.gmra.mxu0 %v5426
        %v5508 = vpop.f32.mrf.mxu0
        %v5509 = vadd.f32 %v5372, %v5508
        %v5510 = vpop.f32.mrf.mxu0
        %v5511 = vadd.f32 %v5372, %v5510
        %5512 = vmatmul.bf16.gmra.mxu0 %v5429
        %v5513 = vpop.f32.mrf.mxu0
        %v5514 = vadd.f32 %v5372, %v5513
        %v5515 = vpop.f32.mrf.mxu0
        %v5516 = vadd.f32 %v5372, %v5515
        %5517 = vmatmul.bf16.gmra.mxu0 %v5432
        %v5518 = vpop.f32.mrf.mxu0
        %v5519 = vadd.f32 %v5372, %v5518
        %v5520 = vpop.f32.mrf.mxu0
        %v5521 = vadd.f32 %v5372, %v5520
        %5522 = vdwg.mxu0
        %v5523 = vld [vmem:[%s419] sm:$0xff]
        %v5524 = vld [vmem:[%s419 + $0x8] sm:$0xff]
        %v5525 = vld [vmem:[%s419 + $0x10] sm:$0xff]
        %v5526 = vld [vmem:[%s419 + $0x18] sm:$0xff]
        %v5527 = vld [vmem:[%s419 + $0x20] sm:$0xff]
        %v5528 = vld [vmem:[%s419 + $0x28] sm:$0xff]
        %v5529 = vld [vmem:[%s419 + $0x30] sm:$0xff]
        %v5530 = vld [vmem:[%s419 + $0x38] sm:$0xff]
        %v5531 = vld [vmem:[%s419 + $0x40] sm:$0xff]
        %v5532 = vld [vmem:[%s419 + $0x48] sm:$0xff]
        %v5533 = vld [vmem:[%s419 + $0x50] sm:$0xff]
        %v5534 = vld [vmem:[%s419 + $0x58] sm:$0xff]
        %v5535 = vld [vmem:[%s419 + $0x60] sm:$0xff]
        %v5536 = vld [vmem:[%s419 + $0x68] sm:$0xff]
        %v5537 = vld [vmem:[%s419 + $0x70] sm:$0xff]
        %v5538 = vld [vmem:[%s419 + $0x78] sm:$0xff]
        %v5539 = vld [vmem:[%s419 + $0x80] sm:$0xff]
        %v5540 = vld [vmem:[%s419 + $0x88] sm:$0xff]
        %v5541 = vld [vmem:[%s419 + $0x90] sm:$0xff]
        %v5542 = vld [vmem:[%s419 + $0x98] sm:$0xff]
        %v5543 = vld [vmem:[%s419 + $0xa0] sm:$0xff]
        %v5544 = vld [vmem:[%s419 + $0xa8] sm:$0xff]
        %v5545 = vld [vmem:[%s419 + $0xb0] sm:$0xff]
        %v5546 = vld [vmem:[%s419 + $0xb8] sm:$0xff]
        %v5547 = vld [vmem:[%s419 + $0xc0] sm:$0xff]
        %v5548 = vld [vmem:[%s419 + $0xc8] sm:$0xff]
        %v5549 = vld [vmem:[%s419 + $0xd0] sm:$0xff]
        %v5550 = vld [vmem:[%s419 + $0xd8] sm:$0xff]
        %v5551 = vld [vmem:[%s419 + $0xe0] sm:$0xff]
        %v5552 = vld [vmem:[%s419 + $0xe8] sm:$0xff]
        %v5553 = vld [vmem:[%s419 + $0xf0] sm:$0xff]
        %v5554 = vld [vmem:[%s419 + $0xf8] sm:$0xff]
        %v5555 = vadd.f32 %v5444, %v5523
        %v5556 = vadd.f32 %v5446, %v5524
        %v5557 = vadd.f32 %v5449, %v5525
        %v5558 = vadd.f32 %v5451, %v5526
        %v5559 = vadd.f32 %v5454, %v5527
        %v5560 = vadd.f32 %v5456, %v5528
        %v5561 = vadd.f32 %v5459, %v5529
        %v5562 = vadd.f32 %v5461, %v5530
        %v5563 = vadd.f32 %v5464, %v5531
        %v5564 = vadd.f32 %v5466, %v5532
        %v5565 = vadd.f32 %v5469, %v5533
        %v5566 = vadd.f32 %v5471, %v5534
        %v5567 = vadd.f32 %v5474, %v5535
        %v5568 = vadd.f32 %v5476, %v5536
        %v5569 = vadd.f32 %v5479, %v5537
        %v5570 = vadd.f32 %v5481, %v5538
        %v5571 = vadd.f32 %v5484, %v5539
        %v5572 = vadd.f32 %v5486, %v5540
        %v5573 = vadd.f32 %v5489, %v5541
        %v5574 = vadd.f32 %v5491, %v5542
        %v5575 = vadd.f32 %v5494, %v5543
        %v5576 = vadd.f32 %v5496, %v5544
        %v5577 = vadd.f32 %v5499, %v5545
        %v5578 = vadd.f32 %v5501, %v5546
        %v5579 = vadd.f32 %v5504, %v5547
        %v5580 = vadd.f32 %v5506, %v5548
        %v5581 = vadd.f32 %v5509, %v5549
        %v5582 = vadd.f32 %v5511, %v5550
        %v5583 = vadd.f32 %v5514, %v5551
        %v5584 = vadd.f32 %v5516, %v5552
        %v5585 = vadd.f32 %v5519, %v5553
        %v5586 = vadd.f32 %v5521, %v5554
        %v5587 = vmax.f32 %v5555, 0.0
        %v5588 = vmax.f32 %v5556, 0.0
        %v5589 = vmax.f32 %v5557, 0.0
        %v5590 = vmax.f32 %v5558, 0.0
        %v5591 = vmax.f32 %v5559, 0.0
        %v5592 = vmax.f32 %v5560, 0.0
        %v5593 = vmax.f32 %v5561, 0.0
        %v5594 = vmax.f32 %v5562, 0.0
        %v5595 = vmax.f32 %v5563, 0.0
        %v5596 = vmax.f32 %v5564, 0.0
        %v5597 = vmax.f32 %v5565, 0.0
        %v5598 = vmax.f32 %v5566, 0.0
        %v5599 = vmax.f32 %v5567, 0.0
        %v5600 = vmax.f32 %v5568, 0.0
        %v5601 = vmax.f32 %v5569, 0.0
        %v5602 = vmax.f32 %v5570, 0.0
        %v5603 = vmax.f32 %v5571, 0.0
        %v5604 = vmax.f32 %v5572, 0.0
        %v5605 = vmax.f32 %v5573, 0.0
        %v5606 = vmax.f32 %v5574, 0.0
        %v5607 = vmax.f32 %v5575, 0.0
        %v5608 = vmax.f32 %v5576, 0.0
        %v5609 = vmax.f32 %v5577, 0.0
        %v5610 = vmax.f32 %v5578, 0.0
        %v5611 = vmax.f32 %v5579, 0.0
        %v5612 = vmax.f32 %v5580, 0.0
        %v5613 = vmax.f32 %v5581, 0.0
        %v5614 = vmax.f32 %v5582, 0.0
        %v5615 = vmax.f32 %v5583, 0.0
        %v5616 = vmax.f32 %v5584, 0.0
        %v5617 = vmax.f32 %v5585, 0.0
        %v5618 = vmax.f32 %v5586, 0.0
        %5619 = vst [vmem:[%s484] sm:$0xff] %v5587
        %5620 = vst [vmem:[%s484 + $0x8] sm:$0xff] %v5588
        %5621 = vst [vmem:[%s484 + $0x10] sm:$0xff] %v5589
        %5622 = vst [vmem:[%s484 + $0x18] sm:$0xff] %v5590
        %5623 = vst [vmem:[%s484 + $0x20] sm:$0xff] %v5591
        %5624 = vst [vmem:[%s484 + $0x28] sm:$0xff] %v5592
        %5625 = vst [vmem:[%s484 + $0x30] sm:$0xff] %v5593
        %5626 = vst [vmem:[%s484 + $0x38] sm:$0xff] %v5594
        %5627 = vst [vmem:[%s484 + $0x40] sm:$0xff] %v5595
        %5628 = vst [vmem:[%s484 + $0x48] sm:$0xff] %v5596
        %5629 = vst [vmem:[%s484 + $0x50] sm:$0xff] %v5597
        %5630 = vst [vmem:[%s484 + $0x58] sm:$0xff] %v5598
        %5631 = vst [vmem:[%s484 + $0x60] sm:$0xff] %v5599
        %5632 = vst [vmem:[%s484 + $0x68] sm:$0xff] %v5600
        %5633 = vst [vmem:[%s484 + $0x70] sm:$0xff] %v5601
        %5634 = vst [vmem:[%s484 + $0x78] sm:$0xff] %v5602
        %5635 = vst [vmem:[%s484 + $0x80] sm:$0xff] %v5603
        %5636 = vst [vmem:[%s484 + $0x88] sm:$0xff] %v5604
        %5637 = vst [vmem:[%s484 + $0x90] sm:$0xff] %v5605
        %5638 = vst [vmem:[%s484 + $0x98] sm:$0xff] %v5606
        %5639 = vst [vmem:[%s484 + $0xa0] sm:$0xff] %v5607
        %5640 = vst [vmem:[%s484 + $0xa8] sm:$0xff] %v5608
        %5641 = vst [vmem:[%s484 + $0xb0] sm:$0xff] %v5609
        %5642 = vst [vmem:[%s484 + $0xb8] sm:$0xff] %v5610
        %5643 = vst [vmem:[%s484 + $0xc0] sm:$0xff] %v5611
        %5644 = vst [vmem:[%s484 + $0xc8] sm:$0xff] %v5612
        %5645 = vst [vmem:[%s484 + $0xd0] sm:$0xff] %v5613
        %5646 = vst [vmem:[%s484 + $0xd8] sm:$0xff] %v5614
        %5647 = vst [vmem:[%s484 + $0xe0] sm:$0xff] %v5615
        %5648 = vst [vmem:[%s484 + $0xe8] sm:$0xff] %v5616
        %5649 = vst [vmem:[%s484 + $0xf0] sm:$0xff] %v5617
        %5650 = vst [vmem:[%s484 + $0xf8] sm:$0xff] %v5618
        %s5651 = sand.u32 %s277, 1
        %s5652 = scalar_lea.sflag [#allocation6], %s5651
        %s5653 = sand.u32 %s277, 1
        %s5654 = smul.addr %s5653, 256
        %s5655 = scalar_lea.vmem [#allocation10], %s5654
        // Predicated region
        $region73: #{tpu_custom_call.1} parent=55 // pred_check
          %p5656 = pneg %p287
        $region74: #{tpu_custom_call.1} parent=55 // pred_check_branch
          %5658 = sbr.rel (%p5656) target = $region76
        $region75: #{tpu_custom_call.1} parent=55 // pred_region
          %s5659 = smul.u32 16, %s34
          %5661 = vsyncadd %s5652, 0
          %s5662 = smul.addr %s5659, 2
          %s5663 = smul.addr %s33, 32
          %s5664 = sadd.s32 %s5662, %s5663
          %s5665 = smul.addr %s5664, 8
          %s5666 = scalar_lea.hbm %s9, %s5665
          %s5667 = sshll.u32 %s5655, 4
          %s5668 = int_to_ptr.vmem [resolvable:$true] %s5667
          %s5669 = sshll.u32 %s5666, 4
          %s5670 = int_to_ptr.hbm [resolvable:$true] %s5669
          %5675 = dma.vmem_to_hbm [thread:$0]  %s5668, 4096, %s5670, %s5652, 128, 128, 8
        $region76: #{tpu_custom_call.1} parent=55 // pred_fallthru
          _
      $region56: #{tpu_custom_call.1} parent=5 // pred_fallthru
        _
      %p5676 = scmp.le.s32.totalorder 2, %s24
      // Predicated region
      $region77: #{tpu_custom_call.1} parent=5 // pred_check
        %p5677 = pneg %p5676
      $region78: #{tpu_custom_call.1} parent=5 // pred_check_branch
        %5679 = sbr.rel (%p5677) target = $region80
      $region79: #{tpu_custom_call.1} parent=5 // pred_region
        %s5680 = ssub.s32 %s24, 2
        // Predicated region
        $region81: #{tpu_custom_call.1} parent=79 // pred_check
          %p5681 = pneg %p293
        $region82: #{tpu_custom_call.1} parent=79 // pred_check_branch
          %5683 = sbr.rel (%p5681) target = $region84
        $region83: #{tpu_custom_call.1} parent=79 // pred_region
          %s5684 = sand.u32 %s278, 1
          %s5685 = scalar_lea.sflag [#allocation6], %s5684
          %s5686 = sand.u32 %s278, 1
          %s5687 = smul.addr %s5686, 256
          %s5688 = scalar_lea.vmem [#allocation10], %s5687
          %5690 = dma.done %s5685, 4096
        $region84: #{tpu_custom_call.1} parent=79 // pred_fallthru
          _
      $region80: #{tpu_custom_call.1} parent=5 // pred_fallthru
        _
    $region6: #{tpu_custom_call.1} parent=1 // loop_footer
      %s28 = sadd.s32 1, %s24
    $region7: #{tpu_custom_call.1} parent=1 // loop_footer_branch
      %23 = sbr.rel target = $region3
    $region8: #{tpu_custom_call.1} parent=1 // loop_exit
      _
    %5691 = vsyncpa [#allocation5], 1
    %s5692 = scalar_lea.sflag [#allocation5], 1
    %5693 = vsyncpa %s5692, 1
    %5694 = vsyncpa [#allocation8], 1
    %s5695 = scalar_lea.sflag [#allocation8], 1
    %5696 = vsyncpa %s5695, 1
    %5697 = vsyncpa [#allocation6], 1
    %s5698 = scalar_lea.sflag [#allocation6], 1
    %5699 = vsyncpa %s5698, 1

</llo_original>
